<compile_context>
chip_gen: v7x
topology: tpu7x:2x2x1
jax: 0.10.0
libtpu: 0.0.40
codegen_flags: <defaults>
</compile_context>

<pallas_src>
import functools

import jax
import jax.numpy as jnp
from jax import lax
from jax.experimental import pallas as pl
from jax.experimental.pallas import tpu as pltpu

BN_EPS = 1e-5


# ---------------------------------------------------------------------------
# Fused kernel
# ---------------------------------------------------------------------------
def _make_fused_kernel(num_layers, seq_len, hidden_dim, out_pad):
    L, T, H, OP = num_layers, seq_len, hidden_dim, out_pad
    f32, bf16 = jnp.float32, jnp.bfloat16

    def kernel(*refs):
        x_ref, cw_ref, sm_ref = refs[0:3]
        layer_refs = refs[3:3 + 2 * L]
        w1_ref, w2_ref, o_ref, seq_ref = refs[3 + 2 * L:]

        TB = o_ref.shape[0]

        # ---- Conv1d(k=3, pad=1) + BN(eval) + ReLU ---------------------------
        # Three bf16 tap matmuls on shifted slices of the zero-time-padded
        # input; no im2col concat and no shifted copies of x.
        acc = lax.dot_general(x_ref[pl.ds(0, T), :, :].astype(bf16), cw_ref[0],
                              (((2,), (0,)), ((), ())),
                              preferred_element_type=f32)
        for k in (1, 2):
            acc += lax.dot_general(x_ref[pl.ds(k, T), :, :].astype(bf16),
                                   cw_ref[k], (((2,), (0,)), ((), ())),
                                   preferred_element_type=f32)
        cb = sm_ref[L:L + 1, 0:H]                       # (1, H)
        seq_val = jnp.maximum(acc + cb, 0.0)            # (T, TB, H) f32

        # ---- stacked bidirectional LSTM -------------------------------------
        # Per layer: one hoisted (T,TB,Din)x(Din,8H) bf16 input projection for
        # BOTH directions (off the recurrence), then a recurrence with two
        # independent (TB,H)x(H,4H) matmuls (fwd / bwd split -> no per-step
        # direction select, no half-zero block-diagonal weight).  Per-step
        # hidden states go straight into the (T,TB,2H) VMEM scratch.
        for l in range(L):
            wih_ref = layer_refs[2 * l]                 # (Din, 8H) bf16
            whh_ref = layer_refs[2 * l + 1]             # (2, H, 4H) bf16
            bias = sm_ref[l:l + 1, 0:8 * H]             # (1, 8H) f32

            x_in = seq_val if l == 0 else seq_ref[...]
            xw = lax.dot_general(x_in.astype(bf16), wih_ref[...],
                                 (((2,), (0,)), ((), ())),
                                 preferred_element_type=f32) + bias  # (T,TB,8H)
            xw_f = xw[:, :, 0:4 * H]
            xw_b = xw[:, :, 4 * H:8 * H]
            whh_f = whh_ref[0]
            whh_b = whh_ref[1]

            h_f = jnp.zeros((TB, H), f32)
            c_f = jnp.zeros((TB, H), f32)
            h_b = jnp.zeros((TB, H), f32)
            c_b = jnp.zeros((TB, H), f32)

            # TODO(synk): for long sequences replace this static unroll with
            # lax.fori_loop(..., unroll=8) + pl.ds-indexed scratch stores.
            for t in range(T):
                g_f = xw_f[t] + jnp.dot(h_f.astype(bf16), whh_f,
                                        preferred_element_type=f32)
                g_b = xw_b[T - 1 - t] + jnp.dot(h_b.astype(bf16), whh_b,
                                                preferred_element_type=f32)
                # packed gate order per direction: [i, f, o, g]
                s_f = jax.nn.sigmoid(g_f[:, 0:3 * H])
                s_b = jax.nn.sigmoid(g_b[:, 0:3 * H])
                gg_f = jnp.tanh(g_f[:, 3 * H:4 * H])
                gg_b = jnp.tanh(g_b[:, 3 * H:4 * H])
                c_f = s_f[:, H:2 * H] * c_f + s_f[:, 0:H] * gg_f
                c_b = s_b[:, H:2 * H] * c_b + s_b[:, 0:H] * gg_b
                h_f = s_f[:, 2 * H:3 * H] * jnp.tanh(c_f)
                h_b = s_b[:, 2 * H:3 * H] * jnp.tanh(c_b)
                # fwd output for time t, bwd output for time T-1-t
                seq_ref[t, :, 0:H] = h_f
                seq_ref[T - 1 - t, :, H:2 * H] = h_b

        # ---- attention: tanh(linear) -> softmax over time -> weighted sum ---
        # TODO(synk): for long sequences compute scores in a lane-dense (TB, T)
        # layout; at small T the (T, TB, 1) layout below is negligible.
        seq = seq_ref[...]                              # (T, TB, 2H)
        wa = sm_ref[L + 1:L + 2, 0:2 * H]               # (1, 2H)
        ba = sm_ref[L + 2:L + 3, 0:1]                   # (1, 1)
        scores = jnp.tanh(jnp.sum(seq * wa, axis=-1, keepdims=True) + ba)
        m = jnp.max(scores, axis=0, keepdims=True)
        e = jnp.exp(scores - m)
        att = e / jnp.sum(e, axis=0, keepdims=True)     # exact softmax
        context = jnp.sum(att * seq, axis=0)            # (TB, 2H)

        # ---- fc1 + BN(eval) + ReLU -> fc2 (lane-dense, padded output) -------
        # TODO(synk): dropout / dropout_fc are identity in eval mode (no RNG).
        fb1 = sm_ref[L + 3:L + 4, 0:H]
        fb2 = sm_ref[L + 4:L + 5, 0:OP]
        h1 = jnp.maximum(jnp.dot(context.astype(bf16), w1_ref[...],
                                 preferred_element_type=f32) + fb1, 0.0)
        o_ref[...] = jnp.dot(h1.astype(bf16), w2_ref[...],
                             preferred_element_type=f32) + fb2

    return kernel


# ---------------------------------------------------------------------------
# Wrapper helpers
# ---------------------------------------------------------------------------
def _const_index_map(ndim):
    return lambda i: (0,) * ndim


def _batch_tile(batch):
    if batch <= 64:
        return batch
    for cand in (64, 32, 16, 8, 4, 2, 1):
        if batch % cand == 0:
            return cand
    return 1


def _vmem_limit_bytes(args, out_bytes, scratch_bytes, tmp_bytes):
    # Rough budget: double-buffered operands + scratch + in-kernel temporaries.
    # Re-derive the cap per generation (v7x has 64 MiB physical VMEM per TC).
    arg_bytes = sum(int(a.size) * a.dtype.itemsize for a in args)
    need = 2 * (arg_bytes + out_bytes) + scratch_bytes + tmp_bytes
    return int(min(max(need, 32 * 1024 * 1024), 64 * 1024 * 1024))


# ---------------------------------------------------------------------------
# Forward: one pallas_call, batch-tiled grid, weights whole-array resident.
# ---------------------------------------------------------------------------
@functools.partial(jax.jit, static_argnames=("out_dim",))
def forward(packed, x, *, out_dim):
    """x: (B, T, input_dim) -> logits (B, out_dim)."""
    B, T, C = x.shape
    cw3 = packed["cw3"]
    H = cw3.shape[2]
    L = len(packed["layers"])
    OP = packed["w2"].shape[1]

    # time-major + zero time-padding for the k=3 conv (done once in XLA).
    x_tbc = jnp.transpose(x.astype(jnp.float32), (1, 0, 2))    # (T, B, C)
    x_pad = jnp.pad(x_tbc, ((1, 1), (0, 0), (0, 0)))           # (T+2, B, C)

    TB = _batch_tile(B)
    grid = (B // TB,)

    args = [x_pad, cw3, packed["smalls"]]
    for lp in packed["layers"]:
        args += [lp["wih"], lp["whh"]]
    args += [packed["w1"], packed["w2"]]

    in_specs = [pl.BlockSpec((T + 2, TB, C), lambda i: (0, i, 0))]
    in_specs += [pl.BlockSpec(a.shape, _const_index_map(a.ndim))
                 for a in args[1:]]
    out_specs = pl.BlockSpec((TB, OP), lambda i: (i, 0))

    scratch = [pltpu.VMEM((T, TB, 2 * H), jnp.float32)]
    vmem_limit = _vmem_limit_bytes(
        args,
        out_bytes=B * OP * 4,
        scratch_bytes=T * TB * 2 * H * 4,
        tmp_bytes=3 * T * TB * 8 * H * 4)

    out = pl.pallas_call(
        _make_fused_kernel(L, T, H, OP),
        grid=grid,
        in_specs=in_specs,
        out_specs=out_specs,
        out_shape=jax.ShapeDtypeStruct((B, OP), jnp.float32),
        scratch_shapes=scratch,
        compiler_params=pltpu.CompilerParams(
            dimension_semantics=("parallel",),
            vmem_limit_bytes=vmem_limit),
    )(*args)
    return out[:, :out_dim]


# ---------------------------------------------------------------------------
# Parameters in PyTorch layout, then packed into the fused-kernel layout.
# ---------------------------------------------------------------------------
def init_torch_params(key, input_dim, hidden_dim, num_layers, output_dim):
    H = hidden_dim
    keys = iter(jax.random.split(key, 64))

    def rnd(shape, scale=0.1):
        return jax.random.normal(next(keys), shape, jnp.float32) * scale

    p = {
        "conv1.weight": rnd((H, input_dim, 3)),
        "conv1.bias": rnd((H,)),
        "bn_conv1.weight": 1.0 + rnd((H,)),
        "bn_conv1.bias": rnd((H,)),
        "bn_conv1.running_mean": jnp.zeros((H,), jnp.float32),
        "bn_conv1.running_var": jnp.ones((H,), jnp.float32),
        "attention.linear.weight": rnd((1, 2 * H)),
        "attention.linear.bias": rnd((1,)),
        "fc1.weight": rnd((H, 2 * H)),
        "fc1.bias": rnd((H,)),
        "bn_fc1.weight": 1.0 + rnd((H,)),
        "bn_fc1.bias": rnd((H,)),
        "bn_fc1.running_mean": jnp.zeros((H,), jnp.float32),
        "bn_fc1.running_var": jnp.ones((H,), jnp.float32),
        "fc2.weight": rnd((output_dim, H)),
        "fc2.bias": rnd((output_dim,)),
    }
    for layer in range(num_layers):
        din = H if layer == 0 else 2 * H
        for suffix in ("", "_reverse"):
            p[f"lstm.weight_ih_l{layer}{suffix}"] = rnd((4 * H, din))
            p[f"lstm.weight_hh_l{layer}{suffix}"] = rnd((4 * H, H))
            p[f"lstm.bias_ih_l{layer}{suffix}"] = rnd((4 * H,))
            p[f"lstm.bias_hh_l{layer}{suffix}"] = rnd((4 * H,))
    return p


# torch LSTM gate row order is (i, f, g, o); packed column order per direction
# is (i, f, o, g):  i->0, f->1, g->3, o->2.
_TORCH_TO_PACKED_GATE = (0, 1, 3, 2)


def pack_params(tp, input_dim, hidden_dim, num_layers, output_dim):
    H = hidden_dim
    L = num_layers
    out_pad = ((output_dim + 127) // 128) * 128
    row_w = max(8 * H, out_pad)

    # conv taps (3, C, H), eval-mode BatchNorm folded, bf16 for the MXU.
    inv_c = tp["bn_conv1.weight"] / jnp.sqrt(tp["bn_conv1.running_var"] + BN_EPS)
    cw3 = jnp.transpose(tp["conv1.weight"], (2, 1, 0)) * inv_c[None, None, :]
    cb = ((tp["conv1.bias"] - tp["bn_conv1.running_mean"]) * inv_c
          + tp["bn_conv1.bias"])

    layers = []
    layer_biases = []
    for layer in range(L):
        din = H if layer == 0 else 2 * H
        wih = jnp.zeros((din, 8 * H), jnp.float32)     # cols: [fwd i,f,o,g | bwd i,f,o,g]
        whh = jnp.zeros((2, H, 4 * H), jnp.float32)    # [dir, H, i,f,o,g]
        b = jnp.zeros((8 * H,), jnp.float32)
        for d, suffix in enumerate(("", "_reverse")):
            w_ih = tp[f"lstm.weight_ih_l{layer}{suffix}"]      # (4H, din)
            w_hh = tp[f"lstm.weight_hh_l{layer}{suffix}"]      # (4H, H)
            bias = (tp[f"lstm.bias_ih_l{layer}{suffix}"]
                    + tp[f"lstm.bias_hh_l{layer}{suffix}"])
            for tg, pg in enumerate(_TORCH_TO_PACKED_GATE):
                col = d * 4 * H + pg * H
                wih = wih.at[:, col:col + H].set(w_ih[tg * H:(tg + 1) * H, :].T)
                whh = whh.at[d, :, pg * H:(pg + 1) * H].set(
                    w_hh[tg * H:(tg + 1) * H, :].T)
                b = b.at[col:col + H].set(bias[tg * H:(tg + 1) * H])
        layers.append({"wih": wih.astype(jnp.bfloat16),
                       "whh": whh.astype(jnp.bfloat16)})
        layer_biases.append(b)

    inv_f = tp["bn_fc1.weight"] / jnp.sqrt(tp["bn_fc1.running_var"] + BN_EPS)
    w1 = tp["fc1.weight"].T * inv_f[None, :]
    fb1 = ((tp["fc1.bias"] - tp["bn_fc1.running_mean"]) * inv_f
           + tp["bn_fc1.bias"])
    w2 = jnp.zeros((H, out_pad), jnp.float32).at[:, :output_dim].set(
        tp["fc2.weight"].T)
    fb2 = jnp.zeros((out_pad,), jnp.float32).at[:output_dim].set(tp["fc2.bias"])
    wa = tp["attention.linear.weight"].reshape(2 * H)
    ba = tp["attention.linear.bias"].reshape(())

    # All small per-feature vectors in ONE lane-dense f32 buffer (one DMA):
    #   rows 0..L-1 : per-layer fused LSTM biases (8H)
    #   row  L      : conv+BN bias (H)
    #   row  L+1    : attention weight (2H)
    #   row  L+2    : attention bias (scalar)
    #   row  L+3    : fc1+BN bias (H)
    #   row  L+4    : fc2 bias (padded to out_pad)
    smalls = jnp.zeros((L + 5, row_w), jnp.float32)
    for l in range(L):
        smalls = smalls.at[l, 0:8 * H].set(layer_biases[l])
    smalls = smalls.at[L, 0:H].set(cb)
    smalls = smalls.at[L + 1, 0:2 * H].set(wa)
    smalls = smalls.at[L + 2, 0].set(ba)
    smalls = smalls.at[L + 3, 0:H].set(fb1)
    smalls = smalls.at[L + 4, 0:out_pad].set(fb2)

    return {"cw3": cw3.astype(jnp.bfloat16),
            "smalls": smalls,
            "layers": layers,
            "w1": w1.astype(jnp.bfloat16),
            "w2": w2.astype(jnp.bfloat16)}


if __name__ == "__main__":
    INPUT_DIM = 8
    HIDDEN_DIM = 64      # multiple of 64: 2H / 4H land on 128-lane boundaries
    NUM_LAYERS = 2
    OUTPUT_DIM = 5
    BATCH = 8            # multiple of 8: f32 sublane-aligned batch tile
    SEQ = 8

    key = jax.random.PRNGKey(0)
    k_params, k_x = jax.random.split(key)
    torch_params = init_torch_params(k_params, INPUT_DIM, HIDDEN_DIM,
                                     NUM_LAYERS, OUTPUT_DIM)
    packed = pack_params(torch_params, INPUT_DIM, HIDDEN_DIM,
                         NUM_LAYERS, OUTPUT_DIM)
    x = jax.random.normal(k_x, (BATCH, SEQ, INPUT_DIM), jnp.float32)

    out = forward(packed, x, out_dim=OUTPUT_DIM)
    out = jax.block_until_ready(out)
    assert out.shape == (BATCH, OUTPUT_DIM)
    assert bool(jnp.all(jnp.isfinite(out)))
    print("KERNEL_OK")
</pallas_src>

<mosaic_0001>
module attributes {stable_mosaic.version = 11 : i64} {
  func.func @kernel(%arg0: i32, %arg1: memref<10x8x8xf32, #tpu.memory_space<vmem>>, %arg2: memref<3x8x64xbf16, #tpu.memory_space<vmem>>, %arg3: memref<7x512xf32, #tpu.memory_space<vmem>>, %arg4: memref<64x512xbf16, #tpu.memory_space<vmem>>, %arg5: memref<2x64x256xbf16, #tpu.memory_space<vmem>>, %arg6: memref<128x512xbf16, #tpu.memory_space<vmem>>, %arg7: memref<2x64x256xbf16, #tpu.memory_space<vmem>>, %arg8: memref<128x64xbf16, #tpu.memory_space<vmem>>, %arg9: memref<64x128xbf16, #tpu.memory_space<vmem>>, %arg10: memref<8x128xf32, #tpu.memory_space<vmem>>, %arg11: memref<8x8x128xf32, #tpu.memory_space<vmem>>) attributes {dimension_semantics = [#tpu.dimension_semantics<parallel>], iteration_bounds = array<i64: 1>, scalar_prefetch = 0 : i64, scratch_operands = 1 : i64, tpu.core_type = #tpu.core_type<tc>, window_params = [{transform_indices = @transform_0, window_bounds = array<i64: 10, 8, 8>}, {pipeline_mode = #tpu.pipeline_mode<synchronous>, transform_indices = @transform_1, window_bounds = array<i64: 3, 8, 64>}, {pipeline_mode = #tpu.pipeline_mode<synchronous>, transform_indices = @transform_2, window_bounds = array<i64: 7, 512>}, {pipeline_mode = #tpu.pipeline_mode<synchronous>, transform_indices = @transform_3, window_bounds = array<i64: 64, 512>}, {pipeline_mode = #tpu.pipeline_mode<synchronous>, transform_indices = @transform_4, window_bounds = array<i64: 2, 64, 256>}, {pipeline_mode = #tpu.pipeline_mode<synchronous>, transform_indices = @transform_5, window_bounds = array<i64: 128, 512>}, {pipeline_mode = #tpu.pipeline_mode<synchronous>, transform_indices = @transform_6, window_bounds = array<i64: 2, 64, 256>}, {pipeline_mode = #tpu.pipeline_mode<synchronous>, transform_indices = @transform_7, window_bounds = array<i64: 128, 64>}, {pipeline_mode = #tpu.pipeline_mode<synchronous>, transform_indices = @transform_8, window_bounds = array<i64: 64, 128>}, {transform_indices = @transform_9, window_bounds = array<i64: 8, 128>}]} {
    %c0 = arith.constant 0 : index
    %c0_0 = arith.constant 0 : index
    %c0_1 = arith.constant 0 : index
    %0 = vector.load %arg1[%c0, %c0_0, %c0_1] : memref<10x8x8xf32, #tpu.memory_space<vmem>>, vector<8x8x8xf32>
    %1 = arith.truncf %0 : vector<8x8x8xf32> to vector<8x8x8xbf16>
    %c0_2 = arith.constant 0 : index
    %c0_3 = arith.constant 0 : index
    %c0_4 = arith.constant 0 : index
    %2 = vector.load %arg2[%c0_2, %c0_3, %c0_4] : memref<3x8x64xbf16, #tpu.memory_space<vmem>>, vector<1x8x64xbf16>
    %3 = vector.shape_cast %2 : vector<1x8x64xbf16> to vector<8x64xbf16>
    %cst = arith.constant dense<0.000000e+00> : vector<8x8x64xf32>
    %4 = tpu.matmul %1, %3, %cst {dimension_numbers = #tpu.dot_dimension_numbers<[2], [0], [0, 1], [1], [0, 0, 0, 1, 1, 1], [], []>} : vector<8x8x8xbf16>, vector<8x64xbf16>, vector<8x8x64xf32> -> vector<8x8x64xf32>
    %c1 = arith.constant 1 : index
    %c0_5 = arith.constant 0 : index
    %c0_6 = arith.constant 0 : index
    %5 = vector.load %arg1[%c1, %c0_5, %c0_6] : memref<10x8x8xf32, #tpu.memory_space<vmem>>, vector<8x8x8xf32>
    %6 = arith.truncf %5 : vector<8x8x8xf32> to vector<8x8x8xbf16>
    %c1_7 = arith.constant 1 : index
    %c0_8 = arith.constant 0 : index
    %c0_9 = arith.constant 0 : index
    %7 = vector.load %arg2[%c1_7, %c0_8, %c0_9] : memref<3x8x64xbf16, #tpu.memory_space<vmem>>, vector<1x8x64xbf16>
    %8 = vector.shape_cast %7 : vector<1x8x64xbf16> to vector<8x64xbf16>
    %cst_10 = arith.constant dense<0.000000e+00> : vector<8x8x64xf32>
    %9 = tpu.matmul %6, %8, %cst_10 {dimension_numbers = #tpu.dot_dimension_numbers<[2], [0], [0, 1], [1], [0, 0, 0, 1, 1, 1], [], []>} : vector<8x8x8xbf16>, vector<8x64xbf16>, vector<8x8x64xf32> -> vector<8x8x64xf32>
    %10 = arith.addf %4, %9 : vector<8x8x64xf32>
    %c2 = arith.constant 2 : index
    %c0_11 = arith.constant 0 : index
    %c0_12 = arith.constant 0 : index
    %11 = vector.load %arg1[%c2, %c0_11, %c0_12] : memref<10x8x8xf32, #tpu.memory_space<vmem>>, vector<8x8x8xf32>
    %12 = arith.truncf %11 : vector<8x8x8xf32> to vector<8x8x8xbf16>
    %c2_13 = arith.constant 2 : index
    %c0_14 = arith.constant 0 : index
    %c0_15 = arith.constant 0 : index
    %13 = vector.load %arg2[%c2_13, %c0_14, %c0_15] : memref<3x8x64xbf16, #tpu.memory_space<vmem>>, vector<1x8x64xbf16>
    %14 = vector.shape_cast %13 : vector<1x8x64xbf16> to vector<8x64xbf16>
    %cst_16 = arith.constant dense<0.000000e+00> : vector<8x8x64xf32>
    %15 = tpu.matmul %12, %14, %cst_16 {dimension_numbers = #tpu.dot_dimension_numbers<[2], [0], [0, 1], [1], [0, 0, 0, 1, 1, 1], [], []>} : vector<8x8x8xbf16>, vector<8x64xbf16>, vector<8x8x64xf32> -> vector<8x8x64xf32>
    %16 = arith.addf %10, %15 : vector<8x8x64xf32>
    %c2_17 = arith.constant 2 : index
    %c0_18 = arith.constant 0 : index
    %17 = vector.load %arg3[%c2_17, %c0_18] : memref<7x512xf32, #tpu.memory_space<vmem>>, vector<1x64xf32>
    %18 = vector.shape_cast %17 : vector<1x64xf32> to vector<1x1x64xf32>
    %19 = vector.broadcast %18 : vector<1x1x64xf32> to vector<8x8x64xf32>
    %20 = arith.addf %16, %19 : vector<8x8x64xf32>
    %cst_19 = arith.constant 0.000000e+00 : f32
    %21 = vector.broadcast %cst_19 : f32 to vector<8x8x64xf32>
    %22 = arith.maximumf %20, %21 : vector<8x8x64xf32>
    %c0_20 = arith.constant 0 : index
    %c0_21 = arith.constant 0 : index
    %23 = vector.load %arg3[%c0_20, %c0_21] : memref<7x512xf32, #tpu.memory_space<vmem>>, vector<1x512xf32>
    %24 = arith.truncf %22 : vector<8x8x64xf32> to vector<8x8x64xbf16>
    %c0_22 = arith.constant 0 : index
    %c0_23 = arith.constant 0 : index
    %25 = vector.load %arg4[%c0_22, %c0_23] : memref<64x512xbf16, #tpu.memory_space<vmem>>, vector<64x512xbf16>
    %cst_24 = arith.constant dense<0.000000e+00> : vector<8x8x512xf32>
    %26 = tpu.matmul %24, %25, %cst_24 {dimension_numbers = #tpu.dot_dimension_numbers<[2], [0], [0, 1], [1], [0, 0, 0, 1, 1, 1], [], []>} : vector<8x8x64xbf16>, vector<64x512xbf16>, vector<8x8x512xf32> -> vector<8x8x512xf32>
    %27 = vector.shape_cast %23 : vector<1x512xf32> to vector<1x1x512xf32>
    %28 = vector.broadcast %27 : vector<1x1x512xf32> to vector<8x8x512xf32>
    %29 = arith.addf %26, %28 : vector<8x8x512xf32>
    %30 = vector.extract_strided_slice %29 {offsets = [0, 0, 0], sizes = [8, 8, 256], strides = [1, 1, 1]} : vector<8x8x512xf32> to vector<8x8x256xf32>
    %31 = vector.extract_strided_slice %29 {offsets = [0, 0, 256], sizes = [8, 8, 256], strides = [1, 1, 1]} : vector<8x8x512xf32> to vector<8x8x256xf32>
    %c0_25 = arith.constant 0 : index
    %c0_26 = arith.constant 0 : index
    %c0_27 = arith.constant 0 : index
    %32 = vector.load %arg5[%c0_25, %c0_26, %c0_27] : memref<2x64x256xbf16, #tpu.memory_space<vmem>>, vector<1x64x256xbf16>
    %33 = vector.shape_cast %32 : vector<1x64x256xbf16> to vector<64x256xbf16>
    %c1_28 = arith.constant 1 : index
    %c0_29 = arith.constant 0 : index
    %c0_30 = arith.constant 0 : index
    %34 = vector.load %arg5[%c1_28, %c0_29, %c0_30] : memref<2x64x256xbf16, #tpu.memory_space<vmem>>, vector<1x64x256xbf16>
    %35 = vector.shape_cast %34 : vector<1x64x256xbf16> to vector<64x256xbf16>
    %cst_31 = arith.constant 0.000000e+00 : f32
    %36 = vector.broadcast %cst_31 : f32 to vector<8x64xf32>
    %cst_32 = arith.constant 0.000000e+00 : f32
    %37 = vector.broadcast %cst_32 : f32 to vector<8x64xf32>
    %cst_33 = arith.constant 0.000000e+00 : f32
    %38 = vector.broadcast %cst_33 : f32 to vector<8x64xf32>
    %cst_34 = arith.constant 0.000000e+00 : f32
    %39 = vector.broadcast %cst_34 : f32 to vector<8x64xf32>
    %40 = vector.extract_strided_slice %30 {offsets = [0, 0, 0], sizes = [1, 8, 256], strides = [1, 1, 1]} : vector<8x8x256xf32> to vector<1x8x256xf32>
    %41 = vector.shape_cast %40 : vector<1x8x256xf32> to vector<8x256xf32>
    %42 = arith.truncf %36 : vector<8x64xf32> to vector<8x64xbf16>
    %cst_35 = arith.constant dense<0.000000e+00> : vector<8x256xf32>
    %43 = tpu.matmul %42, %33, %cst_35 {dimension_numbers = #tpu.dot_dimension_numbers<[1], [0], [0], [1], [0, 0, 1, 1], [], []>} : vector<8x64xbf16>, vector<64x256xbf16>, vector<8x256xf32> -> vector<8x256xf32>
    %44 = arith.addf %41, %43 : vector<8x256xf32>
    %45 = vector.extract_strided_slice %31 {offsets = [7, 0, 0], sizes = [1, 8, 256], strides = [1, 1, 1]} : vector<8x8x256xf32> to vector<1x8x256xf32>
    %46 = vector.shape_cast %45 : vector<1x8x256xf32> to vector<8x256xf32>
    %47 = arith.truncf %38 : vector<8x64xf32> to vector<8x64xbf16>
    %cst_36 = arith.constant dense<0.000000e+00> : vector<8x256xf32>
    %48 = tpu.matmul %47, %35, %cst_36 {dimension_numbers = #tpu.dot_dimension_numbers<[1], [0], [0], [1], [0, 0, 1, 1], [], []>} : vector<8x64xbf16>, vector<64x256xbf16>, vector<8x256xf32> -> vector<8x256xf32>
    %49 = arith.addf %46, %48 : vector<8x256xf32>
    %50 = vector.extract_strided_slice %44 {offsets = [0, 0], sizes = [8, 192], strides = [1, 1]} : vector<8x256xf32> to vector<8x192xf32>
    %51 = arith.negf %50 : vector<8x192xf32>
    %52 = math.exp %51 : vector<8x192xf32>
    %cst_37 = arith.constant 1.000000e+00 : f32
    %53 = vector.broadcast %cst_37 : f32 to vector<8x192xf32>
    %54 = arith.addf %53, %52 : vector<8x192xf32>
    %55 = arith.divf %53, %54 : vector<8x192xf32>
    %56 = vector.extract_strided_slice %49 {offsets = [0, 0], sizes = [8, 192], strides = [1, 1]} : vector<8x256xf32> to vector<8x192xf32>
    %57 = arith.negf %56 : vector<8x192xf32>
    %58 = math.exp %57 : vector<8x192xf32>
    %cst_38 = arith.constant 1.000000e+00 : f32
    %59 = vector.broadcast %cst_38 : f32 to vector<8x192xf32>
    %60 = arith.addf %59, %58 : vector<8x192xf32>
    %61 = arith.divf %59, %60 : vector<8x192xf32>
    %62 = vector.extract_strided_slice %44 {offsets = [0, 192], sizes = [8, 64], strides = [1, 1]} : vector<8x256xf32> to vector<8x64xf32>
    %63 = math.tanh %62 : vector<8x64xf32>
    %64 = vector.extract_strided_slice %49 {offsets = [0, 192], sizes = [8, 64], strides = [1, 1]} : vector<8x256xf32> to vector<8x64xf32>
    %65 = math.tanh %64 : vector<8x64xf32>
    %66 = vector.extract_strided_slice %55 {offsets = [0, 64], sizes = [8, 64], strides = [1, 1]} : vector<8x192xf32> to vector<8x64xf32>
    %67 = arith.mulf %66, %37 : vector<8x64xf32>
    %68 = vector.extract_strided_slice %55 {offsets = [0, 0], sizes = [8, 64], strides = [1, 1]} : vector<8x192xf32> to vector<8x64xf32>
    %69 = arith.mulf %68, %63 : vector<8x64xf32>
    %70 = arith.addf %67, %69 : vector<8x64xf32>
    %71 = vector.extract_strided_slice %61 {offsets = [0, 64], sizes = [8, 64], strides = [1, 1]} : vector<8x192xf32> to vector<8x64xf32>
    %72 = arith.mulf %71, %39 : vector<8x64xf32>
    %73 = vector.extract_strided_slice %61 {offsets = [0, 0], sizes = [8, 64], strides = [1, 1]} : vector<8x192xf32> to vector<8x64xf32>
    %74 = arith.mulf %73, %65 : vector<8x64xf32>
    %75 = arith.addf %72, %74 : vector<8x64xf32>
    %76 = vector.extract_strided_slice %55 {offsets = [0, 128], sizes = [8, 64], strides = [1, 1]} : vector<8x192xf32> to vector<8x64xf32>
    %77 = math.tanh %70 : vector<8x64xf32>
    %78 = arith.mulf %76, %77 : vector<8x64xf32>
    %79 = vector.extract_strided_slice %61 {offsets = [0, 128], sizes = [8, 64], strides = [1, 1]} : vector<8x192xf32> to vector<8x64xf32>
    %80 = math.tanh %75 : vector<8x64xf32>
    %81 = arith.mulf %79, %80 : vector<8x64xf32>
    %c0_39 = arith.constant 0 : index
    %c0_40 = arith.constant 0 : index
    %c0_41 = arith.constant 0 : index
    %82 = vector.load %arg11[%c0_39, %c0_40, %c0_41] : memref<8x8x128xf32, #tpu.memory_space<vmem>>, vector<1x8x64xf32>
    %83 = vector.shape_cast %82 : vector<1x8x64xf32> to vector<8x64xf32>
    %84 = vector.shape_cast %78 : vector<8x64xf32> to vector<1x8x64xf32>
    tpu.vector_store %arg11[%c0_39, %c0_40, %c0_41], %84 {strides = array<i32>} : memref<8x8x128xf32, #tpu.memory_space<vmem>>, vector<1x8x64xf32>,
    %c7 = arith.constant 7 : index
    %c0_42 = arith.constant 0 : index
    %c64 = arith.constant 64 : index
    %85 = vector.load %arg11[%c7, %c0_42, %c64] : memref<8x8x128xf32, #tpu.memory_space<vmem>>, vector<1x8x64xf32>
    %86 = vector.shape_cast %85 : vector<1x8x64xf32> to vector<8x64xf32>
    %87 = vector.shape_cast %81 : vector<8x64xf32> to vector<1x8x64xf32>
    tpu.vector_store %arg11[%c7, %c0_42, %c64], %87 {strides = array<i32>} : memref<8x8x128xf32, #tpu.memory_space<vmem>>, vector<1x8x64xf32>,
    %88 = vector.extract_strided_slice %30 {offsets = [1, 0, 0], sizes = [1, 8, 256], strides = [1, 1, 1]} : vector<8x8x256xf32> to vector<1x8x256xf32>
    %89 = vector.shape_cast %88 : vector<1x8x256xf32> to vector<8x256xf32>
    %90 = arith.truncf %78 : vector<8x64xf32> to vector<8x64xbf16>
    %cst_43 = arith.constant dense<0.000000e+00> : vector<8x256xf32>
    %91 = tpu.matmul %90, %33, %cst_43 {dimension_numbers = #tpu.dot_dimension_numbers<[1], [0], [0], [1], [0, 0, 1, 1], [], []>} : vector<8x64xbf16>, vector<64x256xbf16>, vector<8x256xf32> -> vector<8x256xf32>
    %92 = arith.addf %89, %91 : vector<8x256xf32>
    %93 = vector.extract_strided_slice %31 {offsets = [6, 0, 0], sizes = [1, 8, 256], strides = [1, 1, 1]} : vector<8x8x256xf32> to vector<1x8x256xf32>
    %94 = vector.shape_cast %93 : vector<1x8x256xf32> to vector<8x256xf32>
    %95 = arith.truncf %81 : vector<8x64xf32> to vector<8x64xbf16>
    %cst_44 = arith.constant dense<0.000000e+00> : vector<8x256xf32>
    %96 = tpu.matmul %95, %35, %cst_44 {dimension_numbers = #tpu.dot_dimension_numbers<[1], [0], [0], [1], [0, 0, 1, 1], [], []>} : vector<8x64xbf16>, vector<64x256xbf16>, vector<8x256xf32> -> vector<8x256xf32>
    %97 = arith.addf %94, %96 : vector<8x256xf32>
    %98 = vector.extract_strided_slice %92 {offsets = [0, 0], sizes = [8, 192], strides = [1, 1]} : vector<8x256xf32> to vector<8x192xf32>
    %99 = arith.negf %98 : vector<8x192xf32>
    %100 = math.exp %99 : vector<8x192xf32>
    %cst_45 = arith.constant 1.000000e+00 : f32
    %101 = vector.broadcast %cst_45 : f32 to vector<8x192xf32>
    %102 = arith.addf %101, %100 : vector<8x192xf32>
    %103 = arith.divf %101, %102 : vector<8x192xf32>
    %104 = vector.extract_strided_slice %97 {offsets = [0, 0], sizes = [8, 192], strides = [1, 1]} : vector<8x256xf32> to vector<8x192xf32>
    %105 = arith.negf %104 : vector<8x192xf32>
    %106 = math.exp %105 : vector<8x192xf32>
    %cst_46 = arith.constant 1.000000e+00 : f32
    %107 = vector.broadcast %cst_46 : f32 to vector<8x192xf32>
    %108 = arith.addf %107, %106 : vector<8x192xf32>
    %109 = arith.divf %107, %108 : vector<8x192xf32>
    %110 = vector.extract_strided_slice %92 {offsets = [0, 192], sizes = [8, 64], strides = [1, 1]} : vector<8x256xf32> to vector<8x64xf32>
    %111 = math.tanh %110 : vector<8x64xf32>
    %112 = vector.extract_strided_slice %97 {offsets = [0, 192], sizes = [8, 64], strides = [1, 1]} : vector<8x256xf32> to vector<8x64xf32>
    %113 = math.tanh %112 : vector<8x64xf32>
    %114 = vector.extract_strided_slice %103 {offsets = [0, 64], sizes = [8, 64], strides = [1, 1]} : vector<8x192xf32> to vector<8x64xf32>
    %115 = arith.mulf %114, %70 : vector<8x64xf32>
    %116 = vector.extract_strided_slice %103 {offsets = [0, 0], sizes = [8, 64], strides = [1, 1]} : vector<8x192xf32> to vector<8x64xf32>
    %117 = arith.mulf %116, %111 : vector<8x64xf32>
    %118 = arith.addf %115, %117 : vector<8x64xf32>
    %119 = vector.extract_strided_slice %109 {offsets = [0, 64], sizes = [8, 64], strides = [1, 1]} : vector<8x192xf32> to vector<8x64xf32>
    %120 = arith.mulf %119, %75 : vector<8x64xf32>
    %121 = vector.extract_strided_slice %109 {offsets = [0, 0], sizes = [8, 64], strides = [1, 1]} : vector<8x192xf32> to vector<8x64xf32>
    %122 = arith.mulf %121, %113 : vector<8x64xf32>
    %123 = arith.addf %120, %122 : vector<8x64xf32>
    %124 = vector.extract_strided_slice %103 {offsets = [0, 128], sizes = [8, 64], strides = [1, 1]} : vector<8x192xf32> to vector<8x64xf32>
    %125 = math.tanh %118 : vector<8x64xf32>
    %126 = arith.mulf %124, %125 : vector<8x64xf32>
    %127 = vector.extract_strided_slice %109 {offsets = [0, 128], sizes = [8, 64], strides = [1, 1]} : vector<8x192xf32> to vector<8x64xf32>
    %128 = math.tanh %123 : vector<8x64xf32>
    %129 = arith.mulf %127, %128 : vector<8x64xf32>
    %c1_47 = arith.constant 1 : index
    %c0_48 = arith.constant 0 : index
    %c0_49 = arith.constant 0 : index
    %130 = vector.load %arg11[%c1_47, %c0_48, %c0_49] : memref<8x8x128xf32, #tpu.memory_space<vmem>>, vector<1x8x64xf32>
    %131 = vector.shape_cast %130 : vector<1x8x64xf32> to vector<8x64xf32>
    %132 = vector.shape_cast %126 : vector<8x64xf32> to vector<1x8x64xf32>
    tpu.vector_store %arg11[%c1_47, %c0_48, %c0_49], %132 {strides = array<i32>} : memref<8x8x128xf32, #tpu.memory_space<vmem>>, vector<1x8x64xf32>,
    %c6 = arith.constant 6 : index
    %c0_50 = arith.constant 0 : index
    %c64_51 = arith.constant 64 : index
    %133 = vector.load %arg11[%c6, %c0_50, %c64_51] : memref<8x8x128xf32, #tpu.memory_space<vmem>>, vector<1x8x64xf32>
    %134 = vector.shape_cast %133 : vector<1x8x64xf32> to vector<8x64xf32>
    %135 = vector.shape_cast %129 : vector<8x64xf32> to vector<1x8x64xf32>
    tpu.vector_store %arg11[%c6, %c0_50, %c64_51], %135 {strides = array<i32>} : memref<8x8x128xf32, #tpu.memory_space<vmem>>, vector<1x8x64xf32>,
    %136 = vector.extract_strided_slice %30 {offsets = [2, 0, 0], sizes = [1, 8, 256], strides = [1, 1, 1]} : vector<8x8x256xf32> to vector<1x8x256xf32>
    %137 = vector.shape_cast %136 : vector<1x8x256xf32> to vector<8x256xf32>
    %138 = arith.truncf %126 : vector<8x64xf32> to vector<8x64xbf16>
    %cst_52 = arith.constant dense<0.000000e+00> : vector<8x256xf32>
    %139 = tpu.matmul %138, %33, %cst_52 {dimension_numbers = #tpu.dot_dimension_numbers<[1], [0], [0], [1], [0, 0, 1, 1], [], []>} : vector<8x64xbf16>, vector<64x256xbf16>, vector<8x256xf32> -> vector<8x256xf32>
    %140 = arith.addf %137, %139 : vector<8x256xf32>
    %141 = vector.extract_strided_slice %31 {offsets = [5, 0, 0], sizes = [1, 8, 256], strides = [1, 1, 1]} : vector<8x8x256xf32> to vector<1x8x256xf32>
    %142 = vector.shape_cast %141 : vector<1x8x256xf32> to vector<8x256xf32>
    %143 = arith.truncf %129 : vector<8x64xf32> to vector<8x64xbf16>
    %cst_53 = arith.constant dense<0.000000e+00> : vector<8x256xf32>
    %144 = tpu.matmul %143, %35, %cst_53 {dimension_numbers = #tpu.dot_dimension_numbers<[1], [0], [0], [1], [0, 0, 1, 1], [], []>} : vector<8x64xbf16>, vector<64x256xbf16>, vector<8x256xf32> -> vector<8x256xf32>
    %145 = arith.addf %142, %144 : vector<8x256xf32>
    %146 = vector.extract_strided_slice %140 {offsets = [0, 0], sizes = [8, 192], strides = [1, 1]} : vector<8x256xf32> to vector<8x192xf32>
    %147 = arith.negf %146 : vector<8x192xf32>
    %148 = math.exp %147 : vector<8x192xf32>
    %cst_54 = arith.constant 1.000000e+00 : f32
    %149 = vector.broadcast %cst_54 : f32 to vector<8x192xf32>
    %150 = arith.addf %149, %148 : vector<8x192xf32>
    %151 = arith.divf %149, %150 : vector<8x192xf32>
    %152 = vector.extract_strided_slice %145 {offsets = [0, 0], sizes = [8, 192], strides = [1, 1]} : vector<8x256xf32> to vector<8x192xf32>
    %153 = arith.negf %152 : vector<8x192xf32>
    %154 = math.exp %153 : vector<8x192xf32>
    %cst_55 = arith.constant 1.000000e+00 : f32
    %155 = vector.broadcast %cst_55 : f32 to vector<8x192xf32>
    %156 = arith.addf %155, %154 : vector<8x192xf32>
    %157 = arith.divf %155, %156 : vector<8x192xf32>
    %158 = vector.extract_strided_slice %140 {offsets = [0, 192], sizes = [8, 64], strides = [1, 1]} : vector<8x256xf32> to vector<8x64xf32>
    %159 = math.tanh %158 : vector<8x64xf32>
    %160 = vector.extract_strided_slice %145 {offsets = [0, 192], sizes = [8, 64], strides = [1, 1]} : vector<8x256xf32> to vector<8x64xf32>
    %161 = math.tanh %160 : vector<8x64xf32>
    %162 = vector.extract_strided_slice %151 {offsets = [0, 64], sizes = [8, 64], strides = [1, 1]} : vector<8x192xf32> to vector<8x64xf32>
    %163 = arith.mulf %162, %118 : vector<8x64xf32>
    %164 = vector.extract_strided_slice %151 {offsets = [0, 0], sizes = [8, 64], strides = [1, 1]} : vector<8x192xf32> to vector<8x64xf32>
    %165 = arith.mulf %164, %159 : vector<8x64xf32>
    %166 = arith.addf %163, %165 : vector<8x64xf32>
    %167 = vector.extract_strided_slice %157 {offsets = [0, 64], sizes = [8, 64], strides = [1, 1]} : vector<8x192xf32> to vector<8x64xf32>
    %168 = arith.mulf %167, %123 : vector<8x64xf32>
    %169 = vector.extract_strided_slice %157 {offsets = [0, 0], sizes = [8, 64], strides = [1, 1]} : vector<8x192xf32> to vector<8x64xf32>
    %170 = arith.mulf %169, %161 : vector<8x64xf32>
    %171 = arith.addf %168, %170 : vector<8x64xf32>
    %172 = vector.extract_strided_slice %151 {offsets = [0, 128], sizes = [8, 64], strides = [1, 1]} : vector<8x192xf32> to vector<8x64xf32>
    %173 = math.tanh %166 : vector<8x64xf32>
    %174 = arith.mulf %172, %173 : vector<8x64xf32>
    %175 = vector.extract_strided_slice %157 {offsets = [0, 128], sizes = [8, 64], strides = [1, 1]} : vector<8x192xf32> to vector<8x64xf32>
    %176 = math.tanh %171 : vector<8x64xf32>
    %177 = arith.mulf %175, %176 : vector<8x64xf32>
    %c2_56 = arith.constant 2 : index
    %c0_57 = arith.constant 0 : index
    %c0_58 = arith.constant 0 : index
    %178 = vector.load %arg11[%c2_56, %c0_57, %c0_58] : memref<8x8x128xf32, #tpu.memory_space<vmem>>, vector<1x8x64xf32>
    %179 = vector.shape_cast %178 : vector<1x8x64xf32> to vector<8x64xf32>
    %180 = vector.shape_cast %174 : vector<8x64xf32> to vector<1x8x64xf32>
    tpu.vector_store %arg11[%c2_56, %c0_57, %c0_58], %180 {strides = array<i32>} : memref<8x8x128xf32, #tpu.memory_space<vmem>>, vector<1x8x64xf32>,
    %c5 = arith.constant 5 : index
    %c0_59 = arith.constant 0 : index
    %c64_60 = arith.constant 64 : index
    %181 = vector.load %arg11[%c5, %c0_59, %c64_60] : memref<8x8x128xf32, #tpu.memory_space<vmem>>, vector<1x8x64xf32>
    %182 = vector.shape_cast %181 : vector<1x8x64xf32> to vector<8x64xf32>
    %183 = vector.shape_cast %177 : vector<8x64xf32> to vector<1x8x64xf32>
    tpu.vector_store %arg11[%c5, %c0_59, %c64_60], %183 {strides = array<i32>} : memref<8x8x128xf32, #tpu.memory_space<vmem>>, vector<1x8x64xf32>,
    %184 = vector.extract_strided_slice %30 {offsets = [3, 0, 0], sizes = [1, 8, 256], strides = [1, 1, 1]} : vector<8x8x256xf32> to vector<1x8x256xf32>
    %185 = vector.shape_cast %184 : vector<1x8x256xf32> to vector<8x256xf32>
    %186 = arith.truncf %174 : vector<8x64xf32> to vector<8x64xbf16>
    %cst_61 = arith.constant dense<0.000000e+00> : vector<8x256xf32>
    %187 = tpu.matmul %186, %33, %cst_61 {dimension_numbers = #tpu.dot_dimension_numbers<[1], [0], [0], [1], [0, 0, 1, 1], [], []>} : vector<8x64xbf16>, vector<64x256xbf16>, vector<8x256xf32> -> vector<8x256xf32>
    %188 = arith.addf %185, %187 : vector<8x256xf32>
    %189 = vector.extract_strided_slice %31 {offsets = [4, 0, 0], sizes = [1, 8, 256], strides = [1, 1, 1]} : vector<8x8x256xf32> to vector<1x8x256xf32>
    %190 = vector.shape_cast %189 : vector<1x8x256xf32> to vector<8x256xf32>
    %191 = arith.truncf %177 : vector<8x64xf32> to vector<8x64xbf16>
    %cst_62 = arith.constant dense<0.000000e+00> : vector<8x256xf32>
    %192 = tpu.matmul %191, %35, %cst_62 {dimension_numbers = #tpu.dot_dimension_numbers<[1], [0], [0], [1], [0, 0, 1, 1], [], []>} : vector<8x64xbf16>, vector<64x256xbf16>, vector<8x256xf32> -> vector<8x256xf32>
    %193 = arith.addf %190, %192 : vector<8x256xf32>
    %194 = vector.extract_strided_slice %188 {offsets = [0, 0], sizes = [8, 192], strides = [1, 1]} : vector<8x256xf32> to vector<8x192xf32>
    %195 = arith.negf %194 : vector<8x192xf32>
    %196 = math.exp %195 : vector<8x192xf32>
    %cst_63 = arith.constant 1.000000e+00 : f32
    %197 = vector.broadcast %cst_63 : f32 to vector<8x192xf32>
    %198 = arith.addf %197, %196 : vector<8x192xf32>
    %199 = arith.divf %197, %198 : vector<8x192xf32>
    %200 = vector.extract_strided_slice %193 {offsets = [0, 0], sizes = [8, 192], strides = [1, 1]} : vector<8x256xf32> to vector<8x192xf32>
    %201 = arith.negf %200 : vector<8x192xf32>
    %202 = math.exp %201 : vector<8x192xf32>
    %cst_64 = arith.constant 1.000000e+00 : f32
    %203 = vector.broadcast %cst_64 : f32 to vector<8x192xf32>
    %204 = arith.addf %203, %202 : vector<8x192xf32>
    %205 = arith.divf %203, %204 : vector<8x192xf32>
    %206 = vector.extract_strided_slice %188 {offsets = [0, 192], sizes = [8, 64], strides = [1, 1]} : vector<8x256xf32> to vector<8x64xf32>
    %207 = math.tanh %206 : vector<8x64xf32>
    %208 = vector.extract_strided_slice %193 {offsets = [0, 192], sizes = [8, 64], strides = [1, 1]} : vector<8x256xf32> to vector<8x64xf32>
    %209 = math.tanh %208 : vector<8x64xf32>
    %210 = vector.extract_strided_slice %199 {offsets = [0, 64], sizes = [8, 64], strides = [1, 1]} : vector<8x192xf32> to vector<8x64xf32>
    %211 = arith.mulf %210, %166 : vector<8x64xf32>
    %212 = vector.extract_strided_slice %199 {offsets = [0, 0], sizes = [8, 64], strides = [1, 1]} : vector<8x192xf32> to vector<8x64xf32>
    %213 = arith.mulf %212, %207 : vector<8x64xf32>
    %214 = arith.addf %211, %213 : vector<8x64xf32>
    %215 = vector.extract_strided_slice %205 {offsets = [0, 64], sizes = [8, 64], strides = [1, 1]} : vector<8x192xf32> to vector<8x64xf32>
    %216 = arith.mulf %215, %171 : vector<8x64xf32>
    %217 = vector.extract_strided_slice %205 {offsets = [0, 0], sizes = [8, 64], strides = [1, 1]} : vector<8x192xf32> to vector<8x64xf32>
    %218 = arith.mulf %217, %209 : vector<8x64xf32>
    %219 = arith.addf %216, %218 : vector<8x64xf32>
    %220 = vector.extract_strided_slice %199 {offsets = [0, 128], sizes = [8, 64], strides = [1, 1]} : vector<8x192xf32> to vector<8x64xf32>
    %221 = math.tanh %214 : vector<8x64xf32>
    %222 = arith.mulf %220, %221 : vector<8x64xf32>
    %223 = vector.extract_strided_slice %205 {offsets = [0, 128], sizes = [8, 64], strides = [1, 1]} : vector<8x192xf32> to vector<8x64xf32>
    %224 = math.tanh %219 : vector<8x64xf32>
    %225 = arith.mulf %223, %224 : vector<8x64xf32>
    %c3 = arith.constant 3 : index
    %c0_65 = arith.constant 0 : index
    %c0_66 = arith.constant 0 : index
    %226 = vector.load %arg11[%c3, %c0_65, %c0_66] : memref<8x8x128xf32, #tpu.memory_space<vmem>>, vector<1x8x64xf32>
    %227 = vector.shape_cast %226 : vector<1x8x64xf32> to vector<8x64xf32>
    %228 = vector.shape_cast %222 : vector<8x64xf32> to vector<1x8x64xf32>
    tpu.vector_store %arg11[%c3, %c0_65, %c0_66], %228 {strides = array<i32>} : memref<8x8x128xf32, #tpu.memory_space<vmem>>, vector<1x8x64xf32>,
    %c4 = arith.constant 4 : index
    %c0_67 = arith.constant 0 : index
    %c64_68 = arith.constant 64 : index
    %229 = vector.load %arg11[%c4, %c0_67, %c64_68] : memref<8x8x128xf32, #tpu.memory_space<vmem>>, vector<1x8x64xf32>
    %230 = vector.shape_cast %229 : vector<1x8x64xf32> to vector<8x64xf32>
    %231 = vector.shape_cast %225 : vector<8x64xf32> to vector<1x8x64xf32>
    tpu.vector_store %arg11[%c4, %c0_67, %c64_68], %231 {strides = array<i32>} : memref<8x8x128xf32, #tpu.memory_space<vmem>>, vector<1x8x64xf32>,
    %232 = vector.extract_strided_slice %30 {offsets = [4, 0, 0], sizes = [1, 8, 256], strides = [1, 1, 1]} : vector<8x8x256xf32> to vector<1x8x256xf32>
    %233 = vector.shape_cast %232 : vector<1x8x256xf32> to vector<8x256xf32>
    %234 = arith.truncf %222 : vector<8x64xf32> to vector<8x64xbf16>
    %cst_69 = arith.constant dense<0.000000e+00> : vector<8x256xf32>
    %235 = tpu.matmul %234, %33, %cst_69 {dimension_numbers = #tpu.dot_dimension_numbers<[1], [0], [0], [1], [0, 0, 1, 1], [], []>} : vector<8x64xbf16>, vector<64x256xbf16>, vector<8x256xf32> -> vector<8x256xf32>
    %236 = arith.addf %233, %235 : vector<8x256xf32>
    %237 = vector.extract_strided_slice %31 {offsets = [3, 0, 0], sizes = [1, 8, 256], strides = [1, 1, 1]} : vector<8x8x256xf32> to vector<1x8x256xf32>
    %238 = vector.shape_cast %237 : vector<1x8x256xf32> to vector<8x256xf32>
    %239 = arith.truncf %225 : vector<8x64xf32> to vector<8x64xbf16>
    %cst_70 = arith.constant dense<0.000000e+00> : vector<8x256xf32>
    %240 = tpu.matmul %239, %35, %cst_70 {dimension_numbers = #tpu.dot_dimension_numbers<[1], [0], [0], [1], [0, 0, 1, 1], [], []>} : vector<8x64xbf16>, vector<64x256xbf16>, vector<8x256xf32> -> vector<8x256xf32>
    %241 = arith.addf %238, %240 : vector<8x256xf32>
    %242 = vector.extract_strided_slice %236 {offsets = [0, 0], sizes = [8, 192], strides = [1, 1]} : vector<8x256xf32> to vector<8x192xf32>
    %243 = arith.negf %242 : vector<8x192xf32>
    %244 = math.exp %243 : vector<8x192xf32>
    %cst_71 = arith.constant 1.000000e+00 : f32
    %245 = vector.broadcast %cst_71 : f32 to vector<8x192xf32>
    %246 = arith.addf %245, %244 : vector<8x192xf32>
    %247 = arith.divf %245, %246 : vector<8x192xf32>
    %248 = vector.extract_strided_slice %241 {offsets = [0, 0], sizes = [8, 192], strides = [1, 1]} : vector<8x256xf32> to vector<8x192xf32>
    %249 = arith.negf %248 : vector<8x192xf32>
    %250 = math.exp %249 : vector<8x192xf32>
    %cst_72 = arith.constant 1.000000e+00 : f32
    %251 = vector.broadcast %cst_72 : f32 to vector<8x192xf32>
    %252 = arith.addf %251, %250 : vector<8x192xf32>
    %253 = arith.divf %251, %252 : vector<8x192xf32>
    %254 = vector.extract_strided_slice %236 {offsets = [0, 192], sizes = [8, 64], strides = [1, 1]} : vector<8x256xf32> to vector<8x64xf32>
    %255 = math.tanh %254 : vector<8x64xf32>
    %256 = vector.extract_strided_slice %241 {offsets = [0, 192], sizes = [8, 64], strides = [1, 1]} : vector<8x256xf32> to vector<8x64xf32>
    %257 = math.tanh %256 : vector<8x64xf32>
    %258 = vector.extract_strided_slice %247 {offsets = [0, 64], sizes = [8, 64], strides = [1, 1]} : vector<8x192xf32> to vector<8x64xf32>
    %259 = arith.mulf %258, %214 : vector<8x64xf32>
    %260 = vector.extract_strided_slice %247 {offsets = [0, 0], sizes = [8, 64], strides = [1, 1]} : vector<8x192xf32> to vector<8x64xf32>
    %261 = arith.mulf %260, %255 : vector<8x64xf32>
    %262 = arith.addf %259, %261 : vector<8x64xf32>
    %263 = vector.extract_strided_slice %253 {offsets = [0, 64], sizes = [8, 64], strides = [1, 1]} : vector<8x192xf32> to vector<8x64xf32>
    %264 = arith.mulf %263, %219 : vector<8x64xf32>
    %265 = vector.extract_strided_slice %253 {offsets = [0, 0], sizes = [8, 64], strides = [1, 1]} : vector<8x192xf32> to vector<8x64xf32>
    %266 = arith.mulf %265, %257 : vector<8x64xf32>
    %267 = arith.addf %264, %266 : vector<8x64xf32>
    %268 = vector.extract_strided_slice %247 {offsets = [0, 128], sizes = [8, 64], strides = [1, 1]} : vector<8x192xf32> to vector<8x64xf32>
    %269 = math.tanh %262 : vector<8x64xf32>
    %270 = arith.mulf %268, %269 : vector<8x64xf32>
    %271 = vector.extract_strided_slice %253 {offsets = [0, 128], sizes = [8, 64], strides = [1, 1]} : vector<8x192xf32> to vector<8x64xf32>
    %272 = math.tanh %267 : vector<8x64xf32>
    %273 = arith.mulf %271, %272 : vector<8x64xf32>
    %c4_73 = arith.constant 4 : index
    %c0_74 = arith.constant 0 : index
    %c0_75 = arith.constant 0 : index
    %274 = vector.load %arg11[%c4_73, %c0_74, %c0_75] : memref<8x8x128xf32, #tpu.memory_space<vmem>>, vector<1x8x64xf32>
    %275 = vector.shape_cast %274 : vector<1x8x64xf32> to vector<8x64xf32>
    %276 = vector.shape_cast %270 : vector<8x64xf32> to vector<1x8x64xf32>
    tpu.vector_store %arg11[%c4_73, %c0_74, %c0_75], %276 {strides = array<i32>} : memref<8x8x128xf32, #tpu.memory_space<vmem>>, vector<1x8x64xf32>,
    %c3_76 = arith.constant 3 : index
    %c0_77 = arith.constant 0 : index
    %c64_78 = arith.constant 64 : index
    %277 = vector.load %arg11[%c3_76, %c0_77, %c64_78] : memref<8x8x128xf32, #tpu.memory_space<vmem>>, vector<1x8x64xf32>
    %278 = vector.shape_cast %277 : vector<1x8x64xf32> to vector<8x64xf32>
    %279 = vector.shape_cast %273 : vector<8x64xf32> to vector<1x8x64xf32>
    tpu.vector_store %arg11[%c3_76, %c0_77, %c64_78], %279 {strides = array<i32>} : memref<8x8x128xf32, #tpu.memory_space<vmem>>, vector<1x8x64xf32>,
    %280 = vector.extract_strided_slice %30 {offsets = [5, 0, 0], sizes = [1, 8, 256], strides = [1, 1, 1]} : vector<8x8x256xf32> to vector<1x8x256xf32>
    %281 = vector.shape_cast %280 : vector<1x8x256xf32> to vector<8x256xf32>
    %282 = arith.truncf %270 : vector<8x64xf32> to vector<8x64xbf16>
    %cst_79 = arith.constant dense<0.000000e+00> : vector<8x256xf32>
    %283 = tpu.matmul %282, %33, %cst_79 {dimension_numbers = #tpu.dot_dimension_numbers<[1], [0], [0], [1], [0, 0, 1, 1], [], []>} : vector<8x64xbf16>, vector<64x256xbf16>, vector<8x256xf32> -> vector<8x256xf32>
    %284 = arith.addf %281, %283 : vector<8x256xf32>
    %285 = vector.extract_strided_slice %31 {offsets = [2, 0, 0], sizes = [1, 8, 256], strides = [1, 1, 1]} : vector<8x8x256xf32> to vector<1x8x256xf32>
    %286 = vector.shape_cast %285 : vector<1x8x256xf32> to vector<8x256xf32>
    %287 = arith.truncf %273 : vector<8x64xf32> to vector<8x64xbf16>
    %cst_80 = arith.constant dense<0.000000e+00> : vector<8x256xf32>
    %288 = tpu.matmul %287, %35, %cst_80 {dimension_numbers = #tpu.dot_dimension_numbers<[1], [0], [0], [1], [0, 0, 1, 1], [], []>} : vector<8x64xbf16>, vector<64x256xbf16>, vector<8x256xf32> -> vector<8x256xf32>
    %289 = arith.addf %286, %288 : vector<8x256xf32>
    %290 = vector.extract_strided_slice %284 {offsets = [0, 0], sizes = [8, 192], strides = [1, 1]} : vector<8x256xf32> to vector<8x192xf32>
    %291 = arith.negf %290 : vector<8x192xf32>
    %292 = math.exp %291 : vector<8x192xf32>
    %cst_81 = arith.constant 1.000000e+00 : f32
    %293 = vector.broadcast %cst_81 : f32 to vector<8x192xf32>
    %294 = arith.addf %293, %292 : vector<8x192xf32>
    %295 = arith.divf %293, %294 : vector<8x192xf32>
    %296 = vector.extract_strided_slice %289 {offsets = [0, 0], sizes = [8, 192], strides = [1, 1]} : vector<8x256xf32> to vector<8x192xf32>
    %297 = arith.negf %296 : vector<8x192xf32>
    %298 = math.exp %297 : vector<8x192xf32>
    %cst_82 = arith.constant 1.000000e+00 : f32
    %299 = vector.broadcast %cst_82 : f32 to vector<8x192xf32>
    %300 = arith.addf %299, %298 : vector<8x192xf32>
    %301 = arith.divf %299, %300 : vector<8x192xf32>
    %302 = vector.extract_strided_slice %284 {offsets = [0, 192], sizes = [8, 64], strides = [1, 1]} : vector<8x256xf32> to vector<8x64xf32>
    %303 = math.tanh %302 : vector<8x64xf32>
    %304 = vector.extract_strided_slice %289 {offsets = [0, 192], sizes = [8, 64], strides = [1, 1]} : vector<8x256xf32> to vector<8x64xf32>
    %305 = math.tanh %304 : vector<8x64xf32>
    %306 = vector.extract_strided_slice %295 {offsets = [0, 64], sizes = [8, 64], strides = [1, 1]} : vector<8x192xf32> to vector<8x64xf32>
    %307 = arith.mulf %306, %262 : vector<8x64xf32>
    %308 = vector.extract_strided_slice %295 {offsets = [0, 0], sizes = [8, 64], strides = [1, 1]} : vector<8x192xf32> to vector<8x64xf32>
    %309 = arith.mulf %308, %303 : vector<8x64xf32>
    %310 = arith.addf %307, %309 : vector<8x64xf32>
    %311 = vector.extract_strided_slice %301 {offsets = [0, 64], sizes = [8, 64], strides = [1, 1]} : vector<8x192xf32> to vector<8x64xf32>
    %312 = arith.mulf %311, %267 : vector<8x64xf32>
    %313 = vector.extract_strided_slice %301 {offsets = [0, 0], sizes = [8, 64], strides = [1, 1]} : vector<8x192xf32> to vector<8x64xf32>
    %314 = arith.mulf %313, %305 : vector<8x64xf32>
    %315 = arith.addf %312, %314 : vector<8x64xf32>
    %316 = vector.extract_strided_slice %295 {offsets = [0, 128], sizes = [8, 64], strides = [1, 1]} : vector<8x192xf32> to vector<8x64xf32>
    %317 = math.tanh %310 : vector<8x64xf32>
    %318 = arith.mulf %316, %317 : vector<8x64xf32>
    %319 = vector.extract_strided_slice %301 {offsets = [0, 128], sizes = [8, 64], strides = [1, 1]} : vector<8x192xf32> to vector<8x64xf32>
    %320 = math.tanh %315 : vector<8x64xf32>
    %321 = arith.mulf %319, %320 : vector<8x64xf32>
    %c5_83 = arith.constant 5 : index
    %c0_84 = arith.constant 0 : index
    %c0_85 = arith.constant 0 : index
    %322 = vector.load %arg11[%c5_83, %c0_84, %c0_85] : memref<8x8x128xf32, #tpu.memory_space<vmem>>, vector<1x8x64xf32>
    %323 = vector.shape_cast %322 : vector<1x8x64xf32> to vector<8x64xf32>
    %324 = vector.shape_cast %318 : vector<8x64xf32> to vector<1x8x64xf32>
    tpu.vector_store %arg11[%c5_83, %c0_84, %c0_85], %324 {strides = array<i32>} : memref<8x8x128xf32, #tpu.memory_space<vmem>>, vector<1x8x64xf32>,
    %c2_86 = arith.constant 2 : index
    %c0_87 = arith.constant 0 : index
    %c64_88 = arith.constant 64 : index
    %325 = vector.load %arg11[%c2_86, %c0_87, %c64_88] : memref<8x8x128xf32, #tpu.memory_space<vmem>>, vector<1x8x64xf32>
    %326 = vector.shape_cast %325 : vector<1x8x64xf32> to vector<8x64xf32>
    %327 = vector.shape_cast %321 : vector<8x64xf32> to vector<1x8x64xf32>
    tpu.vector_store %arg11[%c2_86, %c0_87, %c64_88], %327 {strides = array<i32>} : memref<8x8x128xf32, #tpu.memory_space<vmem>>, vector<1x8x64xf32>,
    %328 = vector.extract_strided_slice %30 {offsets = [6, 0, 0], sizes = [1, 8, 256], strides = [1, 1, 1]} : vector<8x8x256xf32> to vector<1x8x256xf32>
    %329 = vector.shape_cast %328 : vector<1x8x256xf32> to vector<8x256xf32>
    %330 = arith.truncf %318 : vector<8x64xf32> to vector<8x64xbf16>
    %cst_89 = arith.constant dense<0.000000e+00> : vector<8x256xf32>
    %331 = tpu.matmul %330, %33, %cst_89 {dimension_numbers = #tpu.dot_dimension_numbers<[1], [0], [0], [1], [0, 0, 1, 1], [], []>} : vector<8x64xbf16>, vector<64x256xbf16>, vector<8x256xf32> -> vector<8x256xf32>
    %332 = arith.addf %329, %331 : vector<8x256xf32>
    %333 = vector.extract_strided_slice %31 {offsets = [1, 0, 0], sizes = [1, 8, 256], strides = [1, 1, 1]} : vector<8x8x256xf32> to vector<1x8x256xf32>
    %334 = vector.shape_cast %333 : vector<1x8x256xf32> to vector<8x256xf32>
    %335 = arith.truncf %321 : vector<8x64xf32> to vector<8x64xbf16>
    %cst_90 = arith.constant dense<0.000000e+00> : vector<8x256xf32>
    %336 = tpu.matmul %335, %35, %cst_90 {dimension_numbers = #tpu.dot_dimension_numbers<[1], [0], [0], [1], [0, 0, 1, 1], [], []>} : vector<8x64xbf16>, vector<64x256xbf16>, vector<8x256xf32> -> vector<8x256xf32>
    %337 = arith.addf %334, %336 : vector<8x256xf32>
    %338 = vector.extract_strided_slice %332 {offsets = [0, 0], sizes = [8, 192], strides = [1, 1]} : vector<8x256xf32> to vector<8x192xf32>
    %339 = arith.negf %338 : vector<8x192xf32>
    %340 = math.exp %339 : vector<8x192xf32>
    %cst_91 = arith.constant 1.000000e+00 : f32
    %341 = vector.broadcast %cst_91 : f32 to vector<8x192xf32>
    %342 = arith.addf %341, %340 : vector<8x192xf32>
    %343 = arith.divf %341, %342 : vector<8x192xf32>
    %344 = vector.extract_strided_slice %337 {offsets = [0, 0], sizes = [8, 192], strides = [1, 1]} : vector<8x256xf32> to vector<8x192xf32>
    %345 = arith.negf %344 : vector<8x192xf32>
    %346 = math.exp %345 : vector<8x192xf32>
    %cst_92 = arith.constant 1.000000e+00 : f32
    %347 = vector.broadcast %cst_92 : f32 to vector<8x192xf32>
    %348 = arith.addf %347, %346 : vector<8x192xf32>
    %349 = arith.divf %347, %348 : vector<8x192xf32>
    %350 = vector.extract_strided_slice %332 {offsets = [0, 192], sizes = [8, 64], strides = [1, 1]} : vector<8x256xf32> to vector<8x64xf32>
    %351 = math.tanh %350 : vector<8x64xf32>
    %352 = vector.extract_strided_slice %337 {offsets = [0, 192], sizes = [8, 64], strides = [1, 1]} : vector<8x256xf32> to vector<8x64xf32>
    %353 = math.tanh %352 : vector<8x64xf32>
    %354 = vector.extract_strided_slice %343 {offsets = [0, 64], sizes = [8, 64], strides = [1, 1]} : vector<8x192xf32> to vector<8x64xf32>
    %355 = arith.mulf %354, %310 : vector<8x64xf32>
    %356 = vector.extract_strided_slice %343 {offsets = [0, 0], sizes = [8, 64], strides = [1, 1]} : vector<8x192xf32> to vector<8x64xf32>
    %357 = arith.mulf %356, %351 : vector<8x64xf32>
    %358 = arith.addf %355, %357 : vector<8x64xf32>
    %359 = vector.extract_strided_slice %349 {offsets = [0, 64], sizes = [8, 64], strides = [1, 1]} : vector<8x192xf32> to vector<8x64xf32>
    %360 = arith.mulf %359, %315 : vector<8x64xf32>
    %361 = vector.extract_strided_slice %349 {offsets = [0, 0], sizes = [8, 64], strides = [1, 1]} : vector<8x192xf32> to vector<8x64xf32>
    %362 = arith.mulf %361, %353 : vector<8x64xf32>
    %363 = arith.addf %360, %362 : vector<8x64xf32>
    %364 = vector.extract_strided_slice %343 {offsets = [0, 128], sizes = [8, 64], strides = [1, 1]} : vector<8x192xf32> to vector<8x64xf32>
    %365 = math.tanh %358 : vector<8x64xf32>
    %366 = arith.mulf %364, %365 : vector<8x64xf32>
    %367 = vector.extract_strided_slice %349 {offsets = [0, 128], sizes = [8, 64], strides = [1, 1]} : vector<8x192xf32> to vector<8x64xf32>
    %368 = math.tanh %363 : vector<8x64xf32>
    %369 = arith.mulf %367, %368 : vector<8x64xf32>
    %c6_93 = arith.constant 6 : index
    %c0_94 = arith.constant 0 : index
    %c0_95 = arith.constant 0 : index
    %370 = vector.load %arg11[%c6_93, %c0_94, %c0_95] : memref<8x8x128xf32, #tpu.memory_space<vmem>>, vector<1x8x64xf32>
    %371 = vector.shape_cast %370 : vector<1x8x64xf32> to vector<8x64xf32>
    %372 = vector.shape_cast %366 : vector<8x64xf32> to vector<1x8x64xf32>
    tpu.vector_store %arg11[%c6_93, %c0_94, %c0_95], %372 {strides = array<i32>} : memref<8x8x128xf32, #tpu.memory_space<vmem>>, vector<1x8x64xf32>,
    %c1_96 = arith.constant 1 : index
    %c0_97 = arith.constant 0 : index
    %c64_98 = arith.constant 64 : index
    %373 = vector.load %arg11[%c1_96, %c0_97, %c64_98] : memref<8x8x128xf32, #tpu.memory_space<vmem>>, vector<1x8x64xf32>
    %374 = vector.shape_cast %373 : vector<1x8x64xf32> to vector<8x64xf32>
    %375 = vector.shape_cast %369 : vector<8x64xf32> to vector<1x8x64xf32>
    tpu.vector_store %arg11[%c1_96, %c0_97, %c64_98], %375 {strides = array<i32>} : memref<8x8x128xf32, #tpu.memory_space<vmem>>, vector<1x8x64xf32>,
    %376 = vector.extract_strided_slice %30 {offsets = [7, 0, 0], sizes = [1, 8, 256], strides = [1, 1, 1]} : vector<8x8x256xf32> to vector<1x8x256xf32>
    %377 = vector.shape_cast %376 : vector<1x8x256xf32> to vector<8x256xf32>
    %378 = arith.truncf %366 : vector<8x64xf32> to vector<8x64xbf16>
    %cst_99 = arith.constant dense<0.000000e+00> : vector<8x256xf32>
    %379 = tpu.matmul %378, %33, %cst_99 {dimension_numbers = #tpu.dot_dimension_numbers<[1], [0], [0], [1], [0, 0, 1, 1], [], []>} : vector<8x64xbf16>, vector<64x256xbf16>, vector<8x256xf32> -> vector<8x256xf32>
    %380 = arith.addf %377, %379 : vector<8x256xf32>
    %381 = vector.extract_strided_slice %31 {offsets = [0, 0, 0], sizes = [1, 8, 256], strides = [1, 1, 1]} : vector<8x8x256xf32> to vector<1x8x256xf32>
    %382 = vector.shape_cast %381 : vector<1x8x256xf32> to vector<8x256xf32>
    %383 = arith.truncf %369 : vector<8x64xf32> to vector<8x64xbf16>
    %cst_100 = arith.constant dense<0.000000e+00> : vector<8x256xf32>
    %384 = tpu.matmul %383, %35, %cst_100 {dimension_numbers = #tpu.dot_dimension_numbers<[1], [0], [0], [1], [0, 0, 1, 1], [], []>} : vector<8x64xbf16>, vector<64x256xbf16>, vector<8x256xf32> -> vector<8x256xf32>
    %385 = arith.addf %382, %384 : vector<8x256xf32>
    %386 = vector.extract_strided_slice %380 {offsets = [0, 0], sizes = [8, 192], strides = [1, 1]} : vector<8x256xf32> to vector<8x192xf32>
    %387 = arith.negf %386 : vector<8x192xf32>
    %388 = math.exp %387 : vector<8x192xf32>
    %cst_101 = arith.constant 1.000000e+00 : f32
    %389 = vector.broadcast %cst_101 : f32 to vector<8x192xf32>
    %390 = arith.addf %389, %388 : vector<8x192xf32>
    %391 = arith.divf %389, %390 : vector<8x192xf32>
    %392 = vector.extract_strided_slice %385 {offsets = [0, 0], sizes = [8, 192], strides = [1, 1]} : vector<8x256xf32> to vector<8x192xf32>
    %393 = arith.negf %392 : vector<8x192xf32>
    %394 = math.exp %393 : vector<8x192xf32>
    %cst_102 = arith.constant 1.000000e+00 : f32
    %395 = vector.broadcast %cst_102 : f32 to vector<8x192xf32>
    %396 = arith.addf %395, %394 : vector<8x192xf32>
    %397 = arith.divf %395, %396 : vector<8x192xf32>
    %398 = vector.extract_strided_slice %380 {offsets = [0, 192], sizes = [8, 64], strides = [1, 1]} : vector<8x256xf32> to vector<8x64xf32>
    %399 = math.tanh %398 : vector<8x64xf32>
    %400 = vector.extract_strided_slice %385 {offsets = [0, 192], sizes = [8, 64], strides = [1, 1]} : vector<8x256xf32> to vector<8x64xf32>
    %401 = math.tanh %400 : vector<8x64xf32>
    %402 = vector.extract_strided_slice %391 {offsets = [0, 64], sizes = [8, 64], strides = [1, 1]} : vector<8x192xf32> to vector<8x64xf32>
    %403 = arith.mulf %402, %358 : vector<8x64xf32>
    %404 = vector.extract_strided_slice %391 {offsets = [0, 0], sizes = [8, 64], strides = [1, 1]} : vector<8x192xf32> to vector<8x64xf32>
    %405 = arith.mulf %404, %399 : vector<8x64xf32>
    %406 = arith.addf %403, %405 : vector<8x64xf32>
    %407 = vector.extract_strided_slice %397 {offsets = [0, 64], sizes = [8, 64], strides = [1, 1]} : vector<8x192xf32> to vector<8x64xf32>
    %408 = arith.mulf %407, %363 : vector<8x64xf32>
    %409 = vector.extract_strided_slice %397 {offsets = [0, 0], sizes = [8, 64], strides = [1, 1]} : vector<8x192xf32> to vector<8x64xf32>
    %410 = arith.mulf %409, %401 : vector<8x64xf32>
    %411 = arith.addf %408, %410 : vector<8x64xf32>
    %412 = vector.extract_strided_slice %391 {offsets = [0, 128], sizes = [8, 64], strides = [1, 1]} : vector<8x192xf32> to vector<8x64xf32>
    %413 = math.tanh %406 : vector<8x64xf32>
    %414 = arith.mulf %412, %413 : vector<8x64xf32>
    %415 = vector.extract_strided_slice %397 {offsets = [0, 128], sizes = [8, 64], strides = [1, 1]} : vector<8x192xf32> to vector<8x64xf32>
    %416 = math.tanh %411 : vector<8x64xf32>
    %417 = arith.mulf %415, %416 : vector<8x64xf32>
    %c7_103 = arith.constant 7 : index
    %c0_104 = arith.constant 0 : index
    %c0_105 = arith.constant 0 : index
    %418 = vector.load %arg11[%c7_103, %c0_104, %c0_105] : memref<8x8x128xf32, #tpu.memory_space<vmem>>, vector<1x8x64xf32>
    %419 = vector.shape_cast %418 : vector<1x8x64xf32> to vector<8x64xf32>
    %420 = vector.shape_cast %414 : vector<8x64xf32> to vector<1x8x64xf32>
    tpu.vector_store %arg11[%c7_103, %c0_104, %c0_105], %420 {strides = array<i32>} : memref<8x8x128xf32, #tpu.memory_space<vmem>>, vector<1x8x64xf32>,
    %c0_106 = arith.constant 0 : index
    %c0_107 = arith.constant 0 : index
    %c64_108 = arith.constant 64 : index
    %421 = vector.load %arg11[%c0_106, %c0_107, %c64_108] : memref<8x8x128xf32, #tpu.memory_space<vmem>>, vector<1x8x64xf32>
    %422 = vector.shape_cast %421 : vector<1x8x64xf32> to vector<8x64xf32>
    %423 = vector.shape_cast %417 : vector<8x64xf32> to vector<1x8x64xf32>
    tpu.vector_store %arg11[%c0_106, %c0_107, %c64_108], %423 {strides = array<i32>} : memref<8x8x128xf32, #tpu.memory_space<vmem>>, vector<1x8x64xf32>,
    %c1_109 = arith.constant 1 : index
    %c0_110 = arith.constant 0 : index
    %424 = vector.load %arg3[%c1_109, %c0_110] : memref<7x512xf32, #tpu.memory_space<vmem>>, vector<1x512xf32>
    %c0_111 = arith.constant 0 : index
    %c0_112 = arith.constant 0 : index
    %c0_113 = arith.constant 0 : index
    %425 = vector.load %arg11[%c0_111, %c0_112, %c0_113] : memref<8x8x128xf32, #tpu.memory_space<vmem>>, vector<8x8x128xf32>
    %426 = arith.truncf %425 : vector<8x8x128xf32> to vector<8x8x128xbf16>
    %c0_114 = arith.constant 0 : index
    %c0_115 = arith.constant 0 : index
    %427 = vector.load %arg6[%c0_114, %c0_115] : memref<128x512xbf16, #tpu.memory_space<vmem>>, vector<128x512xbf16>
    %cst_116 = arith.constant dense<0.000000e+00> : vector<8x8x512xf32>
    %428 = tpu.matmul %426, %427, %cst_116 {dimension_numbers = #tpu.dot_dimension_numbers<[2], [0], [0, 1], [1], [0, 0, 0, 1, 1, 1], [], []>} : vector<8x8x128xbf16>, vector<128x512xbf16>, vector<8x8x512xf32> -> vector<8x8x512xf32>
    %429 = vector.shape_cast %424 : vector<1x512xf32> to vector<1x1x512xf32>
    %430 = vector.broadcast %429 : vector<1x1x512xf32> to vector<8x8x512xf32>
    %431 = arith.addf %428, %430 : vector<8x8x512xf32>
    %432 = vector.extract_strided_slice %431 {offsets = [0, 0, 0], sizes = [8, 8, 256], strides = [1, 1, 1]} : vector<8x8x512xf32> to vector<8x8x256xf32>
    %433 = vector.extract_strided_slice %431 {offsets = [0, 0, 256], sizes = [8, 8, 256], strides = [1, 1, 1]} : vector<8x8x512xf32> to vector<8x8x256xf32>
    %c0_117 = arith.constant 0 : index
    %c0_118 = arith.constant 0 : index
    %c0_119 = arith.constant 0 : index
    %434 = vector.load %arg7[%c0_117, %c0_118, %c0_119] : memref<2x64x256xbf16, #tpu.memory_space<vmem>>, vector<1x64x256xbf16>
    %435 = vector.shape_cast %434 : vector<1x64x256xbf16> to vector<64x256xbf16>
    %c1_120 = arith.constant 1 : index
    %c0_121 = arith.constant 0 : index
    %c0_122 = arith.constant 0 : index
    %436 = vector.load %arg7[%c1_120, %c0_121, %c0_122] : memref<2x64x256xbf16, #tpu.memory_space<vmem>>, vector<1x64x256xbf16>
    %437 = vector.shape_cast %436 : vector<1x64x256xbf16> to vector<64x256xbf16>
    %cst_123 = arith.constant 0.000000e+00 : f32
    %438 = vector.broadcast %cst_123 : f32 to vector<8x64xf32>
    %cst_124 = arith.constant 0.000000e+00 : f32
    %439 = vector.broadcast %cst_124 : f32 to vector<8x64xf32>
    %cst_125 = arith.constant 0.000000e+00 : f32
    %440 = vector.broadcast %cst_125 : f32 to vector<8x64xf32>
    %cst_126 = arith.constant 0.000000e+00 : f32
    %441 = vector.broadcast %cst_126 : f32 to vector<8x64xf32>
    %442 = vector.extract_strided_slice %432 {offsets = [0, 0, 0], sizes = [1, 8, 256], strides = [1, 1, 1]} : vector<8x8x256xf32> to vector<1x8x256xf32>
    %443 = vector.shape_cast %442 : vector<1x8x256xf32> to vector<8x256xf32>
    %444 = arith.truncf %438 : vector<8x64xf32> to vector<8x64xbf16>
    %cst_127 = arith.constant dense<0.000000e+00> : vector<8x256xf32>
    %445 = tpu.matmul %444, %435, %cst_127 {dimension_numbers = #tpu.dot_dimension_numbers<[1], [0], [0], [1], [0, 0, 1, 1], [], []>} : vector<8x64xbf16>, vector<64x256xbf16>, vector<8x256xf32> -> vector<8x256xf32>
    %446 = arith.addf %443, %445 : vector<8x256xf32>
    %447 = vector.extract_strided_slice %433 {offsets = [7, 0, 0], sizes = [1, 8, 256], strides = [1, 1, 1]} : vector<8x8x256xf32> to vector<1x8x256xf32>
    %448 = vector.shape_cast %447 : vector<1x8x256xf32> to vector<8x256xf32>
    %449 = arith.truncf %440 : vector<8x64xf32> to vector<8x64xbf16>
    %cst_128 = arith.constant dense<0.000000e+00> : vector<8x256xf32>
    %450 = tpu.matmul %449, %437, %cst_128 {dimension_numbers = #tpu.dot_dimension_numbers<[1], [0], [0], [1], [0, 0, 1, 1], [], []>} : vector<8x64xbf16>, vector<64x256xbf16>, vector<8x256xf32> -> vector<8x256xf32>
    %451 = arith.addf %448, %450 : vector<8x256xf32>
    %452 = vector.extract_strided_slice %446 {offsets = [0, 0], sizes = [8, 192], strides = [1, 1]} : vector<8x256xf32> to vector<8x192xf32>
    %453 = arith.negf %452 : vector<8x192xf32>
    %454 = math.exp %453 : vector<8x192xf32>
    %cst_129 = arith.constant 1.000000e+00 : f32
    %455 = vector.broadcast %cst_129 : f32 to vector<8x192xf32>
    %456 = arith.addf %455, %454 : vector<8x192xf32>
    %457 = arith.divf %455, %456 : vector<8x192xf32>
    %458 = vector.extract_strided_slice %451 {offsets = [0, 0], sizes = [8, 192], strides = [1, 1]} : vector<8x256xf32> to vector<8x192xf32>
    %459 = arith.negf %458 : vector<8x192xf32>
    %460 = math.exp %459 : vector<8x192xf32>
    %cst_130 = arith.constant 1.000000e+00 : f32
    %461 = vector.broadcast %cst_130 : f32 to vector<8x192xf32>
    %462 = arith.addf %461, %460 : vector<8x192xf32>
    %463 = arith.divf %461, %462 : vector<8x192xf32>
    %464 = vector.extract_strided_slice %446 {offsets = [0, 192], sizes = [8, 64], strides = [1, 1]} : vector<8x256xf32> to vector<8x64xf32>
    %465 = math.tanh %464 : vector<8x64xf32>
    %466 = vector.extract_strided_slice %451 {offsets = [0, 192], sizes = [8, 64], strides = [1, 1]} : vector<8x256xf32> to vector<8x64xf32>
    %467 = math.tanh %466 : vector<8x64xf32>
    %468 = vector.extract_strided_slice %457 {offsets = [0, 64], sizes = [8, 64], strides = [1, 1]} : vector<8x192xf32> to vector<8x64xf32>
    %469 = arith.mulf %468, %439 : vector<8x64xf32>
    %470 = vector.extract_strided_slice %457 {offsets = [0, 0], sizes = [8, 64], strides = [1, 1]} : vector<8x192xf32> to vector<8x64xf32>
    %471 = arith.mulf %470, %465 : vector<8x64xf32>
    %472 = arith.addf %469, %471 : vector<8x64xf32>
    %473 = vector.extract_strided_slice %463 {offsets = [0, 64], sizes = [8, 64], strides = [1, 1]} : vector<8x192xf32> to vector<8x64xf32>
    %474 = arith.mulf %473, %441 : vector<8x64xf32>
    %475 = vector.extract_strided_slice %463 {offsets = [0, 0], sizes = [8, 64], strides = [1, 1]} : vector<8x192xf32> to vector<8x64xf32>
    %476 = arith.mulf %475, %467 : vector<8x64xf32>
    %477 = arith.addf %474, %476 : vector<8x64xf32>
    %478 = vector.extract_strided_slice %457 {offsets = [0, 128], sizes = [8, 64], strides = [1, 1]} : vector<8x192xf32> to vector<8x64xf32>
    %479 = math.tanh %472 : vector<8x64xf32>
    %480 = arith.mulf %478, %479 : vector<8x64xf32>
    %481 = vector.extract_strided_slice %463 {offsets = [0, 128], sizes = [8, 64], strides = [1, 1]} : vector<8x192xf32> to vector<8x64xf32>
    %482 = math.tanh %477 : vector<8x64xf32>
    %483 = arith.mulf %481, %482 : vector<8x64xf32>
    %c0_131 = arith.constant 0 : index
    %c0_132 = arith.constant 0 : index
    %c0_133 = arith.constant 0 : index
    %484 = vector.load %arg11[%c0_131, %c0_132, %c0_133] : memref<8x8x128xf32, #tpu.memory_space<vmem>>, vector<1x8x64xf32>
    %485 = vector.shape_cast %484 : vector<1x8x64xf32> to vector<8x64xf32>
    %486 = vector.shape_cast %480 : vector<8x64xf32> to vector<1x8x64xf32>
    tpu.vector_store %arg11[%c0_131, %c0_132, %c0_133], %486 {strides = array<i32>} : memref<8x8x128xf32, #tpu.memory_space<vmem>>, vector<1x8x64xf32>,
    %c7_134 = arith.constant 7 : index
    %c0_135 = arith.constant 0 : index
    %c64_136 = arith.constant 64 : index
    %487 = vector.load %arg11[%c7_134, %c0_135, %c64_136] : memref<8x8x128xf32, #tpu.memory_space<vmem>>, vector<1x8x64xf32>
    %488 = vector.shape_cast %487 : vector<1x8x64xf32> to vector<8x64xf32>
    %489 = vector.shape_cast %483 : vector<8x64xf32> to vector<1x8x64xf32>
    tpu.vector_store %arg11[%c7_134, %c0_135, %c64_136], %489 {strides = array<i32>} : memref<8x8x128xf32, #tpu.memory_space<vmem>>, vector<1x8x64xf32>,
    %490 = vector.extract_strided_slice %432 {offsets = [1, 0, 0], sizes = [1, 8, 256], strides = [1, 1, 1]} : vector<8x8x256xf32> to vector<1x8x256xf32>
    %491 = vector.shape_cast %490 : vector<1x8x256xf32> to vector<8x256xf32>
    %492 = arith.truncf %480 : vector<8x64xf32> to vector<8x64xbf16>
    %cst_137 = arith.constant dense<0.000000e+00> : vector<8x256xf32>
    %493 = tpu.matmul %492, %435, %cst_137 {dimension_numbers = #tpu.dot_dimension_numbers<[1], [0], [0], [1], [0, 0, 1, 1], [], []>} : vector<8x64xbf16>, vector<64x256xbf16>, vector<8x256xf32> -> vector<8x256xf32>
    %494 = arith.addf %491, %493 : vector<8x256xf32>
    %495 = vector.extract_strided_slice %433 {offsets = [6, 0, 0], sizes = [1, 8, 256], strides = [1, 1, 1]} : vector<8x8x256xf32> to vector<1x8x256xf32>
    %496 = vector.shape_cast %495 : vector<1x8x256xf32> to vector<8x256xf32>
    %497 = arith.truncf %483 : vector<8x64xf32> to vector<8x64xbf16>
    %cst_138 = arith.constant dense<0.000000e+00> : vector<8x256xf32>
    %498 = tpu.matmul %497, %437, %cst_138 {dimension_numbers = #tpu.dot_dimension_numbers<[1], [0], [0], [1], [0, 0, 1, 1], [], []>} : vector<8x64xbf16>, vector<64x256xbf16>, vector<8x256xf32> -> vector<8x256xf32>
    %499 = arith.addf %496, %498 : vector<8x256xf32>
    %500 = vector.extract_strided_slice %494 {offsets = [0, 0], sizes = [8, 192], strides = [1, 1]} : vector<8x256xf32> to vector<8x192xf32>
    %501 = arith.negf %500 : vector<8x192xf32>
    %502 = math.exp %501 : vector<8x192xf32>
    %cst_139 = arith.constant 1.000000e+00 : f32
    %503 = vector.broadcast %cst_139 : f32 to vector<8x192xf32>
    %504 = arith.addf %503, %502 : vector<8x192xf32>
    %505 = arith.divf %503, %504 : vector<8x192xf32>
    %506 = vector.extract_strided_slice %499 {offsets = [0, 0], sizes = [8, 192], strides = [1, 1]} : vector<8x256xf32> to vector<8x192xf32>
    %507 = arith.negf %506 : vector<8x192xf32>
    %508 = math.exp %507 : vector<8x192xf32>
    %cst_140 = arith.constant 1.000000e+00 : f32
    %509 = vector.broadcast %cst_140 : f32 to vector<8x192xf32>
    %510 = arith.addf %509, %508 : vector<8x192xf32>
    %511 = arith.divf %509, %510 : vector<8x192xf32>
    %512 = vector.extract_strided_slice %494 {offsets = [0, 192], sizes = [8, 64], strides = [1, 1]} : vector<8x256xf32> to vector<8x64xf32>
    %513 = math.tanh %512 : vector<8x64xf32>
    %514 = vector.extract_strided_slice %499 {offsets = [0, 192], sizes = [8, 64], strides = [1, 1]} : vector<8x256xf32> to vector<8x64xf32>
    %515 = math.tanh %514 : vector<8x64xf32>
    %516 = vector.extract_strided_slice %505 {offsets = [0, 64], sizes = [8, 64], strides = [1, 1]} : vector<8x192xf32> to vector<8x64xf32>
    %517 = arith.mulf %516, %472 : vector<8x64xf32>
    %518 = vector.extract_strided_slice %505 {offsets = [0, 0], sizes = [8, 64], strides = [1, 1]} : vector<8x192xf32> to vector<8x64xf32>
    %519 = arith.mulf %518, %513 : vector<8x64xf32>
    %520 = arith.addf %517, %519 : vector<8x64xf32>
    %521 = vector.extract_strided_slice %511 {offsets = [0, 64], sizes = [8, 64], strides = [1, 1]} : vector<8x192xf32> to vector<8x64xf32>
    %522 = arith.mulf %521, %477 : vector<8x64xf32>
    %523 = vector.extract_strided_slice %511 {offsets = [0, 0], sizes = [8, 64], strides = [1, 1]} : vector<8x192xf32> to vector<8x64xf32>
    %524 = arith.mulf %523, %515 : vector<8x64xf32>
    %525 = arith.addf %522, %524 : vector<8x64xf32>
    %526 = vector.extract_strided_slice %505 {offsets = [0, 128], sizes = [8, 64], strides = [1, 1]} : vector<8x192xf32> to vector<8x64xf32>
    %527 = math.tanh %520 : vector<8x64xf32>
    %528 = arith.mulf %526, %527 : vector<8x64xf32>
    %529 = vector.extract_strided_slice %511 {offsets = [0, 128], sizes = [8, 64], strides = [1, 1]} : vector<8x192xf32> to vector<8x64xf32>
    %530 = math.tanh %525 : vector<8x64xf32>
    %531 = arith.mulf %529, %530 : vector<8x64xf32>
    %c1_141 = arith.constant 1 : index
    %c0_142 = arith.constant 0 : index
    %c0_143 = arith.constant 0 : index
    %532 = vector.load %arg11[%c1_141, %c0_142, %c0_143] : memref<8x8x128xf32, #tpu.memory_space<vmem>>, vector<1x8x64xf32>
    %533 = vector.shape_cast %532 : vector<1x8x64xf32> to vector<8x64xf32>
    %534 = vector.shape_cast %528 : vector<8x64xf32> to vector<1x8x64xf32>
    tpu.vector_store %arg11[%c1_141, %c0_142, %c0_143], %534 {strides = array<i32>} : memref<8x8x128xf32, #tpu.memory_space<vmem>>, vector<1x8x64xf32>,
    %c6_144 = arith.constant 6 : index
    %c0_145 = arith.constant 0 : index
    %c64_146 = arith.constant 64 : index
    %535 = vector.load %arg11[%c6_144, %c0_145, %c64_146] : memref<8x8x128xf32, #tpu.memory_space<vmem>>, vector<1x8x64xf32>
    %536 = vector.shape_cast %535 : vector<1x8x64xf32> to vector<8x64xf32>
    %537 = vector.shape_cast %531 : vector<8x64xf32> to vector<1x8x64xf32>
    tpu.vector_store %arg11[%c6_144, %c0_145, %c64_146], %537 {strides = array<i32>} : memref<8x8x128xf32, #tpu.memory_space<vmem>>, vector<1x8x64xf32>,
    %538 = vector.extract_strided_slice %432 {offsets = [2, 0, 0], sizes = [1, 8, 256], strides = [1, 1, 1]} : vector<8x8x256xf32> to vector<1x8x256xf32>
    %539 = vector.shape_cast %538 : vector<1x8x256xf32> to vector<8x256xf32>
    %540 = arith.truncf %528 : vector<8x64xf32> to vector<8x64xbf16>
    %cst_147 = arith.constant dense<0.000000e+00> : vector<8x256xf32>
    %541 = tpu.matmul %540, %435, %cst_147 {dimension_numbers = #tpu.dot_dimension_numbers<[1], [0], [0], [1], [0, 0, 1, 1], [], []>} : vector<8x64xbf16>, vector<64x256xbf16>, vector<8x256xf32> -> vector<8x256xf32>
    %542 = arith.addf %539, %541 : vector<8x256xf32>
    %543 = vector.extract_strided_slice %433 {offsets = [5, 0, 0], sizes = [1, 8, 256], strides = [1, 1, 1]} : vector<8x8x256xf32> to vector<1x8x256xf32>
    %544 = vector.shape_cast %543 : vector<1x8x256xf32> to vector<8x256xf32>
    %545 = arith.truncf %531 : vector<8x64xf32> to vector<8x64xbf16>
    %cst_148 = arith.constant dense<0.000000e+00> : vector<8x256xf32>
    %546 = tpu.matmul %545, %437, %cst_148 {dimension_numbers = #tpu.dot_dimension_numbers<[1], [0], [0], [1], [0, 0, 1, 1], [], []>} : vector<8x64xbf16>, vector<64x256xbf16>, vector<8x256xf32> -> vector<8x256xf32>
    %547 = arith.addf %544, %546 : vector<8x256xf32>
    %548 = vector.extract_strided_slice %542 {offsets = [0, 0], sizes = [8, 192], strides = [1, 1]} : vector<8x256xf32> to vector<8x192xf32>
    %549 = arith.negf %548 : vector<8x192xf32>
    %550 = math.exp %549 : vector<8x192xf32>
    %cst_149 = arith.constant 1.000000e+00 : f32
    %551 = vector.broadcast %cst_149 : f32 to vector<8x192xf32>
    %552 = arith.addf %551, %550 : vector<8x192xf32>
    %553 = arith.divf %551, %552 : vector<8x192xf32>
    %554 = vector.extract_strided_slice %547 {offsets = [0, 0], sizes = [8, 192], strides = [1, 1]} : vector<8x256xf32> to vector<8x192xf32>
    %555 = arith.negf %554 : vector<8x192xf32>
    %556 = math.exp %555 : vector<8x192xf32>
    %cst_150 = arith.constant 1.000000e+00 : f32
    %557 = vector.broadcast %cst_150 : f32 to vector<8x192xf32>
    %558 = arith.addf %557, %556 : vector<8x192xf32>
    %559 = arith.divf %557, %558 : vector<8x192xf32>
    %560 = vector.extract_strided_slice %542 {offsets = [0, 192], sizes = [8, 64], strides = [1, 1]} : vector<8x256xf32> to vector<8x64xf32>
    %561 = math.tanh %560 : vector<8x64xf32>
    %562 = vector.extract_strided_slice %547 {offsets = [0, 192], sizes = [8, 64], strides = [1, 1]} : vector<8x256xf32> to vector<8x64xf32>
    %563 = math.tanh %562 : vector<8x64xf32>
    %564 = vector.extract_strided_slice %553 {offsets = [0, 64], sizes = [8, 64], strides = [1, 1]} : vector<8x192xf32> to vector<8x64xf32>
    %565 = arith.mulf %564, %520 : vector<8x64xf32>
    %566 = vector.extract_strided_slice %553 {offsets = [0, 0], sizes = [8, 64], strides = [1, 1]} : vector<8x192xf32> to vector<8x64xf32>
    %567 = arith.mulf %566, %561 : vector<8x64xf32>
    %568 = arith.addf %565, %567 : vector<8x64xf32>
    %569 = vector.extract_strided_slice %559 {offsets = [0, 64], sizes = [8, 64], strides = [1, 1]} : vector<8x192xf32> to vector<8x64xf32>
    %570 = arith.mulf %569, %525 : vector<8x64xf32>
    %571 = vector.extract_strided_slice %559 {offsets = [0, 0], sizes = [8, 64], strides = [1, 1]} : vector<8x192xf32> to vector<8x64xf32>
    %572 = arith.mulf %571, %563 : vector<8x64xf32>
    %573 = arith.addf %570, %572 : vector<8x64xf32>
    %574 = vector.extract_strided_slice %553 {offsets = [0, 128], sizes = [8, 64], strides = [1, 1]} : vector<8x192xf32> to vector<8x64xf32>
    %575 = math.tanh %568 : vector<8x64xf32>
    %576 = arith.mulf %574, %575 : vector<8x64xf32>
    %577 = vector.extract_strided_slice %559 {offsets = [0, 128], sizes = [8, 64], strides = [1, 1]} : vector<8x192xf32> to vector<8x64xf32>
    %578 = math.tanh %573 : vector<8x64xf32>
    %579 = arith.mulf %577, %578 : vector<8x64xf32>
    %c2_151 = arith.constant 2 : index
    %c0_152 = arith.constant 0 : index
    %c0_153 = arith.constant 0 : index
    %580 = vector.load %arg11[%c2_151, %c0_152, %c0_153] : memref<8x8x128xf32, #tpu.memory_space<vmem>>, vector<1x8x64xf32>
    %581 = vector.shape_cast %580 : vector<1x8x64xf32> to vector<8x64xf32>
    %582 = vector.shape_cast %576 : vector<8x64xf32> to vector<1x8x64xf32>
    tpu.vector_store %arg11[%c2_151, %c0_152, %c0_153], %582 {strides = array<i32>} : memref<8x8x128xf32, #tpu.memory_space<vmem>>, vector<1x8x64xf32>,
    %c5_154 = arith.constant 5 : index
    %c0_155 = arith.constant 0 : index
    %c64_156 = arith.constant 64 : index
    %583 = vector.load %arg11[%c5_154, %c0_155, %c64_156] : memref<8x8x128xf32, #tpu.memory_space<vmem>>, vector<1x8x64xf32>
    %584 = vector.shape_cast %583 : vector<1x8x64xf32> to vector<8x64xf32>
    %585 = vector.shape_cast %579 : vector<8x64xf32> to vector<1x8x64xf32>
    tpu.vector_store %arg11[%c5_154, %c0_155, %c64_156], %585 {strides = array<i32>} : memref<8x8x128xf32, #tpu.memory_space<vmem>>, vector<1x8x64xf32>,
    %586 = vector.extract_strided_slice %432 {offsets = [3, 0, 0], sizes = [1, 8, 256], strides = [1, 1, 1]} : vector<8x8x256xf32> to vector<1x8x256xf32>
    %587 = vector.shape_cast %586 : vector<1x8x256xf32> to vector<8x256xf32>
    %588 = arith.truncf %576 : vector<8x64xf32> to vector<8x64xbf16>
    %cst_157 = arith.constant dense<0.000000e+00> : vector<8x256xf32>
    %589 = tpu.matmul %588, %435, %cst_157 {dimension_numbers = #tpu.dot_dimension_numbers<[1], [0], [0], [1], [0, 0, 1, 1], [], []>} : vector<8x64xbf16>, vector<64x256xbf16>, vector<8x256xf32> -> vector<8x256xf32>
    %590 = arith.addf %587, %589 : vector<8x256xf32>
    %591 = vector.extract_strided_slice %433 {offsets = [4, 0, 0], sizes = [1, 8, 256], strides = [1, 1, 1]} : vector<8x8x256xf32> to vector<1x8x256xf32>
    %592 = vector.shape_cast %591 : vector<1x8x256xf32> to vector<8x256xf32>
    %593 = arith.truncf %579 : vector<8x64xf32> to vector<8x64xbf16>
    %cst_158 = arith.constant dense<0.000000e+00> : vector<8x256xf32>
    %594 = tpu.matmul %593, %437, %cst_158 {dimension_numbers = #tpu.dot_dimension_numbers<[1], [0], [0], [1], [0, 0, 1, 1], [], []>} : vector<8x64xbf16>, vector<64x256xbf16>, vector<8x256xf32> -> vector<8x256xf32>
    %595 = arith.addf %592, %594 : vector<8x256xf32>
    %596 = vector.extract_strided_slice %590 {offsets = [0, 0], sizes = [8, 192], strides = [1, 1]} : vector<8x256xf32> to vector<8x192xf32>
    %597 = arith.negf %596 : vector<8x192xf32>
    %598 = math.exp %597 : vector<8x192xf32>
    %cst_159 = arith.constant 1.000000e+00 : f32
    %599 = vector.broadcast %cst_159 : f32 to vector<8x192xf32>
    %600 = arith.addf %599, %598 : vector<8x192xf32>
    %601 = arith.divf %599, %600 : vector<8x192xf32>
    %602 = vector.extract_strided_slice %595 {offsets = [0, 0], sizes = [8, 192], strides = [1, 1]} : vector<8x256xf32> to vector<8x192xf32>
    %603 = arith.negf %602 : vector<8x192xf32>
    %604 = math.exp %603 : vector<8x192xf32>
    %cst_160 = arith.constant 1.000000e+00 : f32
    %605 = vector.broadcast %cst_160 : f32 to vector<8x192xf32>
    %606 = arith.addf %605, %604 : vector<8x192xf32>
    %607 = arith.divf %605, %606 : vector<8x192xf32>
    %608 = vector.extract_strided_slice %590 {offsets = [0, 192], sizes = [8, 64], strides = [1, 1]} : vector<8x256xf32> to vector<8x64xf32>
    %609 = math.tanh %608 : vector<8x64xf32>
    %610 = vector.extract_strided_slice %595 {offsets = [0, 192], sizes = [8, 64], strides = [1, 1]} : vector<8x256xf32> to vector<8x64xf32>
    %611 = math.tanh %610 : vector<8x64xf32>
    %612 = vector.extract_strided_slice %601 {offsets = [0, 64], sizes = [8, 64], strides = [1, 1]} : vector<8x192xf32> to vector<8x64xf32>
    %613 = arith.mulf %612, %568 : vector<8x64xf32>
    %614 = vector.extract_strided_slice %601 {offsets = [0, 0], sizes = [8, 64], strides = [1, 1]} : vector<8x192xf32> to vector<8x64xf32>
    %615 = arith.mulf %614, %609 : vector<8x64xf32>
    %616 = arith.addf %613, %615 : vector<8x64xf32>
    %617 = vector.extract_strided_slice %607 {offsets = [0, 64], sizes = [8, 64], strides = [1, 1]} : vector<8x192xf32> to vector<8x64xf32>
    %618 = arith.mulf %617, %573 : vector<8x64xf32>
    %619 = vector.extract_strided_slice %607 {offsets = [0, 0], sizes = [8, 64], strides = [1, 1]} : vector<8x192xf32> to vector<8x64xf32>
    %620 = arith.mulf %619, %611 : vector<8x64xf32>
    %621 = arith.addf %618, %620 : vector<8x64xf32>
    %622 = vector.extract_strided_slice %601 {offsets = [0, 128], sizes = [8, 64], strides = [1, 1]} : vector<8x192xf32> to vector<8x64xf32>
    %623 = math.tanh %616 : vector<8x64xf32>
    %624 = arith.mulf %622, %623 : vector<8x64xf32>
    %625 = vector.extract_strided_slice %607 {offsets = [0, 128], sizes = [8, 64], strides = [1, 1]} : vector<8x192xf32> to vector<8x64xf32>
    %626 = math.tanh %621 : vector<8x64xf32>
    %627 = arith.mulf %625, %626 : vector<8x64xf32>
    %c3_161 = arith.constant 3 : index
    %c0_162 = arith.constant 0 : index
    %c0_163 = arith.constant 0 : index
    %628 = vector.load %arg11[%c3_161, %c0_162, %c0_163] : memref<8x8x128xf32, #tpu.memory_space<vmem>>, vector<1x8x64xf32>
    %629 = vector.shape_cast %628 : vector<1x8x64xf32> to vector<8x64xf32>
    %630 = vector.shape_cast %624 : vector<8x64xf32> to vector<1x8x64xf32>
    tpu.vector_store %arg11[%c3_161, %c0_162, %c0_163], %630 {strides = array<i32>} : memref<8x8x128xf32, #tpu.memory_space<vmem>>, vector<1x8x64xf32>,
    %c4_164 = arith.constant 4 : index
    %c0_165 = arith.constant 0 : index
    %c64_166 = arith.constant 64 : index
    %631 = vector.load %arg11[%c4_164, %c0_165, %c64_166] : memref<8x8x128xf32, #tpu.memory_space<vmem>>, vector<1x8x64xf32>
    %632 = vector.shape_cast %631 : vector<1x8x64xf32> to vector<8x64xf32>
    %633 = vector.shape_cast %627 : vector<8x64xf32> to vector<1x8x64xf32>
    tpu.vector_store %arg11[%c4_164, %c0_165, %c64_166], %633 {strides = array<i32>} : memref<8x8x128xf32, #tpu.memory_space<vmem>>, vector<1x8x64xf32>,
    %634 = vector.extract_strided_slice %432 {offsets = [4, 0, 0], sizes = [1, 8, 256], strides = [1, 1, 1]} : vector<8x8x256xf32> to vector<1x8x256xf32>
    %635 = vector.shape_cast %634 : vector<1x8x256xf32> to vector<8x256xf32>
    %636 = arith.truncf %624 : vector<8x64xf32> to vector<8x64xbf16>
    %cst_167 = arith.constant dense<0.000000e+00> : vector<8x256xf32>
    %637 = tpu.matmul %636, %435, %cst_167 {dimension_numbers = #tpu.dot_dimension_numbers<[1], [0], [0], [1], [0, 0, 1, 1], [], []>} : vector<8x64xbf16>, vector<64x256xbf16>, vector<8x256xf32> -> vector<8x256xf32>
    %638 = arith.addf %635, %637 : vector<8x256xf32>
    %639 = vector.extract_strided_slice %433 {offsets = [3, 0, 0], sizes = [1, 8, 256], strides = [1, 1, 1]} : vector<8x8x256xf32> to vector<1x8x256xf32>
    %640 = vector.shape_cast %639 : vector<1x8x256xf32> to vector<8x256xf32>
    %641 = arith.truncf %627 : vector<8x64xf32> to vector<8x64xbf16>
    %cst_168 = arith.constant dense<0.000000e+00> : vector<8x256xf32>
    %642 = tpu.matmul %641, %437, %cst_168 {dimension_numbers = #tpu.dot_dimension_numbers<[1], [0], [0], [1], [0, 0, 1, 1], [], []>} : vector<8x64xbf16>, vector<64x256xbf16>, vector<8x256xf32> -> vector<8x256xf32>
    %643 = arith.addf %640, %642 : vector<8x256xf32>
    %644 = vector.extract_strided_slice %638 {offsets = [0, 0], sizes = [8, 192], strides = [1, 1]} : vector<8x256xf32> to vector<8x192xf32>
    %645 = arith.negf %644 : vector<8x192xf32>
    %646 = math.exp %645 : vector<8x192xf32>
    %cst_169 = arith.constant 1.000000e+00 : f32
    %647 = vector.broadcast %cst_169 : f32 to vector<8x192xf32>
    %648 = arith.addf %647, %646 : vector<8x192xf32>
    %649 = arith.divf %647, %648 : vector<8x192xf32>
    %650 = vector.extract_strided_slice %643 {offsets = [0, 0], sizes = [8, 192], strides = [1, 1]} : vector<8x256xf32> to vector<8x192xf32>
    %651 = arith.negf %650 : vector<8x192xf32>
    %652 = math.exp %651 : vector<8x192xf32>
    %cst_170 = arith.constant 1.000000e+00 : f32
    %653 = vector.broadcast %cst_170 : f32 to vector<8x192xf32>
    %654 = arith.addf %653, %652 : vector<8x192xf32>
    %655 = arith.divf %653, %654 : vector<8x192xf32>
    %656 = vector.extract_strided_slice %638 {offsets = [0, 192], sizes = [8, 64], strides = [1, 1]} : vector<8x256xf32> to vector<8x64xf32>
    %657 = math.tanh %656 : vector<8x64xf32>
    %658 = vector.extract_strided_slice %643 {offsets = [0, 192], sizes = [8, 64], strides = [1, 1]} : vector<8x256xf32> to vector<8x64xf32>
    %659 = math.tanh %658 : vector<8x64xf32>
    %660 = vector.extract_strided_slice %649 {offsets = [0, 64], sizes = [8, 64], strides = [1, 1]} : vector<8x192xf32> to vector<8x64xf32>
    %661 = arith.mulf %660, %616 : vector<8x64xf32>
    %662 = vector.extract_strided_slice %649 {offsets = [0, 0], sizes = [8, 64], strides = [1, 1]} : vector<8x192xf32> to vector<8x64xf32>
    %663 = arith.mulf %662, %657 : vector<8x64xf32>
    %664 = arith.addf %661, %663 : vector<8x64xf32>
    %665 = vector.extract_strided_slice %655 {offsets = [0, 64], sizes = [8, 64], strides = [1, 1]} : vector<8x192xf32> to vector<8x64xf32>
    %666 = arith.mulf %665, %621 : vector<8x64xf32>
    %667 = vector.extract_strided_slice %655 {offsets = [0, 0], sizes = [8, 64], strides = [1, 1]} : vector<8x192xf32> to vector<8x64xf32>
    %668 = arith.mulf %667, %659 : vector<8x64xf32>
    %669 = arith.addf %666, %668 : vector<8x64xf32>
    %670 = vector.extract_strided_slice %649 {offsets = [0, 128], sizes = [8, 64], strides = [1, 1]} : vector<8x192xf32> to vector<8x64xf32>
    %671 = math.tanh %664 : vector<8x64xf32>
    %672 = arith.mulf %670, %671 : vector<8x64xf32>
    %673 = vector.extract_strided_slice %655 {offsets = [0, 128], sizes = [8, 64], strides = [1, 1]} : vector<8x192xf32> to vector<8x64xf32>
    %674 = math.tanh %669 : vector<8x64xf32>
    %675 = arith.mulf %673, %674 : vector<8x64xf32>
    %c4_171 = arith.constant 4 : index
    %c0_172 = arith.constant 0 : index
    %c0_173 = arith.constant 0 : index
    %676 = vector.load %arg11[%c4_171, %c0_172, %c0_173] : memref<8x8x128xf32, #tpu.memory_space<vmem>>, vector<1x8x64xf32>
    %677 = vector.shape_cast %676 : vector<1x8x64xf32> to vector<8x64xf32>
    %678 = vector.shape_cast %672 : vector<8x64xf32> to vector<1x8x64xf32>
    tpu.vector_store %arg11[%c4_171, %c0_172, %c0_173], %678 {strides = array<i32>} : memref<8x8x128xf32, #tpu.memory_space<vmem>>, vector<1x8x64xf32>,
    %c3_174 = arith.constant 3 : index
    %c0_175 = arith.constant 0 : index
    %c64_176 = arith.constant 64 : index
    %679 = vector.load %arg11[%c3_174, %c0_175, %c64_176] : memref<8x8x128xf32, #tpu.memory_space<vmem>>, vector<1x8x64xf32>
    %680 = vector.shape_cast %679 : vector<1x8x64xf32> to vector<8x64xf32>
    %681 = vector.shape_cast %675 : vector<8x64xf32> to vector<1x8x64xf32>
    tpu.vector_store %arg11[%c3_174, %c0_175, %c64_176], %681 {strides = array<i32>} : memref<8x8x128xf32, #tpu.memory_space<vmem>>, vector<1x8x64xf32>,
    %682 = vector.extract_strided_slice %432 {offsets = [5, 0, 0], sizes = [1, 8, 256], strides = [1, 1, 1]} : vector<8x8x256xf32> to vector<1x8x256xf32>
    %683 = vector.shape_cast %682 : vector<1x8x256xf32> to vector<8x256xf32>
    %684 = arith.truncf %672 : vector<8x64xf32> to vector<8x64xbf16>
    %cst_177 = arith.constant dense<0.000000e+00> : vector<8x256xf32>
    %685 = tpu.matmul %684, %435, %cst_177 {dimension_numbers = #tpu.dot_dimension_numbers<[1], [0], [0], [1], [0, 0, 1, 1], [], []>} : vector<8x64xbf16>, vector<64x256xbf16>, vector<8x256xf32> -> vector<8x256xf32>
    %686 = arith.addf %683, %685 : vector<8x256xf32>
    %687 = vector.extract_strided_slice %433 {offsets = [2, 0, 0], sizes = [1, 8, 256], strides = [1, 1, 1]} : vector<8x8x256xf32> to vector<1x8x256xf32>
    %688 = vector.shape_cast %687 : vector<1x8x256xf32> to vector<8x256xf32>
    %689 = arith.truncf %675 : vector<8x64xf32> to vector<8x64xbf16>
    %cst_178 = arith.constant dense<0.000000e+00> : vector<8x256xf32>
    %690 = tpu.matmul %689, %437, %cst_178 {dimension_numbers = #tpu.dot_dimension_numbers<[1], [0], [0], [1], [0, 0, 1, 1], [], []>} : vector<8x64xbf16>, vector<64x256xbf16>, vector<8x256xf32> -> vector<8x256xf32>
    %691 = arith.addf %688, %690 : vector<8x256xf32>
    %692 = vector.extract_strided_slice %686 {offsets = [0, 0], sizes = [8, 192], strides = [1, 1]} : vector<8x256xf32> to vector<8x192xf32>
    %693 = arith.negf %692 : vector<8x192xf32>
    %694 = math.exp %693 : vector<8x192xf32>
    %cst_179 = arith.constant 1.000000e+00 : f32
    %695 = vector.broadcast %cst_179 : f32 to vector<8x192xf32>
    %696 = arith.addf %695, %694 : vector<8x192xf32>
    %697 = arith.divf %695, %696 : vector<8x192xf32>
    %698 = vector.extract_strided_slice %691 {offsets = [0, 0], sizes = [8, 192], strides = [1, 1]} : vector<8x256xf32> to vector<8x192xf32>
    %699 = arith.negf %698 : vector<8x192xf32>
    %700 = math.exp %699 : vector<8x192xf32>
    %cst_180 = arith.constant 1.000000e+00 : f32
    %701 = vector.broadcast %cst_180 : f32 to vector<8x192xf32>
    %702 = arith.addf %701, %700 : vector<8x192xf32>
    %703 = arith.divf %701, %702 : vector<8x192xf32>
    %704 = vector.extract_strided_slice %686 {offsets = [0, 192], sizes = [8, 64], strides = [1, 1]} : vector<8x256xf32> to vector<8x64xf32>
    %705 = math.tanh %704 : vector<8x64xf32>
    %706 = vector.extract_strided_slice %691 {offsets = [0, 192], sizes = [8, 64], strides = [1, 1]} : vector<8x256xf32> to vector<8x64xf32>
    %707 = math.tanh %706 : vector<8x64xf32>
    %708 = vector.extract_strided_slice %697 {offsets = [0, 64], sizes = [8, 64], strides = [1, 1]} : vector<8x192xf32> to vector<8x64xf32>
    %709 = arith.mulf %708, %664 : vector<8x64xf32>
    %710 = vector.extract_strided_slice %697 {offsets = [0, 0], sizes = [8, 64], strides = [1, 1]} : vector<8x192xf32> to vector<8x64xf32>
    %711 = arith.mulf %710, %705 : vector<8x64xf32>
    %712 = arith.addf %709, %711 : vector<8x64xf32>
    %713 = vector.extract_strided_slice %703 {offsets = [0, 64], sizes = [8, 64], strides = [1, 1]} : vector<8x192xf32> to vector<8x64xf32>
    %714 = arith.mulf %713, %669 : vector<8x64xf32>
    %715 = vector.extract_strided_slice %703 {offsets = [0, 0], sizes = [8, 64], strides = [1, 1]} : vector<8x192xf32> to vector<8x64xf32>
    %716 = arith.mulf %715, %707 : vector<8x64xf32>
    %717 = arith.addf %714, %716 : vector<8x64xf32>
    %718 = vector.extract_strided_slice %697 {offsets = [0, 128], sizes = [8, 64], strides = [1, 1]} : vector<8x192xf32> to vector<8x64xf32>
    %719 = math.tanh %712 : vector<8x64xf32>
    %720 = arith.mulf %718, %719 : vector<8x64xf32>
    %721 = vector.extract_strided_slice %703 {offsets = [0, 128], sizes = [8, 64], strides = [1, 1]} : vector<8x192xf32> to vector<8x64xf32>
    %722 = math.tanh %717 : vector<8x64xf32>
    %723 = arith.mulf %721, %722 : vector<8x64xf32>
    %c5_181 = arith.constant 5 : index
    %c0_182 = arith.constant 0 : index
    %c0_183 = arith.constant 0 : index
    %724 = vector.load %arg11[%c5_181, %c0_182, %c0_183] : memref<8x8x128xf32, #tpu.memory_space<vmem>>, vector<1x8x64xf32>
    %725 = vector.shape_cast %724 : vector<1x8x64xf32> to vector<8x64xf32>
    %726 = vector.shape_cast %720 : vector<8x64xf32> to vector<1x8x64xf32>
    tpu.vector_store %arg11[%c5_181, %c0_182, %c0_183], %726 {strides = array<i32>} : memref<8x8x128xf32, #tpu.memory_space<vmem>>, vector<1x8x64xf32>,
    %c2_184 = arith.constant 2 : index
    %c0_185 = arith.constant 0 : index
    %c64_186 = arith.constant 64 : index
    %727 = vector.load %arg11[%c2_184, %c0_185, %c64_186] : memref<8x8x128xf32, #tpu.memory_space<vmem>>, vector<1x8x64xf32>
    %728 = vector.shape_cast %727 : vector<1x8x64xf32> to vector<8x64xf32>
    %729 = vector.shape_cast %723 : vector<8x64xf32> to vector<1x8x64xf32>
    tpu.vector_store %arg11[%c2_184, %c0_185, %c64_186], %729 {strides = array<i32>} : memref<8x8x128xf32, #tpu.memory_space<vmem>>, vector<1x8x64xf32>,
    %730 = vector.extract_strided_slice %432 {offsets = [6, 0, 0], sizes = [1, 8, 256], strides = [1, 1, 1]} : vector<8x8x256xf32> to vector<1x8x256xf32>
    %731 = vector.shape_cast %730 : vector<1x8x256xf32> to vector<8x256xf32>
    %732 = arith.truncf %720 : vector<8x64xf32> to vector<8x64xbf16>
    %cst_187 = arith.constant dense<0.000000e+00> : vector<8x256xf32>
    %733 = tpu.matmul %732, %435, %cst_187 {dimension_numbers = #tpu.dot_dimension_numbers<[1], [0], [0], [1], [0, 0, 1, 1], [], []>} : vector<8x64xbf16>, vector<64x256xbf16>, vector<8x256xf32> -> vector<8x256xf32>
    %734 = arith.addf %731, %733 : vector<8x256xf32>
    %735 = vector.extract_strided_slice %433 {offsets = [1, 0, 0], sizes = [1, 8, 256], strides = [1, 1, 1]} : vector<8x8x256xf32> to vector<1x8x256xf32>
    %736 = vector.shape_cast %735 : vector<1x8x256xf32> to vector<8x256xf32>
    %737 = arith.truncf %723 : vector<8x64xf32> to vector<8x64xbf16>
    %cst_188 = arith.constant dense<0.000000e+00> : vector<8x256xf32>
    %738 = tpu.matmul %737, %437, %cst_188 {dimension_numbers = #tpu.dot_dimension_numbers<[1], [0], [0], [1], [0, 0, 1, 1], [], []>} : vector<8x64xbf16>, vector<64x256xbf16>, vector<8x256xf32> -> vector<8x256xf32>
    %739 = arith.addf %736, %738 : vector<8x256xf32>
    %740 = vector.extract_strided_slice %734 {offsets = [0, 0], sizes = [8, 192], strides = [1, 1]} : vector<8x256xf32> to vector<8x192xf32>
    %741 = arith.negf %740 : vector<8x192xf32>
    %742 = math.exp %741 : vector<8x192xf32>
    %cst_189 = arith.constant 1.000000e+00 : f32
    %743 = vector.broadcast %cst_189 : f32 to vector<8x192xf32>
    %744 = arith.addf %743, %742 : vector<8x192xf32>
    %745 = arith.divf %743, %744 : vector<8x192xf32>
    %746 = vector.extract_strided_slice %739 {offsets = [0, 0], sizes = [8, 192], strides = [1, 1]} : vector<8x256xf32> to vector<8x192xf32>
    %747 = arith.negf %746 : vector<8x192xf32>
    %748 = math.exp %747 : vector<8x192xf32>
    %cst_190 = arith.constant 1.000000e+00 : f32
    %749 = vector.broadcast %cst_190 : f32 to vector<8x192xf32>
    %750 = arith.addf %749, %748 : vector<8x192xf32>
    %751 = arith.divf %749, %750 : vector<8x192xf32>
    %752 = vector.extract_strided_slice %734 {offsets = [0, 192], sizes = [8, 64], strides = [1, 1]} : vector<8x256xf32> to vector<8x64xf32>
    %753 = math.tanh %752 : vector<8x64xf32>
    %754 = vector.extract_strided_slice %739 {offsets = [0, 192], sizes = [8, 64], strides = [1, 1]} : vector<8x256xf32> to vector<8x64xf32>
    %755 = math.tanh %754 : vector<8x64xf32>
    %756 = vector.extract_strided_slice %745 {offsets = [0, 64], sizes = [8, 64], strides = [1, 1]} : vector<8x192xf32> to vector<8x64xf32>
    %757 = arith.mulf %756, %712 : vector<8x64xf32>
    %758 = vector.extract_strided_slice %745 {offsets = [0, 0], sizes = [8, 64], strides = [1, 1]} : vector<8x192xf32> to vector<8x64xf32>
    %759 = arith.mulf %758, %753 : vector<8x64xf32>
    %760 = arith.addf %757, %759 : vector<8x64xf32>
    %761 = vector.extract_strided_slice %751 {offsets = [0, 64], sizes = [8, 64], strides = [1, 1]} : vector<8x192xf32> to vector<8x64xf32>
    %762 = arith.mulf %761, %717 : vector<8x64xf32>
    %763 = vector.extract_strided_slice %751 {offsets = [0, 0], sizes = [8, 64], strides = [1, 1]} : vector<8x192xf32> to vector<8x64xf32>
    %764 = arith.mulf %763, %755 : vector<8x64xf32>
    %765 = arith.addf %762, %764 : vector<8x64xf32>
    %766 = vector.extract_strided_slice %745 {offsets = [0, 128], sizes = [8, 64], strides = [1, 1]} : vector<8x192xf32> to vector<8x64xf32>
    %767 = math.tanh %760 : vector<8x64xf32>
    %768 = arith.mulf %766, %767 : vector<8x64xf32>
    %769 = vector.extract_strided_slice %751 {offsets = [0, 128], sizes = [8, 64], strides = [1, 1]} : vector<8x192xf32> to vector<8x64xf32>
    %770 = math.tanh %765 : vector<8x64xf32>
    %771 = arith.mulf %769, %770 : vector<8x64xf32>
    %c6_191 = arith.constant 6 : index
    %c0_192 = arith.constant 0 : index
    %c0_193 = arith.constant 0 : index
    %772 = vector.load %arg11[%c6_191, %c0_192, %c0_193] : memref<8x8x128xf32, #tpu.memory_space<vmem>>, vector<1x8x64xf32>
    %773 = vector.shape_cast %772 : vector<1x8x64xf32> to vector<8x64xf32>
    %774 = vector.shape_cast %768 : vector<8x64xf32> to vector<1x8x64xf32>
    tpu.vector_store %arg11[%c6_191, %c0_192, %c0_193], %774 {strides = array<i32>} : memref<8x8x128xf32, #tpu.memory_space<vmem>>, vector<1x8x64xf32>,
    %c1_194 = arith.constant 1 : index
    %c0_195 = arith.constant 0 : index
    %c64_196 = arith.constant 64 : index
    %775 = vector.load %arg11[%c1_194, %c0_195, %c64_196] : memref<8x8x128xf32, #tpu.memory_space<vmem>>, vector<1x8x64xf32>
    %776 = vector.shape_cast %775 : vector<1x8x64xf32> to vector<8x64xf32>
    %777 = vector.shape_cast %771 : vector<8x64xf32> to vector<1x8x64xf32>
    tpu.vector_store %arg11[%c1_194, %c0_195, %c64_196], %777 {strides = array<i32>} : memref<8x8x128xf32, #tpu.memory_space<vmem>>, vector<1x8x64xf32>,
    %778 = vector.extract_strided_slice %432 {offsets = [7, 0, 0], sizes = [1, 8, 256], strides = [1, 1, 1]} : vector<8x8x256xf32> to vector<1x8x256xf32>
    %779 = vector.shape_cast %778 : vector<1x8x256xf32> to vector<8x256xf32>
    %780 = arith.truncf %768 : vector<8x64xf32> to vector<8x64xbf16>
    %cst_197 = arith.constant dense<0.000000e+00> : vector<8x256xf32>
    %781 = tpu.matmul %780, %435, %cst_197 {dimension_numbers = #tpu.dot_dimension_numbers<[1], [0], [0], [1], [0, 0, 1, 1], [], []>} : vector<8x64xbf16>, vector<64x256xbf16>, vector<8x256xf32> -> vector<8x256xf32>
    %782 = arith.addf %779, %781 : vector<8x256xf32>
    %783 = vector.extract_strided_slice %433 {offsets = [0, 0, 0], sizes = [1, 8, 256], strides = [1, 1, 1]} : vector<8x8x256xf32> to vector<1x8x256xf32>
    %784 = vector.shape_cast %783 : vector<1x8x256xf32> to vector<8x256xf32>
    %785 = arith.truncf %771 : vector<8x64xf32> to vector<8x64xbf16>
    %cst_198 = arith.constant dense<0.000000e+00> : vector<8x256xf32>
    %786 = tpu.matmul %785, %437, %cst_198 {dimension_numbers = #tpu.dot_dimension_numbers<[1], [0], [0], [1], [0, 0, 1, 1], [], []>} : vector<8x64xbf16>, vector<64x256xbf16>, vector<8x256xf32> -> vector<8x256xf32>
    %787 = arith.addf %784, %786 : vector<8x256xf32>
    %788 = vector.extract_strided_slice %782 {offsets = [0, 0], sizes = [8, 192], strides = [1, 1]} : vector<8x256xf32> to vector<8x192xf32>
    %789 = arith.negf %788 : vector<8x192xf32>
    %790 = math.exp %789 : vector<8x192xf32>
    %cst_199 = arith.constant 1.000000e+00 : f32
    %791 = vector.broadcast %cst_199 : f32 to vector<8x192xf32>
    %792 = arith.addf %791, %790 : vector<8x192xf32>
    %793 = arith.divf %791, %792 : vector<8x192xf32>
    %794 = vector.extract_strided_slice %787 {offsets = [0, 0], sizes = [8, 192], strides = [1, 1]} : vector<8x256xf32> to vector<8x192xf32>
    %795 = arith.negf %794 : vector<8x192xf32>
    %796 = math.exp %795 : vector<8x192xf32>
    %cst_200 = arith.constant 1.000000e+00 : f32
    %797 = vector.broadcast %cst_200 : f32 to vector<8x192xf32>
    %798 = arith.addf %797, %796 : vector<8x192xf32>
    %799 = arith.divf %797, %798 : vector<8x192xf32>
    %800 = vector.extract_strided_slice %782 {offsets = [0, 192], sizes = [8, 64], strides = [1, 1]} : vector<8x256xf32> to vector<8x64xf32>
    %801 = math.tanh %800 : vector<8x64xf32>
    %802 = vector.extract_strided_slice %787 {offsets = [0, 192], sizes = [8, 64], strides = [1, 1]} : vector<8x256xf32> to vector<8x64xf32>
    %803 = math.tanh %802 : vector<8x64xf32>
    %804 = vector.extract_strided_slice %793 {offsets = [0, 64], sizes = [8, 64], strides = [1, 1]} : vector<8x192xf32> to vector<8x64xf32>
    %805 = arith.mulf %804, %760 : vector<8x64xf32>
    %806 = vector.extract_strided_slice %793 {offsets = [0, 0], sizes = [8, 64], strides = [1, 1]} : vector<8x192xf32> to vector<8x64xf32>
    %807 = arith.mulf %806, %801 : vector<8x64xf32>
    %808 = arith.addf %805, %807 : vector<8x64xf32>
    %809 = vector.extract_strided_slice %799 {offsets = [0, 64], sizes = [8, 64], strides = [1, 1]} : vector<8x192xf32> to vector<8x64xf32>
    %810 = arith.mulf %809, %765 : vector<8x64xf32>
    %811 = vector.extract_strided_slice %799 {offsets = [0, 0], sizes = [8, 64], strides = [1, 1]} : vector<8x192xf32> to vector<8x64xf32>
    %812 = arith.mulf %811, %803 : vector<8x64xf32>
    %813 = arith.addf %810, %812 : vector<8x64xf32>
    %814 = vector.extract_strided_slice %793 {offsets = [0, 128], sizes = [8, 64], strides = [1, 1]} : vector<8x192xf32> to vector<8x64xf32>
    %815 = math.tanh %808 : vector<8x64xf32>
    %816 = arith.mulf %814, %815 : vector<8x64xf32>
    %817 = vector.extract_strided_slice %799 {offsets = [0, 128], sizes = [8, 64], strides = [1, 1]} : vector<8x192xf32> to vector<8x64xf32>
    %818 = math.tanh %813 : vector<8x64xf32>
    %819 = arith.mulf %817, %818 : vector<8x64xf32>
    %c7_201 = arith.constant 7 : index
    %c0_202 = arith.constant 0 : index
    %c0_203 = arith.constant 0 : index
    %820 = vector.load %arg11[%c7_201, %c0_202, %c0_203] : memref<8x8x128xf32, #tpu.memory_space<vmem>>, vector<1x8x64xf32>
    %821 = vector.shape_cast %820 : vector<1x8x64xf32> to vector<8x64xf32>
    %822 = vector.shape_cast %816 : vector<8x64xf32> to vector<1x8x64xf32>
    tpu.vector_store %arg11[%c7_201, %c0_202, %c0_203], %822 {strides = array<i32>} : memref<8x8x128xf32, #tpu.memory_space<vmem>>, vector<1x8x64xf32>,
    %c0_204 = arith.constant 0 : index
    %c0_205 = arith.constant 0 : index
    %c64_206 = arith.constant 64 : index
    %823 = vector.load %arg11[%c0_204, %c0_205, %c64_206] : memref<8x8x128xf32, #tpu.memory_space<vmem>>, vector<1x8x64xf32>
    %824 = vector.shape_cast %823 : vector<1x8x64xf32> to vector<8x64xf32>
    %825 = vector.shape_cast %819 : vector<8x64xf32> to vector<1x8x64xf32>
    tpu.vector_store %arg11[%c0_204, %c0_205, %c64_206], %825 {strides = array<i32>} : memref<8x8x128xf32, #tpu.memory_space<vmem>>, vector<1x8x64xf32>,
    %c0_207 = arith.constant 0 : index
    %c0_208 = arith.constant 0 : index
    %c0_209 = arith.constant 0 : index
    %826 = vector.load %arg11[%c0_207, %c0_208, %c0_209] : memref<8x8x128xf32, #tpu.memory_space<vmem>>, vector<8x8x128xf32>
    %c3_210 = arith.constant 3 : index
    %c0_211 = arith.constant 0 : index
    %827 = vector.load %arg3[%c3_210, %c0_211] : memref<7x512xf32, #tpu.memory_space<vmem>>, vector<1x128xf32>
    %c4_212 = arith.constant 4 : index
    %c0_213 = arith.constant 0 : index
    %828 = vector.load %arg3[%c4_212, %c0_213] : memref<7x512xf32, #tpu.memory_space<vmem>>, vector<1x1xf32>
    %829 = vector.shape_cast %827 : vector<1x128xf32> to vector<1x1x128xf32>
    %830 = vector.broadcast %829 : vector<1x1x128xf32> to vector<8x8x128xf32>
    %831 = arith.mulf %826, %830 : vector<8x8x128xf32>
    %cst_214 = arith.constant dense<0.000000e+00> : vector<8x8xf32>
    %832 = vector.multi_reduction <add>, %831, %cst_214 [2] : vector<8x8x128xf32> to vector<8x8xf32>
    %833 = vector.shape_cast %832 : vector<8x8xf32> to vector<8x8x1xf32>
    %834 = vector.shape_cast %828 : vector<1x1xf32> to vector<1x1x1xf32>
    %835 = vector.broadcast %834 : vector<1x1x1xf32> to vector<8x8x1xf32>
    %836 = arith.addf %833, %835 : vector<8x8x1xf32>
    %837 = math.tanh %836 : vector<8x8x1xf32>
    %cst_215 = arith.constant dense<0xFF800000> : vector<8x1xf32>
    %838 = vector.multi_reduction <maximumf>, %837, %cst_215 [0] : vector<8x8x1xf32> to vector<8x1xf32>
    %839 = vector.shape_cast %838 : vector<8x1xf32> to vector<1x8x1xf32>
    %840 = vector.broadcast %839 : vector<1x8x1xf32> to vector<8x8x1xf32>
    %841 = arith.subf %837, %840 : vector<8x8x1xf32>
    %842 = math.exp %841 : vector<8x8x1xf32>
    %cst_216 = arith.constant dense<0.000000e+00> : vector<8x1xf32>
    %843 = vector.multi_reduction <add>, %842, %cst_216 [0] : vector<8x8x1xf32> to vector<8x1xf32>
    %844 = vector.shape_cast %843 : vector<8x1xf32> to vector<1x8x1xf32>
    %845 = vector.broadcast %844 : vector<1x8x1xf32> to vector<8x8x1xf32>
    %846 = arith.divf %842, %845 : vector<8x8x1xf32>
    %847 = vector.broadcast %846 : vector<8x8x1xf32> to vector<8x8x128xf32>
    %848 = arith.mulf %847, %826 : vector<8x8x128xf32>
    %cst_217 = arith.constant dense<0.000000e+00> : vector<8x128xf32>
    %849 = vector.multi_reduction <add>, %848, %cst_217 [0] : vector<8x8x128xf32> to vector<8x128xf32>
    %c5_218 = arith.constant 5 : index
    %c0_219 = arith.constant 0 : index
    %850 = vector.load %arg3[%c5_218, %c0_219] : memref<7x512xf32, #tpu.memory_space<vmem>>, vector<1x64xf32>
    %c6_220 = arith.constant 6 : index
    %c0_221 = arith.constant 0 : index
    %851 = vector.load %arg3[%c6_220, %c0_221] : memref<7x512xf32, #tpu.memory_space<vmem>>, vector<1x128xf32>
    %852 = arith.truncf %849 : vector<8x128xf32> to vector<8x128xbf16>
    %c0_222 = arith.constant 0 : index
    %c0_223 = arith.constant 0 : index
    %853 = vector.load %arg8[%c0_222, %c0_223] : memref<128x64xbf16, #tpu.memory_space<vmem>>, vector<128x64xbf16>
    %cst_224 = arith.constant dense<0.000000e+00> : vector<8x64xf32>
    %854 = tpu.matmul %852, %853, %cst_224 {dimension_numbers = #tpu.dot_dimension_numbers<[1], [0], [0], [1], [0, 0, 1, 1], [], []>} : vector<8x128xbf16>, vector<128x64xbf16>, vector<8x64xf32> -> vector<8x64xf32>
    %855 = vector.broadcast %850 : vector<1x64xf32> to vector<8x64xf32>
    %856 = arith.addf %854, %855 : vector<8x64xf32>
    %cst_225 = arith.constant 0.000000e+00 : f32
    %857 = vector.broadcast %cst_225 : f32 to vector<8x64xf32>
    %858 = arith.maximumf %856, %857 : vector<8x64xf32>
    %859 = arith.truncf %858 : vector<8x64xf32> to vector<8x64xbf16>
    %c0_226 = arith.constant 0 : index
    %c0_227 = arith.constant 0 : index
    %860 = vector.load %arg9[%c0_226, %c0_227] : memref<64x128xbf16, #tpu.memory_space<vmem>>, vector<64x128xbf16>
    %cst_228 = arith.constant dense<0.000000e+00> : vector<8x128xf32>
    %861 = tpu.matmul %859, %860, %cst_228 {dimension_numbers = #tpu.dot_dimension_numbers<[1], [0], [0], [1], [0, 0, 1, 1], [], []>} : vector<8x64xbf16>, vector<64x128xbf16>, vector<8x128xf32> -> vector<8x128xf32>
    %862 = vector.broadcast %851 : vector<1x128xf32> to vector<8x128xf32>
    %863 = arith.addf %861, %862 : vector<8x128xf32>
    %c0_229 = arith.constant 0 : index
    %c0_230 = arith.constant 0 : index
    %864 = vector.load %arg10[%c0_229, %c0_230] : memref<8x128xf32, #tpu.memory_space<vmem>>, vector<8x128xf32>
    tpu.vector_store %arg10[%c0_229, %c0_230], %863 {strides = array<i32>} : memref<8x128xf32, #tpu.memory_space<vmem>>, vector<8x128xf32>,
    return
  }
  func.func @transform_0(%arg0: i32) -> (i32, i32, i32) {
    %c0_i32 = arith.constant 0 : i32
    %c0_i32_0 = arith.constant 0 : i32
    %c0_i32_1 = arith.constant 0 : i32
    return %c0_i32, %arg0, %c0_i32_0 : i32, i32, i32
  }
  func.func @transform_1(%arg0: i32) -> (i32, i32, i32) {
    %c0_i32 = arith.constant 0 : i32
    %c0_i32_0 = arith.constant 0 : i32
    %c0_i32_1 = arith.constant 0 : i32
    %c0_i32_2 = arith.constant 0 : i32
    return %c0_i32, %c0_i32_0, %c0_i32_1 : i32, i32, i32
  }
  func.func @transform_2(%arg0: i32) -> (i32, i32) {
    %c0_i32 = arith.constant 0 : i32
    %c0_i32_0 = arith.constant 0 : i32
    %c0_i32_1 = arith.constant 0 : i32
    return %c0_i32, %c0_i32_0 : i32, i32
  }
  func.func @transform_3(%arg0: i32) -> (i32, i32) {
    %c0_i32 = arith.constant 0 : i32
    %c0_i32_0 = arith.constant 0 : i32
    %c0_i32_1 = arith.constant 0 : i32
    return %c0_i32, %c0_i32_0 : i32, i32
  }
  func.func @transform_4(%arg0: i32) -> (i32, i32, i32) {
    %c0_i32 = arith.constant 0 : i32
    %c0_i32_0 = arith.constant 0 : i32
    %c0_i32_1 = arith.constant 0 : i32
    %c0_i32_2 = arith.constant 0 : i32
    return %c0_i32, %c0_i32_0, %c0_i32_1 : i32, i32, i32
  }
  func.func @transform_5(%arg0: i32) -> (i32, i32) {
    %c0_i32 = arith.constant 0 : i32
    %c0_i32_0 = arith.constant 0 : i32
    %c0_i32_1 = arith.constant 0 : i32
    return %c0_i32, %c0_i32_0 : i32, i32
  }
  func.func @transform_6(%arg0: i32) -> (i32, i32, i32) {
    %c0_i32 = arith.constant 0 : i32
    %c0_i32_0 = arith.constant 0 : i32
    %c0_i32_1 = arith.constant 0 : i32
    %c0_i32_2 = arith.constant 0 : i32
    return %c0_i32, %c0_i32_0, %c0_i32_1 : i32, i32, i32
  }
  func.func @transform_7(%arg0: i32) -> (i32, i32) {
    %c0_i32 = arith.constant 0 : i32
    %c0_i32_0 = arith.constant 0 : i32
    %c0_i32_1 = arith.constant 0 : i32
    return %c0_i32, %c0_i32_0 : i32, i32
  }
  func.func @transform_8(%arg0: i32) -> (i32, i32) {
    %c0_i32 = arith.constant 0 : i32
    %c0_i32_0 = arith.constant 0 : i32
    %c0_i32_1 = arith.constant 0 : i32
    return %c0_i32, %c0_i32_0 : i32, i32
  }
  func.func @transform_9(%arg0: i32) -> (i32, i32) {
    %c0_i32 = arith.constant 0 : i32
    %c0_i32_0 = arith.constant 0 : i32
    return %arg0, %c0_i32 : i32, i32
  }
}

</mosaic_0001>

<llo_original>
// kernel: forward.1
$region0: #{forward.1}
  #allocation0 [shape = 'u32[]', space=smem, size = 0x4, offset = 0x4, fixed_abs, tag = 'smem constant byte address 0x4 - core index']
  #allocation1 [shape = 'u32[144,128]{1,0:T(1,128)}', space=vmem, size = 0x12000, scoped, tag = 'internal scratch']
  #allocation2 [shape = 'f32[8,8,128]{2,1,0:T(8,128)}', space=vmem, size = 0x8000, scoped, tag = 'scratch operand']
  %s0 = inlined_call_operand.vmem [shape: f32[10,8,8], index: 0, kind: input, shape index: {}]
  %s1 = inlined_call_operand.hbm [shape: bf16[3,8,64], index: 1, kind: input, shape index: {}]
  %s2 = inlined_call_operand.hbm [shape: f32[7,512], index: 2, kind: input, shape index: {}]
  %s3 = inlined_call_operand.vmem [shape: bf16[64,512], index: 3, kind: input, shape index: {}]
  %s4 = inlined_call_operand.hbm [shape: bf16[2,64,256], index: 4, kind: input, shape index: {}]
  %s5 = inlined_call_operand.vmem [shape: bf16[128,512], index: 5, kind: input, shape index: {}]
  %s6 = inlined_call_operand.hbm [shape: bf16[2,64,256], index: 6, kind: input, shape index: {}]
  %s7 = inlined_call_operand.vmem [shape: bf16[128,64], index: 7, kind: input, shape index: {}]
  %s8 = inlined_call_operand.hbm [shape: bf16[64,128], index: 8, kind: input, shape index: {}]
  %s9 = inlined_call_operand.hbm [shape: f32[8,128], index: 9, kind: output, shape index: {}]
  %s10 = sld [smem:[#allocation0]]
  $region66: #{forward.1} parent=0
    _
  %s12 = ssub.s32 1, %s10
  %s13 = scalar_select 0, %s12, %s10
  $region1: #{forward.1} parent=0
    #allocation3 [shape = 'u8[6144]{0}', space=vmem, size = 0x1800, scoped, tag = 'input window, operand 1, single buffered']
    #allocation4 [shape = 's32[1]{0}', space=sflag, size = 0x4, scoped, tag = 'scoped memory for forward.1']
    #allocation5 [shape = 's32[1]{0}', space=sflag, size = 0x4, scoped, tag = 'scoped memory for forward.1']
    #allocation6 [shape = 'u8[16384]{0}', space=vmem, size = 0x4000, scoped, tag = 'input window, operand 2, single buffered']
    #allocation7 [shape = 's32[1]{0}', space=sflag, size = 0x4, scoped, tag = 'scoped memory for forward.1']
    #allocation8 [shape = 'u8[65536]{0}', space=vmem, size = 0x10000, scoped, tag = 'input window, operand 4, single buffered']
    #allocation9 [shape = 'u8[65536]{0}', space=vmem, size = 0x10000, scoped, tag = 'input window, operand 6, single buffered']
    #allocation10 [shape = 's32[1]{0}', space=sflag, size = 0x4, scoped, tag = 'scoped memory for forward.1']
    #allocation11 [shape = 'u8[16384]{0}', space=vmem, size = 0x4000, scoped, tag = 'input window, operand 8, single buffered']
    #allocation12 [shape = 'u8[4096]{0}', space=vmem, size = 0x1000, scoped, tag = 'output window, operand 0, single buffered']
    %14 = vsyncpa [#allocation4], 0
    %15 = vsyncpa [#allocation7], 0
    %16 = vsyncpa [#allocation10], 0
    %17 = vsyncpa [#allocation5], 0
    // Predicated region
    $region2: #{forward.1} parent=1 // pred_check
      _
    $region3: #{forward.1} parent=1 // pred_check_branch
      %19 = sbr.rel (0) target = $region5
    $region4: #{forward.1} parent=1 // pred_region
      _
    $region5: #{forward.1} parent=1 // pred_fallthru
      _
    // Predicated region
    $region6: #{forward.1} parent=1 // pred_check
      _
    $region7: #{forward.1} parent=1 // pred_check_branch
      %21 = sbr.rel (0) target = $region9
    $region8: #{forward.1} parent=1 // pred_region
      %s23 = ssub.s32 192, 192
      %24 = vsyncadd [#allocation4], %s23
      %s25 = sshll.u32 [#allocation3], 4
      %s26 = int_to_ptr.vmem [resolvable:$true] %s25
      %31 = dma.hbm_to_vmem [thread:$0]  %s1, 192, %s26, [#allocation4], 64, 64, 4
    $region9: #{forward.1} parent=1 // pred_fallthru
      _
    // Predicated region
    $region10: #{forward.1} parent=1 // pred_check
      _
    $region11: #{forward.1} parent=1 // pred_check_branch
      %33 = sbr.rel (0) target = $region13
    $region12: #{forward.1} parent=1 // pred_region
      %s35 = ssub.s32 512, 512
      %36 = vsyncadd [#allocation7], %s35
      %s38 = sshll.u32 [#allocation6], 4
      %s39 = int_to_ptr.vmem [resolvable:$true] %s38
      %41 = dma.hbm_to_vmem [thread:$0]  %s2, 512, %s39, [#allocation7]
    $region13: #{forward.1} parent=1 // pred_fallthru
      _
    // Predicated region
    $region14: #{forward.1} parent=1 // pred_check
      _
    $region15: #{forward.1} parent=1 // pred_check_branch
      %43 = sbr.rel (0) target = $region17
    $region16: #{forward.1} parent=1 // pred_region
      _
    $region17: #{forward.1} parent=1 // pred_fallthru
      _
    // Predicated region
    $region18: #{forward.1} parent=1 // pred_check
      _
    $region19: #{forward.1} parent=1 // pred_check_branch
      %45 = sbr.rel (0) target = $region21
    $region20: #{forward.1} parent=1 // pred_region
      %s47 = ssub.s32 2048, 2048
      %48 = vsyncadd [#allocation7], %s47
      %s49 = sshll.u32 [#allocation8], 4
      %s50 = int_to_ptr.vmem [resolvable:$true] %s49
      %55 = dma.hbm_to_vmem [thread:$0]  %s4, 2048, %s50, [#allocation7], 128, 128, 8
    $region21: #{forward.1} parent=1 // pred_fallthru
      _
    // Predicated region
    $region22: #{forward.1} parent=1 // pred_check
      _
    $region23: #{forward.1} parent=1 // pred_check_branch
      %57 = sbr.rel (0) target = $region25
    $region24: #{forward.1} parent=1 // pred_region
      _
    $region25: #{forward.1} parent=1 // pred_fallthru
      _
    // Predicated region
    $region26: #{forward.1} parent=1 // pred_check
      _
    $region27: #{forward.1} parent=1 // pred_check_branch
      %59 = sbr.rel (0) target = $region29
    $region28: #{forward.1} parent=1 // pred_region
      %s61 = ssub.s32 2048, 2048
      %62 = vsyncadd [#allocation10], %s61
      %s63 = sshll.u32 [#allocation9], 4
      %s64 = int_to_ptr.vmem [resolvable:$true] %s63
      %69 = dma.hbm_to_vmem [thread:$0]  %s6, 2048, %s64, [#allocation10], 128, 128, 8
    $region29: #{forward.1} parent=1 // pred_fallthru
      _
    // Predicated region
    $region30: #{forward.1} parent=1 // pred_check
      _
    $region31: #{forward.1} parent=1 // pred_check_branch
      %71 = sbr.rel (0) target = $region33
    $region32: #{forward.1} parent=1 // pred_region
      _
    $region33: #{forward.1} parent=1 // pred_fallthru
      _
    // Predicated region
    $region34: #{forward.1} parent=1 // pred_check
      _
    $region35: #{forward.1} parent=1 // pred_check_branch
      %73 = sbr.rel (0) target = $region37
    $region36: #{forward.1} parent=1 // pred_region
      %s75 = ssub.s32 512, 512
      %76 = vsyncadd [#allocation10], %s75
      %s77 = sshll.u32 [#allocation11], 4
      %s78 = int_to_ptr.vmem [resolvable:$true] %s77
      %83 = dma.hbm_to_vmem [thread:$0]  %s8, 512, %s78, [#allocation10], 64, 64, 4
    $region37: #{forward.1} parent=1 // pred_fallthru
      _
    // Predicated region
    $region38: #{forward.1} parent=1 // pred_check
      _
    $region39: #{forward.1} parent=1 // pred_check_branch
      %85 = sbr.rel (0) target = $region41
    $region40: #{forward.1} parent=1 // pred_region
      %86 = dma.done [#allocation4], 192
    $region41: #{forward.1} parent=1 // pred_fallthru
      _
    // Predicated region
    $region42: #{forward.1} parent=1 // pred_check
      _
    $region43: #{forward.1} parent=1 // pred_check_branch
      %88 = sbr.rel (0) target = $region45
    $region44: #{forward.1} parent=1 // pred_region
      %89 = dma.done [#allocation7], 512
    $region45: #{forward.1} parent=1 // pred_fallthru
      _
    // Predicated region
    $region46: #{forward.1} parent=1 // pred_check
      _
    $region47: #{forward.1} parent=1 // pred_check_branch
      %91 = sbr.rel (0) target = $region49
    $region48: #{forward.1} parent=1 // pred_region
      %92 = dma.done [#allocation7], 2048
    $region49: #{forward.1} parent=1 // pred_fallthru
      _
    // Predicated region
    $region50: #{forward.1} parent=1 // pred_check
      _
    $region51: #{forward.1} parent=1 // pred_check_branch
      %94 = sbr.rel (0) target = $region53
    $region52: #{forward.1} parent=1 // pred_region
      %95 = dma.done [#allocation10], 2048
    $region53: #{forward.1} parent=1 // pred_fallthru
      _
    // Predicated region
    $region54: #{forward.1} parent=1 // pred_check
      _
    $region55: #{forward.1} parent=1 // pred_check_branch
      %97 = sbr.rel (0) target = $region57
    $region56: #{forward.1} parent=1 // pred_region
      %98 = dma.done [#allocation10], 512
    $region57: #{forward.1} parent=1 // pred_fallthru
      _
    %v100 = vld [vmem:[%s0] sm:$0xff]
    %v101 = vld [vmem:[%s0 + $0x8] sm:$0xff]
    %v102 = vld [vmem:[%s0 + $0x10] sm:$0xff]
    %v103 = vld [vmem:[%s0 + $0x18] sm:$0xff]
    %v104 = vld [vmem:[%s0 + $0x20] sm:$0xff]
    %v105 = vld [vmem:[%s0 + $0x28] sm:$0xff]
    %v106 = vld [vmem:[%s0 + $0x30] sm:$0xff]
    %v107 = vld [vmem:[%s0 + $0x38] sm:$0xff]
    %v108 = vpack.c.bf16 %v100, %v100
    %v109 = vpack.c.bf16 %v101, %v101
    %v110 = vpack.c.bf16 %v102, %v102
    %v111 = vpack.c.bf16 %v103, %v103
    %v112 = vpack.c.bf16 %v104, %v104
    %v113 = vpack.c.bf16 %v105, %v105
    %v114 = vpack.c.bf16 %v106, %v106
    %v115 = vpack.c.bf16 %v107, %v107
    %v116 = vld [vmem:[#allocation3] sm:$0xf]
    %s117 = scalar_lea.vmem %s0, 8
    %v118 = vld [vmem:[%s117] sm:$0xff]
    %v119 = vld [vmem:[%s117 + $0x8] sm:$0xff]
    %v120 = vld [vmem:[%s117 + $0x10] sm:$0xff]
    %v121 = vld [vmem:[%s117 + $0x18] sm:$0xff]
    %v122 = vld [vmem:[%s117 + $0x20] sm:$0xff]
    %v123 = vld [vmem:[%s117 + $0x28] sm:$0xff]
    %v124 = vld [vmem:[%s117 + $0x30] sm:$0xff]
    %v125 = vld [vmem:[%s117 + $0x38] sm:$0xff]
    %v126 = vpack.c.bf16 %v118, %v118
    %v127 = vpack.c.bf16 %v119, %v119
    %v128 = vpack.c.bf16 %v120, %v120
    %v129 = vpack.c.bf16 %v121, %v121
    %v130 = vpack.c.bf16 %v122, %v122
    %v131 = vpack.c.bf16 %v123, %v123
    %v132 = vpack.c.bf16 %v124, %v124
    %v133 = vpack.c.bf16 %v125, %v125
    %s134 = scalar_lea.vmem [#allocation3], 4
    %v135 = vld [vmem:[%s134] sm:$0xf]
    %v144 = vunpack.c.l.b16 %v126
    %v145 = vunpack.c.l.b16 %v127
    %v146 = vunpack.c.l.b16 %v128
    %v147 = vunpack.c.l.b16 %v129
    %v148 = vunpack.c.l.b16 %v130
    %v149 = vunpack.c.l.b16 %v131
    %v150 = vunpack.c.l.b16 %v132
    %v151 = vunpack.c.l.b16 %v133
    %v152 = vpack.c.b16 %v145, %v144
    %v153 = vpack.c.b16 %v147, %v146
    %v154 = vpack.c.b16 %v149, %v148
    %v155 = vpack.c.b16 %v151, %v150
    %vm156 = vcmask 64512
    %v158 = vsel %vm156, %v152, 0
    %v161 = vsel %vm156, %v153, 0
    %v164 = vsel %vm156, %v154, 0
    %v167 = vsel %vm156, %v155, 0
    %vm169 = vcmask 1043456
    %v171 = vsel %vm169, %v135, 0
    %173 = vmatprep.subr.bf16.mxu0 0
    %174 = vmatpush1.bf16.msra.mxu0 %v171
    %175 = vmatprep.subr.bf16.mxu0 0
    %176 = vmatpush1.bf16.msra.mxu0 0
    %177 = vmatprep.subr.bf16.mxu0 0
    %178 = vmatpush1.bf16.msra.mxu0 0
    %179 = vmatprep.subr.bf16.mxu0 0
    %180 = vmatpush1.bf16.msra.mxu0 0
    %181 = vmatprep.subr.bf16.mxu0 0
    %182 = vmatpush1.bf16.msra.mxu0 0
    %183 = vmatprep.subr.bf16.mxu0 0
    %184 = vmatpush1.bf16.msra.mxu0 0
    %185 = vmatprep.subr.bf16.mxu0 0
    %186 = vmatpush1.bf16.msra.mxu0 0
    %187 = vmatprep.subr.bf16.mxu0 0
    %188 = vmatpush1.bf16.msra.mxu0 0
    %189 = vmatprep.subr.bf16.mxu0 0
    %190 = vmatpush1.bf16.msra.mxu0 0
    %191 = vmatprep.subr.bf16.mxu0 0
    %192 = vmatpush1.bf16.msra.mxu0 0
    %193 = vmatprep.subr.bf16.mxu0 0
    %194 = vmatpush1.bf16.msra.mxu0 0
    %195 = vmatprep.subr.bf16.mxu0 0
    %196 = vmatpush1.bf16.msra.mxu0 0
    %197 = vmatprep.subr.bf16.mxu0 0
    %198 = vmatpush1.bf16.msra.mxu0 0
    %199 = vmatprep.subr.bf16.mxu0 0
    %200 = vmatpush1.bf16.msra.mxu0 0
    %201 = vmatprep.subr.bf16.mxu0 0
    %202 = vmatpush1.bf16.msra.mxu0 0
    %203 = vmatprep.subr.bf16.mxu0 0
    %204 = vmatpush1.bf16.msra.mxu0 0
    %205 = vmatprep.mubr.bf16.mxu0 0
    %206 = vmatmul.mubr.bf16.gmra.mrb[0].mxu0 %v158
    %v207 = vpop.f32.mrb[0].mxu0
    %v208 = vadd.f32 0.0, %v207
    %v209 = vpop.f32.mrb[0].mxu0
    %v210 = vpop.f32.mrb[0].mxu0
    %v211 = vadd.f32 0.0, %v210
    %v212 = vpop.f32.mrb[0].mxu0
    %213 = vmatprep.mubr.bf16.mxu0 0
    %214 = vmatmul.mubr.bf16.gmra.mrb[0].mxu0 %v161
    %v215 = vpop.f32.mrb[0].mxu0
    %v216 = vadd.f32 0.0, %v215
    %v217 = vpop.f32.mrb[0].mxu0
    %v218 = vpop.f32.mrb[0].mxu0
    %v219 = vadd.f32 0.0, %v218
    %v220 = vpop.f32.mrb[0].mxu0
    %221 = vmatprep.mubr.bf16.mxu0 0
    %222 = vmatmul.mubr.bf16.gmra.mrb[0].mxu0 %v164
    %v223 = vpop.f32.mrb[0].mxu0
    %v224 = vadd.f32 0.0, %v223
    %v225 = vpop.f32.mrb[0].mxu0
    %v226 = vpop.f32.mrb[0].mxu0
    %v227 = vadd.f32 0.0, %v226
    %v228 = vpop.f32.mrb[0].mxu0
    %229 = vmatprep.mubr.bf16.mxu0 0
    %230 = vmatmul.mubr.bf16.gmra.mrb[0].mxu0 %v167
    %v231 = vpop.f32.mrb[0].mxu0
    %v232 = vadd.f32 0.0, %v231
    %v233 = vpop.f32.mrb[0].mxu0
    %v234 = vpop.f32.mrb[0].mxu0
    %v235 = vadd.f32 0.0, %v234
    %v236 = vpop.f32.mrb[0].mxu0
    %237 = vdwg.mxu0
    %v246 = vunpack.c.l.b16 %v108
    %v247 = vunpack.c.l.b16 %v109
    %v248 = vunpack.c.l.b16 %v110
    %v249 = vunpack.c.l.b16 %v111
    %v250 = vunpack.c.l.b16 %v112
    %v251 = vunpack.c.l.b16 %v113
    %v252 = vunpack.c.l.b16 %v114
    %v253 = vunpack.c.l.b16 %v115
    %v254 = vpack.c.b16 %v247, %v246
    %v255 = vpack.c.b16 %v249, %v248
    %v256 = vpack.c.b16 %v251, %v250
    %v257 = vpack.c.b16 %v253, %v252
    %v259 = vsel %vm156, %v254, 0
    %v262 = vsel %vm156, %v255, 0
    %v265 = vsel %vm156, %v256, 0
    %v268 = vsel %vm156, %v257, 0
    %v271 = vsel %vm169, %v116, 0
    %273 = vmatprep.subr.bf16.mxu0 0
    %274 = vmatpush1.bf16.msra.mxu0 %v271
    %275 = vmatprep.subr.bf16.mxu0 0
    %276 = vmatpush1.bf16.msra.mxu0 0
    %277 = vmatprep.subr.bf16.mxu0 0
    %278 = vmatpush1.bf16.msra.mxu0 0
    %279 = vmatprep.subr.bf16.mxu0 0
    %280 = vmatpush1.bf16.msra.mxu0 0
    %281 = vmatprep.subr.bf16.mxu0 0
    %282 = vmatpush1.bf16.msra.mxu0 0
    %283 = vmatprep.subr.bf16.mxu0 0
    %284 = vmatpush1.bf16.msra.mxu0 0
    %285 = vmatprep.subr.bf16.mxu0 0
    %286 = vmatpush1.bf16.msra.mxu0 0
    %287 = vmatprep.subr.bf16.mxu0 0
    %288 = vmatpush1.bf16.msra.mxu0 0
    %289 = vmatprep.subr.bf16.mxu0 0
    %290 = vmatpush1.bf16.msra.mxu0 0
    %291 = vmatprep.subr.bf16.mxu0 0
    %292 = vmatpush1.bf16.msra.mxu0 0
    %293 = vmatprep.subr.bf16.mxu0 0
    %294 = vmatpush1.bf16.msra.mxu0 0
    %295 = vmatprep.subr.bf16.mxu0 0
    %296 = vmatpush1.bf16.msra.mxu0 0
    %297 = vmatprep.subr.bf16.mxu0 0
    %298 = vmatpush1.bf16.msra.mxu0 0
    %299 = vmatprep.subr.bf16.mxu0 0
    %300 = vmatpush1.bf16.msra.mxu0 0
    %301 = vmatprep.subr.bf16.mxu0 0
    %302 = vmatpush1.bf16.msra.mxu0 0
    %303 = vmatprep.subr.bf16.mxu0 0
    %304 = vmatpush1.bf16.msra.mxu0 0
    %305 = vmatprep.mubr.bf16.mxu0 0
    %306 = vmatmul.mubr.bf16.gmra.mrb[0].mxu0 %v259
    %v307 = vpop.f32.mrb[0].mxu0
    %v308 = vadd.f32 %v208, %v307
    %v309 = vpop.f32.mrb[0].mxu0
    %v310 = vpop.f32.mrb[0].mxu0
    %v311 = vadd.f32 %v211, %v310
    %v312 = vpop.f32.mrb[0].mxu0
    %313 = vmatprep.mubr.bf16.mxu0 0
    %314 = vmatmul.mubr.bf16.gmra.mrb[0].mxu0 %v262
    %v315 = vpop.f32.mrb[0].mxu0
    %v316 = vadd.f32 %v216, %v315
    %v317 = vpop.f32.mrb[0].mxu0
    %v318 = vpop.f32.mrb[0].mxu0
    %v319 = vadd.f32 %v219, %v318
    %v320 = vpop.f32.mrb[0].mxu0
    %321 = vmatprep.mubr.bf16.mxu0 0
    %322 = vmatmul.mubr.bf16.gmra.mrb[0].mxu0 %v265
    %v323 = vpop.f32.mrb[0].mxu0
    %v324 = vadd.f32 %v224, %v323
    %v325 = vpop.f32.mrb[0].mxu0
    %v326 = vpop.f32.mrb[0].mxu0
    %v327 = vadd.f32 %v227, %v326
    %v328 = vpop.f32.mrb[0].mxu0
    %329 = vmatprep.mubr.bf16.mxu0 0
    %330 = vmatmul.mubr.bf16.gmra.mrb[0].mxu0 %v268
    %v331 = vpop.f32.mrb[0].mxu0
    %v332 = vadd.f32 %v232, %v331
    %v333 = vpop.f32.mrb[0].mxu0
    %v334 = vpop.f32.mrb[0].mxu0
    %v335 = vadd.f32 %v235, %v334
    %v336 = vpop.f32.mrb[0].mxu0
    %337 = vdwg.mxu0
    %s338 = scalar_lea.vmem %s0, 16
    %v339 = vld [vmem:[%s338] sm:$0xff]
    %v340 = vld [vmem:[%s338 + $0x8] sm:$0xff]
    %v341 = vld [vmem:[%s338 + $0x10] sm:$0xff]
    %v342 = vld [vmem:[%s338 + $0x18] sm:$0xff]
    %v343 = vld [vmem:[%s338 + $0x20] sm:$0xff]
    %v344 = vld [vmem:[%s338 + $0x28] sm:$0xff]
    %v345 = vld [vmem:[%s338 + $0x30] sm:$0xff]
    %v346 = vld [vmem:[%s338 + $0x38] sm:$0xff]
    %v347 = vpack.c.bf16 %v339, %v339
    %v348 = vpack.c.bf16 %v340, %v340
    %v349 = vpack.c.bf16 %v341, %v341
    %v350 = vpack.c.bf16 %v342, %v342
    %v351 = vpack.c.bf16 %v343, %v343
    %v352 = vpack.c.bf16 %v344, %v344
    %v353 = vpack.c.bf16 %v345, %v345
    %v354 = vpack.c.bf16 %v346, %v346
    %s355 = scalar_lea.vmem [#allocation3], 8
    %v356 = vld [vmem:[%s355] sm:$0xf]
    %v365 = vunpack.c.l.b16 %v347
    %v366 = vunpack.c.l.b16 %v348
    %v367 = vunpack.c.l.b16 %v349
    %v368 = vunpack.c.l.b16 %v350
    %v369 = vunpack.c.l.b16 %v351
    %v370 = vunpack.c.l.b16 %v352
    %v371 = vunpack.c.l.b16 %v353
    %v372 = vunpack.c.l.b16 %v354
    %v373 = vpack.c.b16 %v366, %v365
    %v374 = vpack.c.b16 %v368, %v367
    %v375 = vpack.c.b16 %v370, %v369
    %v376 = vpack.c.b16 %v372, %v371
    %v378 = vsel %vm156, %v373, 0
    %v381 = vsel %vm156, %v374, 0
    %v384 = vsel %vm156, %v375, 0
    %v387 = vsel %vm156, %v376, 0
    %v390 = vsel %vm169, %v356, 0
    %392 = vmatprep.subr.bf16.mxu0 0
    %393 = vmatpush1.bf16.msra.mxu0 %v390
    %394 = vmatprep.subr.bf16.mxu0 0
    %395 = vmatpush1.bf16.msra.mxu0 0
    %396 = vmatprep.subr.bf16.mxu0 0
    %397 = vmatpush1.bf16.msra.mxu0 0
    %398 = vmatprep.subr.bf16.mxu0 0
    %399 = vmatpush1.bf16.msra.mxu0 0
    %400 = vmatprep.subr.bf16.mxu0 0
    %401 = vmatpush1.bf16.msra.mxu0 0
    %402 = vmatprep.subr.bf16.mxu0 0
    %403 = vmatpush1.bf16.msra.mxu0 0
    %404 = vmatprep.subr.bf16.mxu0 0
    %405 = vmatpush1.bf16.msra.mxu0 0
    %406 = vmatprep.subr.bf16.mxu0 0
    %407 = vmatpush1.bf16.msra.mxu0 0
    %408 = vmatprep.subr.bf16.mxu0 0
    %409 = vmatpush1.bf16.msra.mxu0 0
    %410 = vmatprep.subr.bf16.mxu0 0
    %411 = vmatpush1.bf16.msra.mxu0 0
    %412 = vmatprep.subr.bf16.mxu0 0
    %413 = vmatpush1.bf16.msra.mxu0 0
    %414 = vmatprep.subr.bf16.mxu0 0
    %415 = vmatpush1.bf16.msra.mxu0 0
    %416 = vmatprep.subr.bf16.mxu0 0
    %417 = vmatpush1.bf16.msra.mxu0 0
    %418 = vmatprep.subr.bf16.mxu0 0
    %419 = vmatpush1.bf16.msra.mxu0 0
    %420 = vmatprep.subr.bf16.mxu0 0
    %421 = vmatpush1.bf16.msra.mxu0 0
    %422 = vmatprep.subr.bf16.mxu0 0
    %423 = vmatpush1.bf16.msra.mxu0 0
    %424 = vmatprep.mubr.bf16.mxu0 0
    %425 = vmatmul.mubr.bf16.gmra.mrb[0].mxu0 %v378
    %v426 = vpop.f32.mrb[0].mxu0
    %v427 = vadd.f32 0.0, %v426
    %v428 = vpop.f32.mrb[0].mxu0
    %v429 = vpop.f32.mrb[0].mxu0
    %v430 = vadd.f32 0.0, %v429
    %v431 = vpop.f32.mrb[0].mxu0
    %432 = vmatprep.mubr.bf16.mxu0 0
    %433 = vmatmul.mubr.bf16.gmra.mrb[0].mxu0 %v381
    %v434 = vpop.f32.mrb[0].mxu0
    %v435 = vadd.f32 0.0, %v434
    %v436 = vpop.f32.mrb[0].mxu0
    %v437 = vpop.f32.mrb[0].mxu0
    %v438 = vadd.f32 0.0, %v437
    %v439 = vpop.f32.mrb[0].mxu0
    %440 = vmatprep.mubr.bf16.mxu0 0
    %441 = vmatmul.mubr.bf16.gmra.mrb[0].mxu0 %v384
    %v442 = vpop.f32.mrb[0].mxu0
    %v443 = vadd.f32 0.0, %v442
    %v444 = vpop.f32.mrb[0].mxu0
    %v445 = vpop.f32.mrb[0].mxu0
    %v446 = vadd.f32 0.0, %v445
    %v447 = vpop.f32.mrb[0].mxu0
    %448 = vmatprep.mubr.bf16.mxu0 0
    %449 = vmatmul.mubr.bf16.gmra.mrb[0].mxu0 %v387
    %v450 = vpop.f32.mrb[0].mxu0
    %v451 = vadd.f32 0.0, %v450
    %v452 = vpop.f32.mrb[0].mxu0
    %v453 = vpop.f32.mrb[0].mxu0
    %v454 = vadd.f32 0.0, %v453
    %v455 = vpop.f32.mrb[0].mxu0
    %456 = vdwg.mxu0
    %v457 = vadd.f32 %v308, %v427
    %v458 = vadd.f32 %v311, %v430
    %v459 = vadd.f32 %v316, %v435
    %v460 = vadd.f32 %v319, %v438
    %v461 = vadd.f32 %v324, %v443
    %v462 = vadd.f32 %v327, %v446
    %v463 = vadd.f32 %v332, %v451
    %v464 = vadd.f32 %v335, %v454
    %v465 = vld [vmem:[#allocation6 + $0x2] ss:$0 sm:$0xff]
    %v466 = vadd.f32 %v457, %v465
    %v467 = vadd.f32 %v458, %v465
    %v468 = vadd.f32 %v459, %v465
    %v469 = vadd.f32 %v460, %v465
    %v470 = vadd.f32 %v461, %v465
    %v471 = vadd.f32 %v462, %v465
    %v472 = vadd.f32 %v463, %v465
    %v473 = vadd.f32 %v464, %v465
    %v474 = vmax.f32 %v466, 0.0
    %v475 = vmax.f32 %v467, 0.0
    %v476 = vmax.f32 %v468, 0.0
    %v477 = vmax.f32 %v469, 0.0
    %v478 = vmax.f32 %v470, 0.0
    %v479 = vmax.f32 %v471, 0.0
    %v480 = vmax.f32 %v472, 0.0
    %v481 = vmax.f32 %v473, 0.0
    %v482 = vld [vmem:[#allocation6] ss:$8 sm:$0xf]
    %v483 = vpack.c.bf16 %v474, %v474
    %v484 = vpack.c.bf16 %v475, %v475
    %v485 = vpack.c.bf16 %v476, %v476
    %v486 = vpack.c.bf16 %v477, %v477
    %v487 = vpack.c.bf16 %v478, %v478
    %v488 = vpack.c.bf16 %v479, %v479
    %v489 = vpack.c.bf16 %v480, %v480
    %v490 = vpack.c.bf16 %v481, %v481
    %v491 = vld [vmem:[%s3] sm:$0xff]
    %v492 = vld [vmem:[%s3 + $0x8] sm:$0xff]
    %v493 = vld [vmem:[%s3 + $0x10] sm:$0xff]
    %v494 = vld [vmem:[%s3 + $0x18] sm:$0xff]
    %v495 = vld [vmem:[%s3 + $0x20] sm:$0xff]
    %v496 = vld [vmem:[%s3 + $0x28] sm:$0xff]
    %v497 = vld [vmem:[%s3 + $0x30] sm:$0xff]
    %v498 = vld [vmem:[%s3 + $0x38] sm:$0xff]
    %v499 = vld [vmem:[%s3 + $0x40] sm:$0xff]
    %v500 = vld [vmem:[%s3 + $0x48] sm:$0xff]
    %v501 = vld [vmem:[%s3 + $0x50] sm:$0xff]
    %v502 = vld [vmem:[%s3 + $0x58] sm:$0xff]
    %v503 = vld [vmem:[%s3 + $0x60] sm:$0xff]
    %v504 = vld [vmem:[%s3 + $0x68] sm:$0xff]
    %v505 = vld [vmem:[%s3 + $0x70] sm:$0xff]
    %v506 = vld [vmem:[%s3 + $0x78] sm:$0xff]
    %v508 = vlaneseq
    %v509 = vshrl.u32 %v508, 7
    %v510 = vsub.s32 0, %v509
    %v511 = vrot.slane %v482, %v510
    %v512 = vlaneseq
    %v513 = vshrl.u32 %v512, 7
    %v514 = vsub.s32 1, %v513
    %v515 = vrot.slane %v482, %v514
    %v516 = vlaneseq
    %v517 = vshrl.u32 %v516, 7
    %v518 = vsub.s32 2, %v517
    %v519 = vrot.slane %v482, %v518
    %v520 = vlaneseq
    %v521 = vshrl.u32 %v520, 7
    %v522 = vsub.s32 3, %v521
    %v523 = vrot.slane %v482, %v522
    %v536 = vunpack.c.l.b16 %v483
    %v537 = vunpack.c.l.b16 %v484
    %v538 = vunpack.c.l.b16 %v485
    %v539 = vunpack.c.l.b16 %v486
    %v540 = vunpack.c.l.b16 %v487
    %v541 = vunpack.c.l.b16 %v488
    %v542 = vunpack.c.l.b16 %v489
    %v543 = vunpack.c.l.b16 %v490
    %v544 = vpack.c.b16 %v537, %v536
    %v545 = vpack.c.b16 %v539, %v538
    %v546 = vpack.c.b16 %v541, %v540
    %v547 = vpack.c.b16 %v543, %v542
    %v564 = vunpack.c.l.b16 %v491
    %v565 = vunpack.c.h.b16 %v491
    %v566 = vunpack.c.l.b16 %v492
    %v567 = vunpack.c.h.b16 %v492
    %v568 = vunpack.c.l.b16 %v493
    %v569 = vunpack.c.h.b16 %v493
    %v570 = vunpack.c.l.b16 %v494
    %v571 = vunpack.c.h.b16 %v494
    %v572 = vunpack.c.l.b16 %v495
    %v573 = vunpack.c.h.b16 %v495
    %v574 = vunpack.c.l.b16 %v496
    %v575 = vunpack.c.h.b16 %v496
    %v576 = vunpack.c.l.b16 %v497
    %v577 = vunpack.c.h.b16 %v497
    %v578 = vunpack.c.l.b16 %v498
    %v579 = vunpack.c.h.b16 %v498
    %v580 = vunpack.c.l.b16 %v499
    %v581 = vunpack.c.h.b16 %v499
    %v582 = vunpack.c.l.b16 %v500
    %v583 = vunpack.c.h.b16 %v500
    %v584 = vunpack.c.l.b16 %v501
    %v585 = vunpack.c.h.b16 %v501
    %v586 = vunpack.c.l.b16 %v502
    %v587 = vunpack.c.h.b16 %v502
    %v588 = vunpack.c.l.b16 %v503
    %v589 = vunpack.c.h.b16 %v503
    %v590 = vunpack.c.l.b16 %v504
    %v591 = vunpack.c.h.b16 %v504
    %v592 = vunpack.c.l.b16 %v505
    %v593 = vunpack.c.h.b16 %v505
    %v594 = vunpack.c.l.b16 %v506
    %v595 = vunpack.c.h.b16 %v506
    %v596 = vpack.c.b16 %v568, %v564
    %v597 = vpack.c.b16 %v569, %v565
    %v598 = vpack.c.b16 %v570, %v566
    %v599 = vpack.c.b16 %v571, %v567
    %v600 = vpack.c.b16 %v576, %v572
    %v601 = vpack.c.b16 %v577, %v573
    %v602 = vpack.c.b16 %v578, %v574
    %v603 = vpack.c.b16 %v579, %v575
    %v604 = vpack.c.b16 %v584, %v580
    %v605 = vpack.c.b16 %v585, %v581
    %v606 = vpack.c.b16 %v586, %v582
    %v607 = vpack.c.b16 %v587, %v583
    %v608 = vpack.c.b16 %v592, %v588
    %v609 = vpack.c.b16 %v593, %v589
    %v610 = vpack.c.b16 %v594, %v590
    %v611 = vpack.c.b16 %v595, %v591
    %vm628 = vcmask 523264
    %v630 = vsel %vm628, %v544, 0
    %v633 = vsel %vm628, %v545, 0
    %v636 = vsel %vm628, %v546, 0
    %v639 = vsel %vm628, %v547, 0
    %641 = vmatprep.subr.bf16.mxu0 %v597
    %642 = vmatpush1.bf16.msra.mxu0 %v596
    %643 = vmatprep.subr.bf16.mxu0 %v601
    %644 = vmatpush1.bf16.msra.mxu0 %v600
    %645 = vmatprep.subr.bf16.mxu0 %v605
    %646 = vmatpush1.bf16.msra.mxu0 %v604
    %647 = vmatprep.subr.bf16.mxu0 %v609
    %648 = vmatpush1.bf16.msra.mxu0 %v608
    %649 = vmatprep.subr.bf16.mxu0 0
    %650 = vmatpush1.bf16.msra.mxu0 0
    %651 = vmatprep.subr.bf16.mxu0 0
    %652 = vmatpush1.bf16.msra.mxu0 0
    %653 = vmatprep.subr.bf16.mxu0 0
    %654 = vmatpush1.bf16.msra.mxu0 0
    %655 = vmatprep.subr.bf16.mxu0 0
    %656 = vmatpush1.bf16.msra.mxu0 0
    %657 = vmatprep.subr.bf16.mxu0 0
    %658 = vmatpush1.bf16.msra.mxu0 0
    %659 = vmatprep.subr.bf16.mxu0 0
    %660 = vmatpush1.bf16.msra.mxu0 0
    %661 = vmatprep.subr.bf16.mxu0 0
    %662 = vmatpush1.bf16.msra.mxu0 0
    %663 = vmatprep.subr.bf16.mxu0 0
    %664 = vmatpush1.bf16.msra.mxu0 0
    %665 = vmatprep.subr.bf16.mxu0 0
    %666 = vmatpush1.bf16.msra.mxu0 0
    %667 = vmatprep.subr.bf16.mxu0 0
    %668 = vmatpush1.bf16.msra.mxu0 0
    %669 = vmatprep.subr.bf16.mxu0 0
    %670 = vmatpush1.bf16.msra.mxu0 0
    %671 = vmatprep.subr.bf16.mxu0 0
    %672 = vmatpush1.bf16.msra.mxu0 0
    %673 = vmatprep.mubr.bf16.mxu0 0
    %674 = vmatmul.mubr.bf16.gmra.mrb[0].mxu0 %v630
    %v675 = vpop.f32.mrb[0].mxu0
    %v676 = vadd.f32 %v511, %v675
    %v677 = vpop.f32.mrb[0].mxu0
    %v678 = vadd.f32 %v515, %v677
    %v679 = vpop.f32.mrb[0].mxu0
    %v680 = vadd.f32 %v511, %v679
    %v681 = vpop.f32.mrb[0].mxu0
    %v682 = vadd.f32 %v515, %v681
    %683 = vmatprep.mubr.bf16.mxu0 0
    %684 = vmatmul.mubr.bf16.gmra.mrb[0].mxu0 %v633
    %v685 = vpop.f32.mrb[0].mxu0
    %v686 = vadd.f32 %v511, %v685
    %v687 = vpop.f32.mrb[0].mxu0
    %v688 = vadd.f32 %v515, %v687
    %v689 = vpop.f32.mrb[0].mxu0
    %v690 = vadd.f32 %v511, %v689
    %v691 = vpop.f32.mrb[0].mxu0
    %v692 = vadd.f32 %v515, %v691
    %693 = vmatprep.mubr.bf16.mxu0 0
    %694 = vmatmul.mubr.bf16.gmra.mrb[0].mxu0 %v636
    %v695 = vpop.f32.mrb[0].mxu0
    %v696 = vadd.f32 %v511, %v695
    %v697 = vpop.f32.mrb[0].mxu0
    %v698 = vadd.f32 %v515, %v697
    %v699 = vpop.f32.mrb[0].mxu0
    %v700 = vadd.f32 %v511, %v699
    %v701 = vpop.f32.mrb[0].mxu0
    %v702 = vadd.f32 %v515, %v701
    %703 = vmatprep.mubr.bf16.mxu0 0
    %704 = vmatmul.mubr.bf16.gmra.mrb[0].mxu0 %v639
    %v705 = vpop.f32.mrb[0].mxu0
    %v706 = vadd.f32 %v511, %v705
    %v707 = vpop.f32.mrb[0].mxu0
    %v708 = vadd.f32 %v515, %v707
    %v709 = vpop.f32.mrb[0].mxu0
    %v710 = vadd.f32 %v511, %v709
    %v711 = vpop.f32.mrb[0].mxu0
    %v712 = vadd.f32 %v515, %v711
    %713 = vdwg.mxu0
    %714 = vmatprep.subr.bf16.mxu0 %v599
    %715 = vmatpush1.bf16.msra.mxu0 %v598
    %716 = vmatprep.subr.bf16.mxu0 %v603
    %717 = vmatpush1.bf16.msra.mxu0 %v602
    %718 = vmatprep.subr.bf16.mxu0 %v607
    %719 = vmatpush1.bf16.msra.mxu0 %v606
    %720 = vmatprep.subr.bf16.mxu0 %v611
    %721 = vmatpush1.bf16.msra.mxu0 %v610
    %722 = vmatprep.subr.bf16.mxu0 0
    %723 = vmatpush1.bf16.msra.mxu0 0
    %724 = vmatprep.subr.bf16.mxu0 0
    %725 = vmatpush1.bf16.msra.mxu0 0
    %726 = vmatprep.subr.bf16.mxu0 0
    %727 = vmatpush1.bf16.msra.mxu0 0
    %728 = vmatprep.subr.bf16.mxu0 0
    %729 = vmatpush1.bf16.msra.mxu0 0
    %730 = vmatprep.subr.bf16.mxu0 0
    %731 = vmatpush1.bf16.msra.mxu0 0
    %732 = vmatprep.subr.bf16.mxu0 0
    %733 = vmatpush1.bf16.msra.mxu0 0
    %734 = vmatprep.subr.bf16.mxu0 0
    %735 = vmatpush1.bf16.msra.mxu0 0
    %736 = vmatprep.subr.bf16.mxu0 0
    %737 = vmatpush1.bf16.msra.mxu0 0
    %738 = vmatprep.subr.bf16.mxu0 0
    %739 = vmatpush1.bf16.msra.mxu0 0
    %740 = vmatprep.subr.bf16.mxu0 0
    %741 = vmatpush1.bf16.msra.mxu0 0
    %742 = vmatprep.subr.bf16.mxu0 0
    %743 = vmatpush1.bf16.msra.mxu0 0
    %744 = vmatprep.subr.bf16.mxu0 0
    %745 = vmatpush1.bf16.msra.mxu0 0
    %746 = vmatprep.mubr.bf16.mxu0 0
    %747 = vmatmul.mubr.bf16.gmra.mrb[0].mxu0 %v630
    %v748 = vpop.f32.mrb[0].mxu0
    %v749 = vadd.f32 %v519, %v748
    %v750 = vpop.f32.mrb[0].mxu0
    %v751 = vadd.f32 %v523, %v750
    %v752 = vpop.f32.mrb[0].mxu0
    %v753 = vadd.f32 %v519, %v752
    %v754 = vpop.f32.mrb[0].mxu0
    %v755 = vadd.f32 %v523, %v754
    %756 = vmatprep.mubr.bf16.mxu0 0
    %757 = vmatmul.mubr.bf16.gmra.mrb[0].mxu0 %v633
    %v758 = vpop.f32.mrb[0].mxu0
    %v759 = vadd.f32 %v519, %v758
    %v760 = vpop.f32.mrb[0].mxu0
    %v761 = vadd.f32 %v523, %v760
    %v762 = vpop.f32.mrb[0].mxu0
    %v763 = vadd.f32 %v519, %v762
    %v764 = vpop.f32.mrb[0].mxu0
    %v765 = vadd.f32 %v523, %v764
    %766 = vmatprep.mubr.bf16.mxu0 0
    %767 = vmatmul.mubr.bf16.gmra.mrb[0].mxu0 %v636
    %v768 = vpop.f32.mrb[0].mxu0
    %v769 = vadd.f32 %v519, %v768
    %v770 = vpop.f32.mrb[0].mxu0
    %v771 = vadd.f32 %v523, %v770
    %v772 = vpop.f32.mrb[0].mxu0
    %v773 = vadd.f32 %v519, %v772
    %v774 = vpop.f32.mrb[0].mxu0
    %v775 = vadd.f32 %v523, %v774
    %776 = vmatprep.mubr.bf16.mxu0 0
    %777 = vmatmul.mubr.bf16.gmra.mrb[0].mxu0 %v639
    %v778 = vpop.f32.mrb[0].mxu0
    %v779 = vadd.f32 %v519, %v778
    %v780 = vpop.f32.mrb[0].mxu0
    %v781 = vadd.f32 %v523, %v780
    %v782 = vpop.f32.mrb[0].mxu0
    %v783 = vadd.f32 %v519, %v782
    %v784 = vpop.f32.mrb[0].mxu0
    %v785 = vadd.f32 %v523, %v784
    %786 = vdwg.mxu0
    %v787 = vld [vmem:[#allocation8] sm:$0xff]
    %v788 = vld [vmem:[#allocation8 + $0x8] sm:$0xff]
    %v789 = vld [vmem:[#allocation8 + $0x10] sm:$0xff]
    %v790 = vld [vmem:[#allocation8 + $0x18] sm:$0xff]
    %v791 = vld [vmem:[#allocation8 + $0x20] sm:$0xff]
    %v792 = vld [vmem:[#allocation8 + $0x28] sm:$0xff]
    %v793 = vld [vmem:[#allocation8 + $0x30] sm:$0xff]
    %v794 = vld [vmem:[#allocation8 + $0x38] sm:$0xff]
    %s795 = scalar_lea.vmem [#allocation8], 64
    %v796 = vld [vmem:[%s795] sm:$0xff]
    %v797 = vld [vmem:[%s795 + $0x8] sm:$0xff]
    %v798 = vld [vmem:[%s795 + $0x10] sm:$0xff]
    %v799 = vld [vmem:[%s795 + $0x18] sm:$0xff]
    %v800 = vld [vmem:[%s795 + $0x20] sm:$0xff]
    %v801 = vld [vmem:[%s795 + $0x28] sm:$0xff]
    %v802 = vld [vmem:[%s795 + $0x30] sm:$0xff]
    %v803 = vld [vmem:[%s795 + $0x38] sm:$0xff]
    %v812 = vunpack.c.l.b16 %v787
    %v813 = vunpack.c.h.b16 %v787
    %v814 = vunpack.c.l.b16 %v788
    %v815 = vunpack.c.h.b16 %v788
    %v816 = vunpack.c.l.b16 %v789
    %v817 = vunpack.c.h.b16 %v789
    %v818 = vunpack.c.l.b16 %v790
    %v819 = vunpack.c.h.b16 %v790
    %v820 = vunpack.c.l.b16 %v791
    %v821 = vunpack.c.h.b16 %v791
    %v822 = vunpack.c.l.b16 %v792
    %v823 = vunpack.c.h.b16 %v792
    %v824 = vunpack.c.l.b16 %v793
    %v825 = vunpack.c.h.b16 %v793
    %v826 = vunpack.c.l.b16 %v794
    %v827 = vunpack.c.h.b16 %v794
    %v828 = vpack.c.b16 %v814, %v812
    %v829 = vpack.c.b16 %v815, %v813
    %v830 = vpack.c.b16 %v818, %v816
    %v831 = vpack.c.b16 %v819, %v817
    %v832 = vpack.c.b16 %v822, %v820
    %v833 = vpack.c.b16 %v823, %v821
    %v834 = vpack.c.b16 %v826, %v824
    %v835 = vpack.c.b16 %v827, %v825
    %v845 = vsel %vm628, 0, 0
    %847 = vmatprep.subr.bf16.mxu0 %v829
    %848 = vmatpush1.bf16.msra.mxu0 %v828
    %849 = vmatprep.subr.bf16.mxu0 %v831
    %850 = vmatpush1.bf16.msra.mxu0 %v830
    %851 = vmatprep.subr.bf16.mxu0 %v833
    %852 = vmatpush1.bf16.msra.mxu0 %v832
    %853 = vmatprep.subr.bf16.mxu0 %v835
    %854 = vmatpush1.bf16.msra.mxu0 %v834
    %855 = vmatprep.subr.bf16.mxu0 0
    %856 = vmatpush1.bf16.msra.mxu0 0
    %857 = vmatprep.subr.bf16.mxu0 0
    %858 = vmatpush1.bf16.msra.mxu0 0
    %859 = vmatprep.subr.bf16.mxu0 0
    %860 = vmatpush1.bf16.msra.mxu0 0
    %861 = vmatprep.subr.bf16.mxu0 0
    %862 = vmatpush1.bf16.msra.mxu0 0
    %863 = vmatprep.subr.bf16.mxu0 0
    %864 = vmatpush1.bf16.msra.mxu0 0
    %865 = vmatprep.subr.bf16.mxu0 0
    %866 = vmatpush1.bf16.msra.mxu0 0
    %867 = vmatprep.subr.bf16.mxu0 0
    %868 = vmatpush1.bf16.msra.mxu0 0
    %869 = vmatprep.subr.bf16.mxu0 0
    %870 = vmatpush1.bf16.msra.mxu0 0
    %871 = vmatprep.subr.bf16.mxu0 0
    %872 = vmatpush1.bf16.msra.mxu0 0
    %873 = vmatprep.subr.bf16.mxu0 0
    %874 = vmatpush1.bf16.msra.mxu0 0
    %875 = vmatprep.subr.bf16.mxu0 0
    %876 = vmatpush1.bf16.msra.mxu0 0
    %877 = vmatprep.subr.bf16.mxu0 0
    %878 = vmatpush1.bf16.msra.mxu0 0
    %879 = vmatprep.mubr.bf16.mxu0 0
    %880 = vmatmul.mubr.bf16.gmra.mrb[0].mxu0 %v845
    %v881 = vpop.f32.mrb[0].mxu0
    %v882 = vadd.f32 0.0, %v881
    %v883 = vpop.f32.mrb[0].mxu0
    %v884 = vadd.f32 0.0, %v883
    %v885 = vpop.f32.mrb[0].mxu0
    %v886 = vpop.f32.mrb[0].mxu0
    %887 = vdwg.mxu0
    %v888 = vadd.f32 %v676, %v882
    %v889 = vadd.f32 %v678, %v884
    %v898 = vunpack.c.l.b16 %v796
    %v899 = vunpack.c.h.b16 %v796
    %v900 = vunpack.c.l.b16 %v797
    %v901 = vunpack.c.h.b16 %v797
    %v902 = vunpack.c.l.b16 %v798
    %v903 = vunpack.c.h.b16 %v798
    %v904 = vunpack.c.l.b16 %v799
    %v905 = vunpack.c.h.b16 %v799
    %v906 = vunpack.c.l.b16 %v800
    %v907 = vunpack.c.h.b16 %v800
    %v908 = vunpack.c.l.b16 %v801
    %v909 = vunpack.c.h.b16 %v801
    %v910 = vunpack.c.l.b16 %v802
    %v911 = vunpack.c.h.b16 %v802
    %v912 = vunpack.c.l.b16 %v803
    %v913 = vunpack.c.h.b16 %v803
    %v914 = vpack.c.b16 %v900, %v898
    %v915 = vpack.c.b16 %v901, %v899
    %v916 = vpack.c.b16 %v904, %v902
    %v917 = vpack.c.b16 %v905, %v903
    %v918 = vpack.c.b16 %v908, %v906
    %v919 = vpack.c.b16 %v909, %v907
    %v920 = vpack.c.b16 %v912, %v910
    %v921 = vpack.c.b16 %v913, %v911
    %930 = vmatprep.subr.bf16.mxu0 %v915
    %931 = vmatpush1.bf16.msra.mxu0 %v914
    %932 = vmatprep.subr.bf16.mxu0 %v917
    %933 = vmatpush1.bf16.msra.mxu0 %v916
    %934 = vmatprep.subr.bf16.mxu0 %v919
    %935 = vmatpush1.bf16.msra.mxu0 %v918
    %936 = vmatprep.subr.bf16.mxu0 %v921
    %937 = vmatpush1.bf16.msra.mxu0 %v920
    %938 = vmatprep.subr.bf16.mxu0 0
    %939 = vmatpush1.bf16.msra.mxu0 0
    %940 = vmatprep.subr.bf16.mxu0 0
    %941 = vmatpush1.bf16.msra.mxu0 0
    %942 = vmatprep.subr.bf16.mxu0 0
    %943 = vmatpush1.bf16.msra.mxu0 0
    %944 = vmatprep.subr.bf16.mxu0 0
    %945 = vmatpush1.bf16.msra.mxu0 0
    %946 = vmatprep.subr.bf16.mxu0 0
    %947 = vmatpush1.bf16.msra.mxu0 0
    %948 = vmatprep.subr.bf16.mxu0 0
    %949 = vmatpush1.bf16.msra.mxu0 0
    %950 = vmatprep.subr.bf16.mxu0 0
    %951 = vmatpush1.bf16.msra.mxu0 0
    %952 = vmatprep.subr.bf16.mxu0 0
    %953 = vmatpush1.bf16.msra.mxu0 0
    %954 = vmatprep.subr.bf16.mxu0 0
    %955 = vmatpush1.bf16.msra.mxu0 0
    %956 = vmatprep.subr.bf16.mxu0 0
    %957 = vmatpush1.bf16.msra.mxu0 0
    %958 = vmatprep.subr.bf16.mxu0 0
    %959 = vmatpush1.bf16.msra.mxu0 0
    %960 = vmatprep.subr.bf16.mxu0 0
    %961 = vmatpush1.bf16.msra.mxu0 0
    %962 = vmatprep.mubr.bf16.mxu0 0
    %963 = vmatmul.mubr.bf16.gmra.mrb[0].mxu0 %v845
    %v964 = vpop.f32.mrb[0].mxu0
    %v965 = vadd.f32 0.0, %v964
    %v966 = vpop.f32.mrb[0].mxu0
    %v967 = vadd.f32 0.0, %v966
    %v968 = vpop.f32.mrb[0].mxu0
    %v969 = vpop.f32.mrb[0].mxu0
    %970 = vdwg.mxu0
    %v971 = vadd.f32 %v783, %v965
    %v972 = vadd.f32 %v785, %v967
    %v973 = vxor.u32 %v888, 2147483648
    %v974 = vxor.u32 %v889, 2147483648
    %v975 = vmul.f32 %v973, 1.442695
    %v976 = vpow.pop %v975
    %v977 = vmul.f32 %v974, 1.442695
    %v978 = vpow.pop %v977
    %v979 = vadd.f32 %v976, 1.0
    %v980 = vadd.f32 %v978, 1.0
    %v981 = vrcp.pop %v979
    %v982 = vmul.f32 1.0, %v981
    %v983 = vrcp.pop %v980
    %v984 = vmul.f32 1.0, %v983
    %v985 = vxor.u32 %v971, 2147483648
    %v986 = vxor.u32 %v972, 2147483648
    %v987 = vmul.f32 %v985, 1.442695
    %v988 = vpow.pop %v987
    %v989 = vmul.f32 %v986, 1.442695
    %v990 = vpow.pop %v989
    %v991 = vadd.f32 %v988, 1.0
    %v992 = vadd.f32 %v990, 1.0
    %v993 = vrcp.pop %v991
    %v994 = vmul.f32 1.0, %v993
    %v995 = vrcp.pop %v992
    %v996 = vmul.f32 1.0, %v995
    %v997 = vtanh.pop %v889
    %v998 = vtanh.pop %v972
    %v999 = vmul.f32 %v982, 0.0
    %1001 = vrot.lane.b32.xlu0 %v997, 64
    %v1002 = vpop.permute.xlu0 %1001
    %v1004 = vmul.f32 %v982, %v1002
    %1006 = vrot.lane.b32.xlu0 %v1004, 64
    %v1007 = vpop.permute.xlu0 %1006
    %v1009 = vadd.f32 %v999, %v1007
    %v1010 = vmul.f32 %v994, 0.0
    %1012 = vrot.lane.b32.xlu0 %v998, 64
    %v1013 = vpop.permute.xlu0 %1012
    %v1015 = vmul.f32 %v994, %v1013
    %1017 = vrot.lane.b32.xlu0 %v1015, 64
    %v1018 = vpop.permute.xlu0 %1017
    %v1020 = vadd.f32 %v1010, %v1018
    %v1021 = vtanh.pop %v1009
    %1023 = vrot.lane.b32.xlu0 %v1021, 64
    %v1024 = vpop.permute.xlu0 %1023
    %v1026 = vmul.f32 %v984, %v1024
    %v1027 = vtanh.pop %v1020
    %1029 = vrot.lane.b32.xlu0 %v1027, 64
    %v1030 = vpop.permute.xlu0 %1029
    %v1032 = vmul.f32 %v996, %v1030
    %1033 = vst.msk [vmem:[#allocation2] sm:$0xff] %vm628, %v1026
    %1035 = vrot.lane.b32.xlu0 %v1032, 64
    %v1036 = vpop.permute.xlu0 %1035
    %s1038 = scalar_lea.vmem [#allocation2], 56
    %vm1039 = vcmask 1048064
    %1040 = vst.msk [vmem:[%s1038] sm:$0xff] %vm1039, %v1036
    %v1041 = vpack.c.bf16 %v1026, %v1026
    %v1043 = vsel %vm628, %v1041, 0
    %1045 = vmatprep.subr.bf16.mxu0 %v829
    %1046 = vmatpush1.bf16.msra.mxu0 %v828
    %1047 = vmatprep.subr.bf16.mxu0 %v831
    %1048 = vmatpush1.bf16.msra.mxu0 %v830
    %1049 = vmatprep.subr.bf16.mxu0 %v833
    %1050 = vmatpush1.bf16.msra.mxu0 %v832
    %1051 = vmatprep.subr.bf16.mxu0 %v835
    %1052 = vmatpush1.bf16.msra.mxu0 %v834
    %1053 = vmatprep.subr.bf16.mxu0 0
    %1054 = vmatpush1.bf16.msra.mxu0 0
    %1055 = vmatprep.subr.bf16.mxu0 0
    %1056 = vmatpush1.bf16.msra.mxu0 0
    %1057 = vmatprep.subr.bf16.mxu0 0
    %1058 = vmatpush1.bf16.msra.mxu0 0
    %1059 = vmatprep.subr.bf16.mxu0 0
    %1060 = vmatpush1.bf16.msra.mxu0 0
    %1061 = vmatprep.subr.bf16.mxu0 0
    %1062 = vmatpush1.bf16.msra.mxu0 0
    %1063 = vmatprep.subr.bf16.mxu0 0
    %1064 = vmatpush1.bf16.msra.mxu0 0
    %1065 = vmatprep.subr.bf16.mxu0 0
    %1066 = vmatpush1.bf16.msra.mxu0 0
    %1067 = vmatprep.subr.bf16.mxu0 0
    %1068 = vmatpush1.bf16.msra.mxu0 0
    %1069 = vmatprep.subr.bf16.mxu0 0
    %1070 = vmatpush1.bf16.msra.mxu0 0
    %1071 = vmatprep.subr.bf16.mxu0 0
    %1072 = vmatpush1.bf16.msra.mxu0 0
    %1073 = vmatprep.subr.bf16.mxu0 0
    %1074 = vmatpush1.bf16.msra.mxu0 0
    %1075 = vmatprep.subr.bf16.mxu0 0
    %1076 = vmatpush1.bf16.msra.mxu0 0
    %1077 = vmatprep.mubr.bf16.mxu0 0
    %1078 = vmatmul.mubr.bf16.gmra.mrb[0].mxu0 %v1043
    %v1079 = vpop.f32.mrb[0].mxu0
    %v1080 = vadd.f32 0.0, %v1079
    %v1081 = vpop.f32.mrb[0].mxu0
    %v1082 = vadd.f32 0.0, %v1081
    %v1083 = vpop.f32.mrb[0].mxu0
    %v1084 = vpop.f32.mrb[0].mxu0
    %1085 = vdwg.mxu0
    %v1086 = vadd.f32 %v680, %v1080
    %v1087 = vadd.f32 %v682, %v1082
    %v1088 = vpack.c.bf16 %v1032, %v1032
    %v1090 = vsel %vm628, %v1088, 0
    %1092 = vmatprep.subr.bf16.mxu0 %v915
    %1093 = vmatpush1.bf16.msra.mxu0 %v914
    %1094 = vmatprep.subr.bf16.mxu0 %v917
    %1095 = vmatpush1.bf16.msra.mxu0 %v916
    %1096 = vmatprep.subr.bf16.mxu0 %v919
    %1097 = vmatpush1.bf16.msra.mxu0 %v918
    %1098 = vmatprep.subr.bf16.mxu0 %v921
    %1099 = vmatpush1.bf16.msra.mxu0 %v920
    %1100 = vmatprep.subr.bf16.mxu0 0
    %1101 = vmatpush1.bf16.msra.mxu0 0
    %1102 = vmatprep.subr.bf16.mxu0 0
    %1103 = vmatpush1.bf16.msra.mxu0 0
    %1104 = vmatprep.subr.bf16.mxu0 0
    %1105 = vmatpush1.bf16.msra.mxu0 0
    %1106 = vmatprep.subr.bf16.mxu0 0
    %1107 = vmatpush1.bf16.msra.mxu0 0
    %1108 = vmatprep.subr.bf16.mxu0 0
    %1109 = vmatpush1.bf16.msra.mxu0 0
    %1110 = vmatprep.subr.bf16.mxu0 0
    %1111 = vmatpush1.bf16.msra.mxu0 0
    %1112 = vmatprep.subr.bf16.mxu0 0
    %1113 = vmatpush1.bf16.msra.mxu0 0
    %1114 = vmatprep.subr.bf16.mxu0 0
    %1115 = vmatpush1.bf16.msra.mxu0 0
    %1116 = vmatprep.subr.bf16.mxu0 0
    %1117 = vmatpush1.bf16.msra.mxu0 0
    %1118 = vmatprep.subr.bf16.mxu0 0
    %1119 = vmatpush1.bf16.msra.mxu0 0
    %1120 = vmatprep.subr.bf16.mxu0 0
    %1121 = vmatpush1.bf16.msra.mxu0 0
    %1122 = vmatprep.subr.bf16.mxu0 0
    %1123 = vmatpush1.bf16.msra.mxu0 0
    %1124 = vmatprep.mubr.bf16.mxu0 0
    %1125 = vmatmul.mubr.bf16.gmra.mrb[0].mxu0 %v1090
    %v1126 = vpop.f32.mrb[0].mxu0
    %v1127 = vadd.f32 0.0, %v1126
    %v1128 = vpop.f32.mrb[0].mxu0
    %v1129 = vadd.f32 0.0, %v1128
    %v1130 = vpop.f32.mrb[0].mxu0
    %v1131 = vpop.f32.mrb[0].mxu0
    %1132 = vdwg.mxu0
    %v1133 = vadd.f32 %v779, %v1127
    %v1134 = vadd.f32 %v781, %v1129
    %v1135 = vxor.u32 %v1086, 2147483648
    %v1136 = vxor.u32 %v1087, 2147483648
    %v1137 = vmul.f32 %v1135, 1.442695
    %v1138 = vpow.pop %v1137
    %v1139 = vmul.f32 %v1136, 1.442695
    %v1140 = vpow.pop %v1139
    %v1141 = vadd.f32 %v1138, 1.0
    %v1142 = vadd.f32 %v1140, 1.0
    %v1143 = vrcp.pop %v1141
    %v1144 = vmul.f32 1.0, %v1143
    %v1145 = vrcp.pop %v1142
    %v1146 = vmul.f32 1.0, %v1145
    %v1147 = vxor.u32 %v1133, 2147483648
    %v1148 = vxor.u32 %v1134, 2147483648
    %v1149 = vmul.f32 %v1147, 1.442695
    %v1150 = vpow.pop %v1149
    %v1151 = vmul.f32 %v1148, 1.442695
    %v1152 = vpow.pop %v1151
    %v1153 = vadd.f32 %v1150, 1.0
    %v1154 = vadd.f32 %v1152, 1.0
    %v1155 = vrcp.pop %v1153
    %v1156 = vmul.f32 1.0, %v1155
    %v1157 = vrcp.pop %v1154
    %v1158 = vmul.f32 1.0, %v1157
    %v1159 = vtanh.pop %v1087
    %v1160 = vtanh.pop %v1134
    %v1161 = vmul.f32 %v1144, %v1009
    %1163 = vrot.lane.b32.xlu0 %v1159, 64
    %v1164 = vpop.permute.xlu0 %1163
    %v1166 = vmul.f32 %v1144, %v1164
    %1168 = vrot.lane.b32.xlu0 %v1166, 64
    %v1169 = vpop.permute.xlu0 %1168
    %v1171 = vadd.f32 %v1161, %v1169
    %v1172 = vmul.f32 %v1156, %v1020
    %1174 = vrot.lane.b32.xlu0 %v1160, 64
    %v1175 = vpop.permute.xlu0 %1174
    %v1177 = vmul.f32 %v1156, %v1175
    %1179 = vrot.lane.b32.xlu0 %v1177, 64
    %v1180 = vpop.permute.xlu0 %1179
    %v1182 = vadd.f32 %v1172, %v1180
    %v1183 = vtanh.pop %v1171
    %1185 = vrot.lane.b32.xlu0 %v1183, 64
    %v1186 = vpop.permute.xlu0 %1185
    %v1188 = vmul.f32 %v1146, %v1186
    %v1189 = vtanh.pop %v1182
    %1191 = vrot.lane.b32.xlu0 %v1189, 64
    %v1192 = vpop.permute.xlu0 %1191
    %v1194 = vmul.f32 %v1158, %v1192
    %s1195 = scalar_lea.vmem [#allocation2], 8
    %1196 = vst.msk [vmem:[%s1195] sm:$0xff] %vm628, %v1188
    %1198 = vrot.lane.b32.xlu0 %v1194, 64
    %v1199 = vpop.permute.xlu0 %1198
    %s1201 = scalar_lea.vmem [#allocation2], 48
    %1202 = vst.msk [vmem:[%s1201] sm:$0xff] %vm1039, %v1199
    %v1203 = vpack.c.bf16 %v1188, %v1188
    %v1205 = vsel %vm628, %v1203, 0
    %1207 = vmatprep.subr.bf16.mxu0 %v829
    %1208 = vmatpush1.bf16.msra.mxu0 %v828
    %1209 = vmatprep.subr.bf16.mxu0 %v831
    %1210 = vmatpush1.bf16.msra.mxu0 %v830
    %1211 = vmatprep.subr.bf16.mxu0 %v833
    %1212 = vmatpush1.bf16.msra.mxu0 %v832
    %1213 = vmatprep.subr.bf16.mxu0 %v835
    %1214 = vmatpush1.bf16.msra.mxu0 %v834
    %1215 = vmatprep.subr.bf16.mxu0 0
    %1216 = vmatpush1.bf16.msra.mxu0 0
    %1217 = vmatprep.subr.bf16.mxu0 0
    %1218 = vmatpush1.bf16.msra.mxu0 0
    %1219 = vmatprep.subr.bf16.mxu0 0
    %1220 = vmatpush1.bf16.msra.mxu0 0
    %1221 = vmatprep.subr.bf16.mxu0 0
    %1222 = vmatpush1.bf16.msra.mxu0 0
    %1223 = vmatprep.subr.bf16.mxu0 0
    %1224 = vmatpush1.bf16.msra.mxu0 0
    %1225 = vmatprep.subr.bf16.mxu0 0
    %1226 = vmatpush1.bf16.msra.mxu0 0
    %1227 = vmatprep.subr.bf16.mxu0 0
    %1228 = vmatpush1.bf16.msra.mxu0 0
    %1229 = vmatprep.subr.bf16.mxu0 0
    %1230 = vmatpush1.bf16.msra.mxu0 0
    %1231 = vmatprep.subr.bf16.mxu0 0
    %1232 = vmatpush1.bf16.msra.mxu0 0
    %1233 = vmatprep.subr.bf16.mxu0 0
    %1234 = vmatpush1.bf16.msra.mxu0 0
    %1235 = vmatprep.subr.bf16.mxu0 0
    %1236 = vmatpush1.bf16.msra.mxu0 0
    %1237 = vmatprep.subr.bf16.mxu0 0
    %1238 = vmatpush1.bf16.msra.mxu0 0
    %1239 = vmatprep.mubr.bf16.mxu0 0
    %1240 = vmatmul.mubr.bf16.gmra.mrb[0].mxu0 %v1205
    %v1241 = vpop.f32.mrb[0].mxu0
    %v1242 = vadd.f32 0.0, %v1241
    %v1243 = vpop.f32.mrb[0].mxu0
    %v1244 = vadd.f32 0.0, %v1243
    %v1245 = vpop.f32.mrb[0].mxu0
    %v1246 = vpop.f32.mrb[0].mxu0
    %1247 = vdwg.mxu0
    %v1248 = vadd.f32 %v686, %v1242
    %v1249 = vadd.f32 %v688, %v1244
    %v1250 = vpack.c.bf16 %v1194, %v1194
    %v1252 = vsel %vm628, %v1250, 0
    %1254 = vmatprep.subr.bf16.mxu0 %v915
    %1255 = vmatpush1.bf16.msra.mxu0 %v914
    %1256 = vmatprep.subr.bf16.mxu0 %v917
    %1257 = vmatpush1.bf16.msra.mxu0 %v916
    %1258 = vmatprep.subr.bf16.mxu0 %v919
    %1259 = vmatpush1.bf16.msra.mxu0 %v918
    %1260 = vmatprep.subr.bf16.mxu0 %v921
    %1261 = vmatpush1.bf16.msra.mxu0 %v920
    %1262 = vmatprep.subr.bf16.mxu0 0
    %1263 = vmatpush1.bf16.msra.mxu0 0
    %1264 = vmatprep.subr.bf16.mxu0 0
    %1265 = vmatpush1.bf16.msra.mxu0 0
    %1266 = vmatprep.subr.bf16.mxu0 0
    %1267 = vmatpush1.bf16.msra.mxu0 0
    %1268 = vmatprep.subr.bf16.mxu0 0
    %1269 = vmatpush1.bf16.msra.mxu0 0
    %1270 = vmatprep.subr.bf16.mxu0 0
    %1271 = vmatpush1.bf16.msra.mxu0 0
    %1272 = vmatprep.subr.bf16.mxu0 0
    %1273 = vmatpush1.bf16.msra.mxu0 0
    %1274 = vmatprep.subr.bf16.mxu0 0
    %1275 = vmatpush1.bf16.msra.mxu0 0
    %1276 = vmatprep.subr.bf16.mxu0 0
    %1277 = vmatpush1.bf16.msra.mxu0 0
    %1278 = vmatprep.subr.bf16.mxu0 0
    %1279 = vmatpush1.bf16.msra.mxu0 0
    %1280 = vmatprep.subr.bf16.mxu0 0
    %1281 = vmatpush1.bf16.msra.mxu0 0
    %1282 = vmatprep.subr.bf16.mxu0 0
    %1283 = vmatpush1.bf16.msra.mxu0 0
    %1284 = vmatprep.subr.bf16.mxu0 0
    %1285 = vmatpush1.bf16.msra.mxu0 0
    %1286 = vmatprep.mubr.bf16.mxu0 0
    %1287 = vmatmul.mubr.bf16.gmra.mrb[0].mxu0 %v1252
    %v1288 = vpop.f32.mrb[0].mxu0
    %v1289 = vadd.f32 0.0, %v1288
    %v1290 = vpop.f32.mrb[0].mxu0
    %v1291 = vadd.f32 0.0, %v1290
    %v1292 = vpop.f32.mrb[0].mxu0
    %v1293 = vpop.f32.mrb[0].mxu0
    %1294 = vdwg.mxu0
    %v1295 = vadd.f32 %v773, %v1289
    %v1296 = vadd.f32 %v775, %v1291
    %v1297 = vxor.u32 %v1248, 2147483648
    %v1298 = vxor.u32 %v1249, 2147483648
    %v1299 = vmul.f32 %v1297, 1.442695
    %v1300 = vpow.pop %v1299
    %v1301 = vmul.f32 %v1298, 1.442695
    %v1302 = vpow.pop %v1301
    %v1303 = vadd.f32 %v1300, 1.0
    %v1304 = vadd.f32 %v1302, 1.0
    %v1305 = vrcp.pop %v1303
    %v1306 = vmul.f32 1.0, %v1305
    %v1307 = vrcp.pop %v1304
    %v1308 = vmul.f32 1.0, %v1307
    %v1309 = vxor.u32 %v1295, 2147483648
    %v1310 = vxor.u32 %v1296, 2147483648
    %v1311 = vmul.f32 %v1309, 1.442695
    %v1312 = vpow.pop %v1311
    %v1313 = vmul.f32 %v1310, 1.442695
    %v1314 = vpow.pop %v1313
    %v1315 = vadd.f32 %v1312, 1.0
    %v1316 = vadd.f32 %v1314, 1.0
    %v1317 = vrcp.pop %v1315
    %v1318 = vmul.f32 1.0, %v1317
    %v1319 = vrcp.pop %v1316
    %v1320 = vmul.f32 1.0, %v1319
    %v1321 = vtanh.pop %v1249
    %v1322 = vtanh.pop %v1296
    %v1323 = vmul.f32 %v1306, %v1171
    %1325 = vrot.lane.b32.xlu0 %v1321, 64
    %v1326 = vpop.permute.xlu0 %1325
    %v1328 = vmul.f32 %v1306, %v1326
    %1330 = vrot.lane.b32.xlu0 %v1328, 64
    %v1331 = vpop.permute.xlu0 %1330
    %v1333 = vadd.f32 %v1323, %v1331
    %v1334 = vmul.f32 %v1318, %v1182
    %1336 = vrot.lane.b32.xlu0 %v1322, 64
    %v1337 = vpop.permute.xlu0 %1336
    %v1339 = vmul.f32 %v1318, %v1337
    %1341 = vrot.lane.b32.xlu0 %v1339, 64
    %v1342 = vpop.permute.xlu0 %1341
    %v1344 = vadd.f32 %v1334, %v1342
    %v1345 = vtanh.pop %v1333
    %1347 = vrot.lane.b32.xlu0 %v1345, 64
    %v1348 = vpop.permute.xlu0 %1347
    %v1350 = vmul.f32 %v1308, %v1348
    %v1351 = vtanh.pop %v1344
    %1353 = vrot.lane.b32.xlu0 %v1351, 64
    %v1354 = vpop.permute.xlu0 %1353
    %v1356 = vmul.f32 %v1320, %v1354
    %s1357 = scalar_lea.vmem [#allocation2], 16
    %1358 = vst.msk [vmem:[%s1357] sm:$0xff] %vm628, %v1350
    %1360 = vrot.lane.b32.xlu0 %v1356, 64
    %v1361 = vpop.permute.xlu0 %1360
    %s1363 = scalar_lea.vmem [#allocation2], 40
    %1364 = vst.msk [vmem:[%s1363] sm:$0xff] %vm1039, %v1361
    %v1365 = vpack.c.bf16 %v1350, %v1350
    %v1367 = vsel %vm628, %v1365, 0
    %1369 = vmatprep.subr.bf16.mxu0 %v829
    %1370 = vmatpush1.bf16.msra.mxu0 %v828
    %1371 = vmatprep.subr.bf16.mxu0 %v831
    %1372 = vmatpush1.bf16.msra.mxu0 %v830
    %1373 = vmatprep.subr.bf16.mxu0 %v833
    %1374 = vmatpush1.bf16.msra.mxu0 %v832
    %1375 = vmatprep.subr.bf16.mxu0 %v835
    %1376 = vmatpush1.bf16.msra.mxu0 %v834
    %1377 = vmatprep.subr.bf16.mxu0 0
    %1378 = vmatpush1.bf16.msra.mxu0 0
    %1379 = vmatprep.subr.bf16.mxu0 0
    %1380 = vmatpush1.bf16.msra.mxu0 0
    %1381 = vmatprep.subr.bf16.mxu0 0
    %1382 = vmatpush1.bf16.msra.mxu0 0
    %1383 = vmatprep.subr.bf16.mxu0 0
    %1384 = vmatpush1.bf16.msra.mxu0 0
    %1385 = vmatprep.subr.bf16.mxu0 0
    %1386 = vmatpush1.bf16.msra.mxu0 0
    %1387 = vmatprep.subr.bf16.mxu0 0
    %1388 = vmatpush1.bf16.msra.mxu0 0
    %1389 = vmatprep.subr.bf16.mxu0 0
    %1390 = vmatpush1.bf16.msra.mxu0 0
    %1391 = vmatprep.subr.bf16.mxu0 0
    %1392 = vmatpush1.bf16.msra.mxu0 0
    %1393 = vmatprep.subr.bf16.mxu0 0
    %1394 = vmatpush1.bf16.msra.mxu0 0
    %1395 = vmatprep.subr.bf16.mxu0 0
    %1396 = vmatpush1.bf16.msra.mxu0 0
    %1397 = vmatprep.subr.bf16.mxu0 0
    %1398 = vmatpush1.bf16.msra.mxu0 0
    %1399 = vmatprep.subr.bf16.mxu0 0
    %1400 = vmatpush1.bf16.msra.mxu0 0
    %1401 = vmatprep.mubr.bf16.mxu0 0
    %1402 = vmatmul.mubr.bf16.gmra.mrb[0].mxu0 %v1367
    %v1403 = vpop.f32.mrb[0].mxu0
    %v1404 = vadd.f32 0.0, %v1403
    %v1405 = vpop.f32.mrb[0].mxu0
    %v1406 = vadd.f32 0.0, %v1405
    %v1407 = vpop.f32.mrb[0].mxu0
    %v1408 = vpop.f32.mrb[0].mxu0
    %1409 = vdwg.mxu0
    %v1410 = vadd.f32 %v690, %v1404
    %v1411 = vadd.f32 %v692, %v1406
    %v1412 = vpack.c.bf16 %v1356, %v1356
    %v1414 = vsel %vm628, %v1412, 0
    %1416 = vmatprep.subr.bf16.mxu0 %v915
    %1417 = vmatpush1.bf16.msra.mxu0 %v914
    %1418 = vmatprep.subr.bf16.mxu0 %v917
    %1419 = vmatpush1.bf16.msra.mxu0 %v916
    %1420 = vmatprep.subr.bf16.mxu0 %v919
    %1421 = vmatpush1.bf16.msra.mxu0 %v918
    %1422 = vmatprep.subr.bf16.mxu0 %v921
    %1423 = vmatpush1.bf16.msra.mxu0 %v920
    %1424 = vmatprep.subr.bf16.mxu0 0
    %1425 = vmatpush1.bf16.msra.mxu0 0
    %1426 = vmatprep.subr.bf16.mxu0 0
    %1427 = vmatpush1.bf16.msra.mxu0 0
    %1428 = vmatprep.subr.bf16.mxu0 0
    %1429 = vmatpush1.bf16.msra.mxu0 0
    %1430 = vmatprep.subr.bf16.mxu0 0
    %1431 = vmatpush1.bf16.msra.mxu0 0
    %1432 = vmatprep.subr.bf16.mxu0 0
    %1433 = vmatpush1.bf16.msra.mxu0 0
    %1434 = vmatprep.subr.bf16.mxu0 0
    %1435 = vmatpush1.bf16.msra.mxu0 0
    %1436 = vmatprep.subr.bf16.mxu0 0
    %1437 = vmatpush1.bf16.msra.mxu0 0
    %1438 = vmatprep.subr.bf16.mxu0 0
    %1439 = vmatpush1.bf16.msra.mxu0 0
    %1440 = vmatprep.subr.bf16.mxu0 0
    %1441 = vmatpush1.bf16.msra.mxu0 0
    %1442 = vmatprep.subr.bf16.mxu0 0
    %1443 = vmatpush1.bf16.msra.mxu0 0
    %1444 = vmatprep.subr.bf16.mxu0 0
    %1445 = vmatpush1.bf16.msra.mxu0 0
    %1446 = vmatprep.subr.bf16.mxu0 0
    %1447 = vmatpush1.bf16.msra.mxu0 0
    %1448 = vmatprep.mubr.bf16.mxu0 0
    %1449 = vmatmul.mubr.bf16.gmra.mrb[0].mxu0 %v1414
    %v1450 = vpop.f32.mrb[0].mxu0
    %v1451 = vadd.f32 0.0, %v1450
    %v1452 = vpop.f32.mrb[0].mxu0
    %v1453 = vadd.f32 0.0, %v1452
    %v1454 = vpop.f32.mrb[0].mxu0
    %v1455 = vpop.f32.mrb[0].mxu0
    %1456 = vdwg.mxu0
    %v1457 = vadd.f32 %v769, %v1451
    %v1458 = vadd.f32 %v771, %v1453
    %v1459 = vxor.u32 %v1410, 2147483648
    %v1460 = vxor.u32 %v1411, 2147483648
    %v1461 = vmul.f32 %v1459, 1.442695
    %v1462 = vpow.pop %v1461
    %v1463 = vmul.f32 %v1460, 1.442695
    %v1464 = vpow.pop %v1463
    %v1465 = vadd.f32 %v1462, 1.0
    %v1466 = vadd.f32 %v1464, 1.0
    %v1467 = vrcp.pop %v1465
    %v1468 = vmul.f32 1.0, %v1467
    %v1469 = vrcp.pop %v1466
    %v1470 = vmul.f32 1.0, %v1469
    %v1471 = vxor.u32 %v1457, 2147483648
    %v1472 = vxor.u32 %v1458, 2147483648
    %v1473 = vmul.f32 %v1471, 1.442695
    %v1474 = vpow.pop %v1473
    %v1475 = vmul.f32 %v1472, 1.442695
    %v1476 = vpow.pop %v1475
    %v1477 = vadd.f32 %v1474, 1.0
    %v1478 = vadd.f32 %v1476, 1.0
    %v1479 = vrcp.pop %v1477
    %v1480 = vmul.f32 1.0, %v1479
    %v1481 = vrcp.pop %v1478
    %v1482 = vmul.f32 1.0, %v1481
    %v1483 = vtanh.pop %v1411
    %v1484 = vtanh.pop %v1458
    %v1485 = vmul.f32 %v1468, %v1333
    %1487 = vrot.lane.b32.xlu0 %v1483, 64
    %v1488 = vpop.permute.xlu0 %1487
    %v1490 = vmul.f32 %v1468, %v1488
    %1492 = vrot.lane.b32.xlu0 %v1490, 64
    %v1493 = vpop.permute.xlu0 %1492
    %v1495 = vadd.f32 %v1485, %v1493
    %v1496 = vmul.f32 %v1480, %v1344
    %1498 = vrot.lane.b32.xlu0 %v1484, 64
    %v1499 = vpop.permute.xlu0 %1498
    %v1501 = vmul.f32 %v1480, %v1499
    %1503 = vrot.lane.b32.xlu0 %v1501, 64
    %v1504 = vpop.permute.xlu0 %1503
    %v1506 = vadd.f32 %v1496, %v1504
    %v1507 = vtanh.pop %v1495
    %1509 = vrot.lane.b32.xlu0 %v1507, 64
    %v1510 = vpop.permute.xlu0 %1509
    %v1512 = vmul.f32 %v1470, %v1510
    %v1513 = vtanh.pop %v1506
    %1515 = vrot.lane.b32.xlu0 %v1513, 64
    %v1516 = vpop.permute.xlu0 %1515
    %v1518 = vmul.f32 %v1482, %v1516
    %s1519 = scalar_lea.vmem [#allocation2], 24
    %1520 = vst.msk [vmem:[%s1519] sm:$0xff] %vm628, %v1512
    %1522 = vrot.lane.b32.xlu0 %v1518, 64
    %v1523 = vpop.permute.xlu0 %1522
    %s1525 = scalar_lea.vmem [#allocation2], 32
    %1526 = vst.msk [vmem:[%s1525] sm:$0xff] %vm1039, %v1523
    %v1527 = vpack.c.bf16 %v1512, %v1512
    %v1529 = vsel %vm628, %v1527, 0
    %1531 = vmatprep.subr.bf16.mxu0 %v829
    %1532 = vmatpush1.bf16.msra.mxu0 %v828
    %1533 = vmatprep.subr.bf16.mxu0 %v831
    %1534 = vmatpush1.bf16.msra.mxu0 %v830
    %1535 = vmatprep.subr.bf16.mxu0 %v833
    %1536 = vmatpush1.bf16.msra.mxu0 %v832
    %1537 = vmatprep.subr.bf16.mxu0 %v835
    %1538 = vmatpush1.bf16.msra.mxu0 %v834
    %1539 = vmatprep.subr.bf16.mxu0 0
    %1540 = vmatpush1.bf16.msra.mxu0 0
    %1541 = vmatprep.subr.bf16.mxu0 0
    %1542 = vmatpush1.bf16.msra.mxu0 0
    %1543 = vmatprep.subr.bf16.mxu0 0
    %1544 = vmatpush1.bf16.msra.mxu0 0
    %1545 = vmatprep.subr.bf16.mxu0 0
    %1546 = vmatpush1.bf16.msra.mxu0 0
    %1547 = vmatprep.subr.bf16.mxu0 0
    %1548 = vmatpush1.bf16.msra.mxu0 0
    %1549 = vmatprep.subr.bf16.mxu0 0
    %1550 = vmatpush1.bf16.msra.mxu0 0
    %1551 = vmatprep.subr.bf16.mxu0 0
    %1552 = vmatpush1.bf16.msra.mxu0 0
    %1553 = vmatprep.subr.bf16.mxu0 0
    %1554 = vmatpush1.bf16.msra.mxu0 0
    %1555 = vmatprep.subr.bf16.mxu0 0
    %1556 = vmatpush1.bf16.msra.mxu0 0
    %1557 = vmatprep.subr.bf16.mxu0 0
    %1558 = vmatpush1.bf16.msra.mxu0 0
    %1559 = vmatprep.subr.bf16.mxu0 0
    %1560 = vmatpush1.bf16.msra.mxu0 0
    %1561 = vmatprep.subr.bf16.mxu0 0
    %1562 = vmatpush1.bf16.msra.mxu0 0
    %1563 = vmatprep.mubr.bf16.mxu0 0
    %1564 = vmatmul.mubr.bf16.gmra.mrb[0].mxu0 %v1529
    %v1565 = vpop.f32.mrb[0].mxu0
    %v1566 = vadd.f32 0.0, %v1565
    %v1567 = vpop.f32.mrb[0].mxu0
    %v1568 = vadd.f32 0.0, %v1567
    %v1569 = vpop.f32.mrb[0].mxu0
    %v1570 = vpop.f32.mrb[0].mxu0
    %1571 = vdwg.mxu0
    %v1572 = vadd.f32 %v696, %v1566
    %v1573 = vadd.f32 %v698, %v1568
    %v1574 = vpack.c.bf16 %v1518, %v1518
    %v1576 = vsel %vm628, %v1574, 0
    %1578 = vmatprep.subr.bf16.mxu0 %v915
    %1579 = vmatpush1.bf16.msra.mxu0 %v914
    %1580 = vmatprep.subr.bf16.mxu0 %v917
    %1581 = vmatpush1.bf16.msra.mxu0 %v916
    %1582 = vmatprep.subr.bf16.mxu0 %v919
    %1583 = vmatpush1.bf16.msra.mxu0 %v918
    %1584 = vmatprep.subr.bf16.mxu0 %v921
    %1585 = vmatpush1.bf16.msra.mxu0 %v920
    %1586 = vmatprep.subr.bf16.mxu0 0
    %1587 = vmatpush1.bf16.msra.mxu0 0
    %1588 = vmatprep.subr.bf16.mxu0 0
    %1589 = vmatpush1.bf16.msra.mxu0 0
    %1590 = vmatprep.subr.bf16.mxu0 0
    %1591 = vmatpush1.bf16.msra.mxu0 0
    %1592 = vmatprep.subr.bf16.mxu0 0
    %1593 = vmatpush1.bf16.msra.mxu0 0
    %1594 = vmatprep.subr.bf16.mxu0 0
    %1595 = vmatpush1.bf16.msra.mxu0 0
    %1596 = vmatprep.subr.bf16.mxu0 0
    %1597 = vmatpush1.bf16.msra.mxu0 0
    %1598 = vmatprep.subr.bf16.mxu0 0
    %1599 = vmatpush1.bf16.msra.mxu0 0
    %1600 = vmatprep.subr.bf16.mxu0 0
    %1601 = vmatpush1.bf16.msra.mxu0 0
    %1602 = vmatprep.subr.bf16.mxu0 0
    %1603 = vmatpush1.bf16.msra.mxu0 0
    %1604 = vmatprep.subr.bf16.mxu0 0
    %1605 = vmatpush1.bf16.msra.mxu0 0
    %1606 = vmatprep.subr.bf16.mxu0 0
    %1607 = vmatpush1.bf16.msra.mxu0 0
    %1608 = vmatprep.subr.bf16.mxu0 0
    %1609 = vmatpush1.bf16.msra.mxu0 0
    %1610 = vmatprep.mubr.bf16.mxu0 0
    %1611 = vmatmul.mubr.bf16.gmra.mrb[0].mxu0 %v1576
    %v1612 = vpop.f32.mrb[0].mxu0
    %v1613 = vadd.f32 0.0, %v1612
    %v1614 = vpop.f32.mrb[0].mxu0
    %v1615 = vadd.f32 0.0, %v1614
    %v1616 = vpop.f32.mrb[0].mxu0
    %v1617 = vpop.f32.mrb[0].mxu0
    %1618 = vdwg.mxu0
    %v1619 = vadd.f32 %v763, %v1613
    %v1620 = vadd.f32 %v765, %v1615
    %v1621 = vxor.u32 %v1572, 2147483648
    %v1622 = vxor.u32 %v1573, 2147483648
    %v1623 = vmul.f32 %v1621, 1.442695
    %v1624 = vpow.pop %v1623
    %v1625 = vmul.f32 %v1622, 1.442695
    %v1626 = vpow.pop %v1625
    %v1627 = vadd.f32 %v1624, 1.0
    %v1628 = vadd.f32 %v1626, 1.0
    %v1629 = vrcp.pop %v1627
    %v1630 = vmul.f32 1.0, %v1629
    %v1631 = vrcp.pop %v1628
    %v1632 = vmul.f32 1.0, %v1631
    %v1633 = vxor.u32 %v1619, 2147483648
    %v1634 = vxor.u32 %v1620, 2147483648
    %v1635 = vmul.f32 %v1633, 1.442695
    %v1636 = vpow.pop %v1635
    %v1637 = vmul.f32 %v1634, 1.442695
    %v1638 = vpow.pop %v1637
    %v1639 = vadd.f32 %v1636, 1.0
    %v1640 = vadd.f32 %v1638, 1.0
    %v1641 = vrcp.pop %v1639
    %v1642 = vmul.f32 1.0, %v1641
    %v1643 = vrcp.pop %v1640
    %v1644 = vmul.f32 1.0, %v1643
    %v1645 = vtanh.pop %v1573
    %v1646 = vtanh.pop %v1620
    %v1647 = vmul.f32 %v1630, %v1495
    %1649 = vrot.lane.b32.xlu0 %v1645, 64
    %v1650 = vpop.permute.xlu0 %1649
    %v1652 = vmul.f32 %v1630, %v1650
    %1654 = vrot.lane.b32.xlu0 %v1652, 64
    %v1655 = vpop.permute.xlu0 %1654
    %v1657 = vadd.f32 %v1647, %v1655
    %v1658 = vmul.f32 %v1642, %v1506
    %1660 = vrot.lane.b32.xlu0 %v1646, 64
    %v1661 = vpop.permute.xlu0 %1660
    %v1663 = vmul.f32 %v1642, %v1661
    %1665 = vrot.lane.b32.xlu0 %v1663, 64
    %v1666 = vpop.permute.xlu0 %1665
    %v1668 = vadd.f32 %v1658, %v1666
    %v1669 = vtanh.pop %v1657
    %1671 = vrot.lane.b32.xlu0 %v1669, 64
    %v1672 = vpop.permute.xlu0 %1671
    %v1674 = vmul.f32 %v1632, %v1672
    %v1675 = vtanh.pop %v1668
    %1677 = vrot.lane.b32.xlu0 %v1675, 64
    %v1678 = vpop.permute.xlu0 %1677
    %v1680 = vmul.f32 %v1644, %v1678
    %1681 = vst.msk [vmem:[%s1525] sm:$0xff] %vm628, %v1674
    %1683 = vrot.lane.b32.xlu0 %v1680, 64
    %v1684 = vpop.permute.xlu0 %1683
    %1686 = vst.msk [vmem:[%s1519] sm:$0xff] %vm1039, %v1684
    %v1687 = vpack.c.bf16 %v1674, %v1674
    %v1689 = vsel %vm628, %v1687, 0
    %1691 = vmatprep.subr.bf16.mxu0 %v829
    %1692 = vmatpush1.bf16.msra.mxu0 %v828
    %1693 = vmatprep.subr.bf16.mxu0 %v831
    %1694 = vmatpush1.bf16.msra.mxu0 %v830
    %1695 = vmatprep.subr.bf16.mxu0 %v833
    %1696 = vmatpush1.bf16.msra.mxu0 %v832
    %1697 = vmatprep.subr.bf16.mxu0 %v835
    %1698 = vmatpush1.bf16.msra.mxu0 %v834
    %1699 = vmatprep.subr.bf16.mxu0 0
    %1700 = vmatpush1.bf16.msra.mxu0 0
    %1701 = vmatprep.subr.bf16.mxu0 0
    %1702 = vmatpush1.bf16.msra.mxu0 0
    %1703 = vmatprep.subr.bf16.mxu0 0
    %1704 = vmatpush1.bf16.msra.mxu0 0
    %1705 = vmatprep.subr.bf16.mxu0 0
    %1706 = vmatpush1.bf16.msra.mxu0 0
    %1707 = vmatprep.subr.bf16.mxu0 0
    %1708 = vmatpush1.bf16.msra.mxu0 0
    %1709 = vmatprep.subr.bf16.mxu0 0
    %1710 = vmatpush1.bf16.msra.mxu0 0
    %1711 = vmatprep.subr.bf16.mxu0 0
    %1712 = vmatpush1.bf16.msra.mxu0 0
    %1713 = vmatprep.subr.bf16.mxu0 0
    %1714 = vmatpush1.bf16.msra.mxu0 0
    %1715 = vmatprep.subr.bf16.mxu0 0
    %1716 = vmatpush1.bf16.msra.mxu0 0
    %1717 = vmatprep.subr.bf16.mxu0 0
    %1718 = vmatpush1.bf16.msra.mxu0 0
    %1719 = vmatprep.subr.bf16.mxu0 0
    %1720 = vmatpush1.bf16.msra.mxu0 0
    %1721 = vmatprep.subr.bf16.mxu0 0
    %1722 = vmatpush1.bf16.msra.mxu0 0
    %1723 = vmatprep.mubr.bf16.mxu0 0
    %1724 = vmatmul.mubr.bf16.gmra.mrb[0].mxu0 %v1689
    %v1725 = vpop.f32.mrb[0].mxu0
    %v1726 = vadd.f32 0.0, %v1725
    %v1727 = vpop.f32.mrb[0].mxu0
    %v1728 = vadd.f32 0.0, %v1727
    %v1729 = vpop.f32.mrb[0].mxu0
    %v1730 = vpop.f32.mrb[0].mxu0
    %1731 = vdwg.mxu0
    %v1732 = vadd.f32 %v700, %v1726
    %v1733 = vadd.f32 %v702, %v1728
    %v1734 = vpack.c.bf16 %v1680, %v1680
    %v1736 = vsel %vm628, %v1734, 0
    %1738 = vmatprep.subr.bf16.mxu0 %v915
    %1739 = vmatpush1.bf16.msra.mxu0 %v914
    %1740 = vmatprep.subr.bf16.mxu0 %v917
    %1741 = vmatpush1.bf16.msra.mxu0 %v916
    %1742 = vmatprep.subr.bf16.mxu0 %v919
    %1743 = vmatpush1.bf16.msra.mxu0 %v918
    %1744 = vmatprep.subr.bf16.mxu0 %v921
    %1745 = vmatpush1.bf16.msra.mxu0 %v920
    %1746 = vmatprep.subr.bf16.mxu0 0
    %1747 = vmatpush1.bf16.msra.mxu0 0
    %1748 = vmatprep.subr.bf16.mxu0 0
    %1749 = vmatpush1.bf16.msra.mxu0 0
    %1750 = vmatprep.subr.bf16.mxu0 0
    %1751 = vmatpush1.bf16.msra.mxu0 0
    %1752 = vmatprep.subr.bf16.mxu0 0
    %1753 = vmatpush1.bf16.msra.mxu0 0
    %1754 = vmatprep.subr.bf16.mxu0 0
    %1755 = vmatpush1.bf16.msra.mxu0 0
    %1756 = vmatprep.subr.bf16.mxu0 0
    %1757 = vmatpush1.bf16.msra.mxu0 0
    %1758 = vmatprep.subr.bf16.mxu0 0
    %1759 = vmatpush1.bf16.msra.mxu0 0
    %1760 = vmatprep.subr.bf16.mxu0 0
    %1761 = vmatpush1.bf16.msra.mxu0 0
    %1762 = vmatprep.subr.bf16.mxu0 0
    %1763 = vmatpush1.bf16.msra.mxu0 0
    %1764 = vmatprep.subr.bf16.mxu0 0
    %1765 = vmatpush1.bf16.msra.mxu0 0
    %1766 = vmatprep.subr.bf16.mxu0 0
    %1767 = vmatpush1.bf16.msra.mxu0 0
    %1768 = vmatprep.subr.bf16.mxu0 0
    %1769 = vmatpush1.bf16.msra.mxu0 0
    %1770 = vmatprep.mubr.bf16.mxu0 0
    %1771 = vmatmul.mubr.bf16.gmra.mrb[0].mxu0 %v1736
    %v1772 = vpop.f32.mrb[0].mxu0
    %v1773 = vadd.f32 0.0, %v1772
    %v1774 = vpop.f32.mrb[0].mxu0
    %v1775 = vadd.f32 0.0, %v1774
    %v1776 = vpop.f32.mrb[0].mxu0
    %v1777 = vpop.f32.mrb[0].mxu0
    %1778 = vdwg.mxu0
    %v1779 = vadd.f32 %v759, %v1773
    %v1780 = vadd.f32 %v761, %v1775
    %v1781 = vxor.u32 %v1732, 2147483648
    %v1782 = vxor.u32 %v1733, 2147483648
    %v1783 = vmul.f32 %v1781, 1.442695
    %v1784 = vpow.pop %v1783
    %v1785 = vmul.f32 %v1782, 1.442695
    %v1786 = vpow.pop %v1785
    %v1787 = vadd.f32 %v1784, 1.0
    %v1788 = vadd.f32 %v1786, 1.0
    %v1789 = vrcp.pop %v1787
    %v1790 = vmul.f32 1.0, %v1789
    %v1791 = vrcp.pop %v1788
    %v1792 = vmul.f32 1.0, %v1791
    %v1793 = vxor.u32 %v1779, 2147483648
    %v1794 = vxor.u32 %v1780, 2147483648
    %v1795 = vmul.f32 %v1793, 1.442695
    %v1796 = vpow.pop %v1795
    %v1797 = vmul.f32 %v1794, 1.442695
    %v1798 = vpow.pop %v1797
    %v1799 = vadd.f32 %v1796, 1.0
    %v1800 = vadd.f32 %v1798, 1.0
    %v1801 = vrcp.pop %v1799
    %v1802 = vmul.f32 1.0, %v1801
    %v1803 = vrcp.pop %v1800
    %v1804 = vmul.f32 1.0, %v1803
    %v1805 = vtanh.pop %v1733
    %v1806 = vtanh.pop %v1780
    %v1807 = vmul.f32 %v1790, %v1657
    %1809 = vrot.lane.b32.xlu0 %v1805, 64
    %v1810 = vpop.permute.xlu0 %1809
    %v1812 = vmul.f32 %v1790, %v1810
    %1814 = vrot.lane.b32.xlu0 %v1812, 64
    %v1815 = vpop.permute.xlu0 %1814
    %v1817 = vadd.f32 %v1807, %v1815
    %v1818 = vmul.f32 %v1802, %v1668
    %1820 = vrot.lane.b32.xlu0 %v1806, 64
    %v1821 = vpop.permute.xlu0 %1820
    %v1823 = vmul.f32 %v1802, %v1821
    %1825 = vrot.lane.b32.xlu0 %v1823, 64
    %v1826 = vpop.permute.xlu0 %1825
    %v1828 = vadd.f32 %v1818, %v1826
    %v1829 = vtanh.pop %v1817
    %1831 = vrot.lane.b32.xlu0 %v1829, 64
    %v1832 = vpop.permute.xlu0 %1831
    %v1834 = vmul.f32 %v1792, %v1832
    %v1835 = vtanh.pop %v1828
    %1837 = vrot.lane.b32.xlu0 %v1835, 64
    %v1838 = vpop.permute.xlu0 %1837
    %v1840 = vmul.f32 %v1804, %v1838
    %1841 = vst.msk [vmem:[%s1363] sm:$0xff] %vm628, %v1834
    %1843 = vrot.lane.b32.xlu0 %v1840, 64
    %v1844 = vpop.permute.xlu0 %1843
    %1846 = vst.msk [vmem:[%s1357] sm:$0xff] %vm1039, %v1844
    %v1847 = vpack.c.bf16 %v1834, %v1834
    %v1849 = vsel %vm628, %v1847, 0
    %1851 = vmatprep.subr.bf16.mxu0 %v829
    %1852 = vmatpush1.bf16.msra.mxu0 %v828
    %1853 = vmatprep.subr.bf16.mxu0 %v831
    %1854 = vmatpush1.bf16.msra.mxu0 %v830
    %1855 = vmatprep.subr.bf16.mxu0 %v833
    %1856 = vmatpush1.bf16.msra.mxu0 %v832
    %1857 = vmatprep.subr.bf16.mxu0 %v835
    %1858 = vmatpush1.bf16.msra.mxu0 %v834
    %1859 = vmatprep.subr.bf16.mxu0 0
    %1860 = vmatpush1.bf16.msra.mxu0 0
    %1861 = vmatprep.subr.bf16.mxu0 0
    %1862 = vmatpush1.bf16.msra.mxu0 0
    %1863 = vmatprep.subr.bf16.mxu0 0
    %1864 = vmatpush1.bf16.msra.mxu0 0
    %1865 = vmatprep.subr.bf16.mxu0 0
    %1866 = vmatpush1.bf16.msra.mxu0 0
    %1867 = vmatprep.subr.bf16.mxu0 0
    %1868 = vmatpush1.bf16.msra.mxu0 0
    %1869 = vmatprep.subr.bf16.mxu0 0
    %1870 = vmatpush1.bf16.msra.mxu0 0
    %1871 = vmatprep.subr.bf16.mxu0 0
    %1872 = vmatpush1.bf16.msra.mxu0 0
    %1873 = vmatprep.subr.bf16.mxu0 0
    %1874 = vmatpush1.bf16.msra.mxu0 0
    %1875 = vmatprep.subr.bf16.mxu0 0
    %1876 = vmatpush1.bf16.msra.mxu0 0
    %1877 = vmatprep.subr.bf16.mxu0 0
    %1878 = vmatpush1.bf16.msra.mxu0 0
    %1879 = vmatprep.subr.bf16.mxu0 0
    %1880 = vmatpush1.bf16.msra.mxu0 0
    %1881 = vmatprep.subr.bf16.mxu0 0
    %1882 = vmatpush1.bf16.msra.mxu0 0
    %1883 = vmatprep.mubr.bf16.mxu0 0
    %1884 = vmatmul.mubr.bf16.gmra.mrb[0].mxu0 %v1849
    %v1885 = vpop.f32.mrb[0].mxu0
    %v1886 = vadd.f32 0.0, %v1885
    %v1887 = vpop.f32.mrb[0].mxu0
    %v1888 = vadd.f32 0.0, %v1887
    %v1889 = vpop.f32.mrb[0].mxu0
    %v1890 = vpop.f32.mrb[0].mxu0
    %1891 = vdwg.mxu0
    %v1892 = vadd.f32 %v706, %v1886
    %v1893 = vadd.f32 %v708, %v1888
    %v1894 = vpack.c.bf16 %v1840, %v1840
    %v1896 = vsel %vm628, %v1894, 0
    %1898 = vmatprep.subr.bf16.mxu0 %v915
    %1899 = vmatpush1.bf16.msra.mxu0 %v914
    %1900 = vmatprep.subr.bf16.mxu0 %v917
    %1901 = vmatpush1.bf16.msra.mxu0 %v916
    %1902 = vmatprep.subr.bf16.mxu0 %v919
    %1903 = vmatpush1.bf16.msra.mxu0 %v918
    %1904 = vmatprep.subr.bf16.mxu0 %v921
    %1905 = vmatpush1.bf16.msra.mxu0 %v920
    %1906 = vmatprep.subr.bf16.mxu0 0
    %1907 = vmatpush1.bf16.msra.mxu0 0
    %1908 = vmatprep.subr.bf16.mxu0 0
    %1909 = vmatpush1.bf16.msra.mxu0 0
    %1910 = vmatprep.subr.bf16.mxu0 0
    %1911 = vmatpush1.bf16.msra.mxu0 0
    %1912 = vmatprep.subr.bf16.mxu0 0
    %1913 = vmatpush1.bf16.msra.mxu0 0
    %1914 = vmatprep.subr.bf16.mxu0 0
    %1915 = vmatpush1.bf16.msra.mxu0 0
    %1916 = vmatprep.subr.bf16.mxu0 0
    %1917 = vmatpush1.bf16.msra.mxu0 0
    %1918 = vmatprep.subr.bf16.mxu0 0
    %1919 = vmatpush1.bf16.msra.mxu0 0
    %1920 = vmatprep.subr.bf16.mxu0 0
    %1921 = vmatpush1.bf16.msra.mxu0 0
    %1922 = vmatprep.subr.bf16.mxu0 0
    %1923 = vmatpush1.bf16.msra.mxu0 0
    %1924 = vmatprep.subr.bf16.mxu0 0
    %1925 = vmatpush1.bf16.msra.mxu0 0
    %1926 = vmatprep.subr.bf16.mxu0 0
    %1927 = vmatpush1.bf16.msra.mxu0 0
    %1928 = vmatprep.subr.bf16.mxu0 0
    %1929 = vmatpush1.bf16.msra.mxu0 0
    %1930 = vmatprep.mubr.bf16.mxu0 0
    %1931 = vmatmul.mubr.bf16.gmra.mrb[0].mxu0 %v1896
    %v1932 = vpop.f32.mrb[0].mxu0
    %v1933 = vadd.f32 0.0, %v1932
    %v1934 = vpop.f32.mrb[0].mxu0
    %v1935 = vadd.f32 0.0, %v1934
    %v1936 = vpop.f32.mrb[0].mxu0
    %v1937 = vpop.f32.mrb[0].mxu0
    %1938 = vdwg.mxu0
    %v1939 = vadd.f32 %v753, %v1933
    %v1940 = vadd.f32 %v755, %v1935
    %v1941 = vxor.u32 %v1892, 2147483648
    %v1942 = vxor.u32 %v1893, 2147483648
    %v1943 = vmul.f32 %v1941, 1.442695
    %v1944 = vpow.pop %v1943
    %v1945 = vmul.f32 %v1942, 1.442695
    %v1946 = vpow.pop %v1945
    %v1947 = vadd.f32 %v1944, 1.0
    %v1948 = vadd.f32 %v1946, 1.0
    %v1949 = vrcp.pop %v1947
    %v1950 = vmul.f32 1.0, %v1949
    %v1951 = vrcp.pop %v1948
    %v1952 = vmul.f32 1.0, %v1951
    %v1953 = vxor.u32 %v1939, 2147483648
    %v1954 = vxor.u32 %v1940, 2147483648
    %v1955 = vmul.f32 %v1953, 1.442695
    %v1956 = vpow.pop %v1955
    %v1957 = vmul.f32 %v1954, 1.442695
    %v1958 = vpow.pop %v1957
    %v1959 = vadd.f32 %v1956, 1.0
    %v1960 = vadd.f32 %v1958, 1.0
    %v1961 = vrcp.pop %v1959
    %v1962 = vmul.f32 1.0, %v1961
    %v1963 = vrcp.pop %v1960
    %v1964 = vmul.f32 1.0, %v1963
    %v1965 = vtanh.pop %v1893
    %v1966 = vtanh.pop %v1940
    %v1967 = vmul.f32 %v1950, %v1817
    %1969 = vrot.lane.b32.xlu0 %v1965, 64
    %v1970 = vpop.permute.xlu0 %1969
    %v1972 = vmul.f32 %v1950, %v1970
    %1974 = vrot.lane.b32.xlu0 %v1972, 64
    %v1975 = vpop.permute.xlu0 %1974
    %v1977 = vadd.f32 %v1967, %v1975
    %v1978 = vmul.f32 %v1962, %v1828
    %1980 = vrot.lane.b32.xlu0 %v1966, 64
    %v1981 = vpop.permute.xlu0 %1980
    %v1983 = vmul.f32 %v1962, %v1981
    %1985 = vrot.lane.b32.xlu0 %v1983, 64
    %v1986 = vpop.permute.xlu0 %1985
    %v1988 = vadd.f32 %v1978, %v1986
    %v1989 = vtanh.pop %v1977
    %1991 = vrot.lane.b32.xlu0 %v1989, 64
    %v1992 = vpop.permute.xlu0 %1991
    %v1994 = vmul.f32 %v1952, %v1992
    %v1995 = vtanh.pop %v1988
    %1997 = vrot.lane.b32.xlu0 %v1995, 64
    %v1998 = vpop.permute.xlu0 %1997
    %v2000 = vmul.f32 %v1964, %v1998
    %2001 = vst.msk [vmem:[%s1201] sm:$0xff] %vm628, %v1994
    %2003 = vrot.lane.b32.xlu0 %v2000, 64
    %v2004 = vpop.permute.xlu0 %2003
    %2006 = vst.msk [vmem:[%s1195] sm:$0xff] %vm1039, %v2004
    %v2007 = vpack.c.bf16 %v1994, %v1994
    %v2009 = vsel %vm628, %v2007, 0
    %2011 = vmatprep.subr.bf16.mxu0 %v829
    %2012 = vmatpush1.bf16.msra.mxu0 %v828
    %2013 = vmatprep.subr.bf16.mxu0 %v831
    %2014 = vmatpush1.bf16.msra.mxu0 %v830
    %2015 = vmatprep.subr.bf16.mxu0 %v833
    %2016 = vmatpush1.bf16.msra.mxu0 %v832
    %2017 = vmatprep.subr.bf16.mxu0 %v835
    %2018 = vmatpush1.bf16.msra.mxu0 %v834
    %2019 = vmatprep.subr.bf16.mxu0 0
    %2020 = vmatpush1.bf16.msra.mxu0 0
    %2021 = vmatprep.subr.bf16.mxu0 0
    %2022 = vmatpush1.bf16.msra.mxu0 0
    %2023 = vmatprep.subr.bf16.mxu0 0
    %2024 = vmatpush1.bf16.msra.mxu0 0
    %2025 = vmatprep.subr.bf16.mxu0 0
    %2026 = vmatpush1.bf16.msra.mxu0 0
    %2027 = vmatprep.subr.bf16.mxu0 0
    %2028 = vmatpush1.bf16.msra.mxu0 0
    %2029 = vmatprep.subr.bf16.mxu0 0
    %2030 = vmatpush1.bf16.msra.mxu0 0
    %2031 = vmatprep.subr.bf16.mxu0 0
    %2032 = vmatpush1.bf16.msra.mxu0 0
    %2033 = vmatprep.subr.bf16.mxu0 0
    %2034 = vmatpush1.bf16.msra.mxu0 0
    %2035 = vmatprep.subr.bf16.mxu0 0
    %2036 = vmatpush1.bf16.msra.mxu0 0
    %2037 = vmatprep.subr.bf16.mxu0 0
    %2038 = vmatpush1.bf16.msra.mxu0 0
    %2039 = vmatprep.subr.bf16.mxu0 0
    %2040 = vmatpush1.bf16.msra.mxu0 0
    %2041 = vmatprep.subr.bf16.mxu0 0
    %2042 = vmatpush1.bf16.msra.mxu0 0
    %2043 = vmatprep.mubr.bf16.mxu0 0
    %2044 = vmatmul.mubr.bf16.gmra.mrb[0].mxu0 %v2009
    %v2045 = vpop.f32.mrb[0].mxu0
    %v2046 = vadd.f32 0.0, %v2045
    %v2047 = vpop.f32.mrb[0].mxu0
    %v2048 = vadd.f32 0.0, %v2047
    %v2049 = vpop.f32.mrb[0].mxu0
    %v2050 = vpop.f32.mrb[0].mxu0
    %2051 = vdwg.mxu0
    %v2052 = vadd.f32 %v710, %v2046
    %v2053 = vadd.f32 %v712, %v2048
    %v2054 = vpack.c.bf16 %v2000, %v2000
    %v2056 = vsel %vm628, %v2054, 0
    %2058 = vmatprep.subr.bf16.mxu0 %v915
    %2059 = vmatpush1.bf16.msra.mxu0 %v914
    %2060 = vmatprep.subr.bf16.mxu0 %v917
    %2061 = vmatpush1.bf16.msra.mxu0 %v916
    %2062 = vmatprep.subr.bf16.mxu0 %v919
    %2063 = vmatpush1.bf16.msra.mxu0 %v918
    %2064 = vmatprep.subr.bf16.mxu0 %v921
    %2065 = vmatpush1.bf16.msra.mxu0 %v920
    %2066 = vmatprep.subr.bf16.mxu0 0
    %2067 = vmatpush1.bf16.msra.mxu0 0
    %2068 = vmatprep.subr.bf16.mxu0 0
    %2069 = vmatpush1.bf16.msra.mxu0 0
    %2070 = vmatprep.subr.bf16.mxu0 0
    %2071 = vmatpush1.bf16.msra.mxu0 0
    %2072 = vmatprep.subr.bf16.mxu0 0
    %2073 = vmatpush1.bf16.msra.mxu0 0
    %2074 = vmatprep.subr.bf16.mxu0 0
    %2075 = vmatpush1.bf16.msra.mxu0 0
    %2076 = vmatprep.subr.bf16.mxu0 0
    %2077 = vmatpush1.bf16.msra.mxu0 0
    %2078 = vmatprep.subr.bf16.mxu0 0
    %2079 = vmatpush1.bf16.msra.mxu0 0
    %2080 = vmatprep.subr.bf16.mxu0 0
    %2081 = vmatpush1.bf16.msra.mxu0 0
    %2082 = vmatprep.subr.bf16.mxu0 0
    %2083 = vmatpush1.bf16.msra.mxu0 0
    %2084 = vmatprep.subr.bf16.mxu0 0
    %2085 = vmatpush1.bf16.msra.mxu0 0
    %2086 = vmatprep.subr.bf16.mxu0 0
    %2087 = vmatpush1.bf16.msra.mxu0 0
    %2088 = vmatprep.subr.bf16.mxu0 0
    %2089 = vmatpush1.bf16.msra.mxu0 0
    %2090 = vmatprep.mubr.bf16.mxu0 0
    %2091 = vmatmul.mubr.bf16.gmra.mrb[0].mxu0 %v2056
    %v2092 = vpop.f32.mrb[0].mxu0
    %v2093 = vadd.f32 0.0, %v2092
    %v2094 = vpop.f32.mrb[0].mxu0
    %v2095 = vadd.f32 0.0, %v2094
    %v2096 = vpop.f32.mrb[0].mxu0
    %v2097 = vpop.f32.mrb[0].mxu0
    %2098 = vdwg.mxu0
    %v2099 = vadd.f32 %v749, %v2093
    %v2100 = vadd.f32 %v751, %v2095
    %v2101 = vxor.u32 %v2052, 2147483648
    %v2102 = vxor.u32 %v2053, 2147483648
    %v2103 = vmul.f32 %v2101, 1.442695
    %v2104 = vpow.pop %v2103
    %v2105 = vmul.f32 %v2102, 1.442695
    %v2106 = vpow.pop %v2105
    %v2107 = vadd.f32 %v2104, 1.0
    %v2108 = vadd.f32 %v2106, 1.0
    %v2109 = vrcp.pop %v2107
    %v2110 = vmul.f32 1.0, %v2109
    %v2111 = vrcp.pop %v2108
    %v2112 = vmul.f32 1.0, %v2111
    %v2113 = vxor.u32 %v2099, 2147483648
    %v2114 = vxor.u32 %v2100, 2147483648
    %v2115 = vmul.f32 %v2113, 1.442695
    %v2116 = vpow.pop %v2115
    %v2117 = vmul.f32 %v2114, 1.442695
    %v2118 = vpow.pop %v2117
    %v2119 = vadd.f32 %v2116, 1.0
    %v2120 = vadd.f32 %v2118, 1.0
    %v2121 = vrcp.pop %v2119
    %v2122 = vmul.f32 1.0, %v2121
    %v2123 = vrcp.pop %v2120
    %v2124 = vmul.f32 1.0, %v2123
    %v2125 = vtanh.pop %v2053
    %v2126 = vtanh.pop %v2100
    %v2127 = vmul.f32 %v2110, %v1977
    %2129 = vrot.lane.b32.xlu0 %v2125, 64
    %v2130 = vpop.permute.xlu0 %2129
    %v2132 = vmul.f32 %v2110, %v2130
    %2134 = vrot.lane.b32.xlu0 %v2132, 64
    %v2135 = vpop.permute.xlu0 %2134
    %v2137 = vadd.f32 %v2127, %v2135
    %v2138 = vmul.f32 %v2122, %v1988
    %2140 = vrot.lane.b32.xlu0 %v2126, 64
    %v2141 = vpop.permute.xlu0 %2140
    %v2143 = vmul.f32 %v2122, %v2141
    %2145 = vrot.lane.b32.xlu0 %v2143, 64
    %v2146 = vpop.permute.xlu0 %2145
    %v2148 = vadd.f32 %v2138, %v2146
    %v2149 = vtanh.pop %v2137
    %2151 = vrot.lane.b32.xlu0 %v2149, 64
    %v2152 = vpop.permute.xlu0 %2151
    %v2154 = vmul.f32 %v2112, %v2152
    %v2155 = vtanh.pop %v2148
    %2157 = vrot.lane.b32.xlu0 %v2155, 64
    %v2158 = vpop.permute.xlu0 %2157
    %v2160 = vmul.f32 %v2124, %v2158
    %2161 = vst.msk [vmem:[%s1038] sm:$0xff] %vm628, %v2154
    %2163 = vrot.lane.b32.xlu0 %v2160, 64
    %v2164 = vpop.permute.xlu0 %2163
    %2166 = vst.msk [vmem:[#allocation2] sm:$0xff] %vm1039, %v2164
    %s2167 = scalar_lea.vmem [#allocation6], 1
    %v2168 = vld [vmem:[%s2167] ss:$8 sm:$0xf]
    %v2169 = vld [vmem:[#allocation2] sm:$0xff]
    %v2170 = vld [vmem:[#allocation2 + $0x8] sm:$0xff]
    %v2171 = vld [vmem:[#allocation2 + $0x10] sm:$0xff]
    %v2172 = vld [vmem:[#allocation2 + $0x18] sm:$0xff]
    %v2173 = vld [vmem:[#allocation2 + $0x20] sm:$0xff]
    %v2174 = vld [vmem:[#allocation2 + $0x28] sm:$0xff]
    %v2175 = vld [vmem:[#allocation2 + $0x30] sm:$0xff]
    %v2176 = vld [vmem:[#allocation2 + $0x38] sm:$0xff]
    %v2177 = vpack.c.bf16 %v2169, %v2169
    %v2178 = vpack.c.bf16 %v2170, %v2170
    %v2179 = vpack.c.bf16 %v2171, %v2171
    %v2180 = vpack.c.bf16 %v2172, %v2172
    %v2181 = vpack.c.bf16 %v2173, %v2173
    %v2182 = vpack.c.bf16 %v2174, %v2174
    %v2183 = vpack.c.bf16 %v2175, %v2175
    %v2184 = vpack.c.bf16 %v2176, %v2176
    %v2185 = vld [vmem:[%s5] sm:$0xff]
    %v2186 = vld [vmem:[%s5 + $0x8] sm:$0xff]
    %v2187 = vld [vmem:[%s5 + $0x10] sm:$0xff]
    %v2188 = vld [vmem:[%s5 + $0x18] sm:$0xff]
    %v2189 = vld [vmem:[%s5 + $0x20] sm:$0xff]
    %v2190 = vld [vmem:[%s5 + $0x28] sm:$0xff]
    %v2191 = vld [vmem:[%s5 + $0x30] sm:$0xff]
    %v2192 = vld [vmem:[%s5 + $0x38] sm:$0xff]
    %v2193 = vld [vmem:[%s5 + $0x40] sm:$0xff]
    %v2194 = vld [vmem:[%s5 + $0x48] sm:$0xff]
    %v2195 = vld [vmem:[%s5 + $0x50] sm:$0xff]
    %v2196 = vld [vmem:[%s5 + $0x58] sm:$0xff]
    %v2197 = vld [vmem:[%s5 + $0x60] sm:$0xff]
    %v2198 = vld [vmem:[%s5 + $0x68] sm:$0xff]
    %v2199 = vld [vmem:[%s5 + $0x70] sm:$0xff]
    %v2200 = vld [vmem:[%s5 + $0x78] sm:$0xff]
    %v2201 = vld [vmem:[%s5 + $0x80] sm:$0xff]
    %v2202 = vld [vmem:[%s5 + $0x88] sm:$0xff]
    %v2203 = vld [vmem:[%s5 + $0x90] sm:$0xff]
    %v2204 = vld [vmem:[%s5 + $0x98] sm:$0xff]
    %v2205 = vld [vmem:[%s5 + $0xa0] sm:$0xff]
    %v2206 = vld [vmem:[%s5 + $0xa8] sm:$0xff]
    %v2207 = vld [vmem:[%s5 + $0xb0] sm:$0xff]
    %v2208 = vld [vmem:[%s5 + $0xb8] sm:$0xff]
    %v2209 = vld [vmem:[%s5 + $0xc0] sm:$0xff]
    %v2210 = vld [vmem:[%s5 + $0xc8] sm:$0xff]
    %v2211 = vld [vmem:[%s5 + $0xd0] sm:$0xff]
    %v2212 = vld [vmem:[%s5 + $0xd8] sm:$0xff]
    %v2213 = vld [vmem:[%s5 + $0xe0] sm:$0xff]
    %v2214 = vld [vmem:[%s5 + $0xe8] sm:$0xff]
    %v2215 = vld [vmem:[%s5 + $0xf0] sm:$0xff]
    %v2216 = vld [vmem:[%s5 + $0xf8] sm:$0xff]
    %v2218 = vlaneseq
    %v2219 = vshrl.u32 %v2218, 7
    %v2220 = vsub.s32 0, %v2219
    %v2221 = vrot.slane %v2168, %v2220
    %v2222 = vlaneseq
    %v2223 = vshrl.u32 %v2222, 7
    %v2224 = vsub.s32 1, %v2223
    %v2225 = vrot.slane %v2168, %v2224
    %v2226 = vlaneseq
    %v2227 = vshrl.u32 %v2226, 7
    %v2228 = vsub.s32 2, %v2227
    %v2229 = vrot.slane %v2168, %v2228
    %v2230 = vlaneseq
    %v2231 = vshrl.u32 %v2230, 7
    %v2232 = vsub.s32 3, %v2231
    %v2233 = vrot.slane %v2168, %v2232
    %v2246 = vunpack.c.l.b16 %v2177
    %v2247 = vunpack.c.l.b16 %v2178
    %v2248 = vunpack.c.l.b16 %v2179
    %v2249 = vunpack.c.l.b16 %v2180
    %v2250 = vunpack.c.l.b16 %v2181
    %v2251 = vunpack.c.l.b16 %v2182
    %v2252 = vunpack.c.l.b16 %v2183
    %v2253 = vunpack.c.l.b16 %v2184
    %v2254 = vpack.c.b16 %v2247, %v2246
    %v2255 = vpack.c.b16 %v2249, %v2248
    %v2256 = vpack.c.b16 %v2251, %v2250
    %v2257 = vpack.c.b16 %v2253, %v2252
    %v2294 = vunpack.c.l.b16 %v2185
    %v2295 = vunpack.c.h.b16 %v2185
    %v2296 = vunpack.c.l.b16 %v2186
    %v2297 = vunpack.c.h.b16 %v2186
    %v2298 = vunpack.c.l.b16 %v2187
    %v2299 = vunpack.c.h.b16 %v2187
    %v2300 = vunpack.c.l.b16 %v2188
    %v2301 = vunpack.c.h.b16 %v2188
    %v2302 = vunpack.c.l.b16 %v2189
    %v2303 = vunpack.c.h.b16 %v2189
    %v2304 = vunpack.c.l.b16 %v2190
    %v2305 = vunpack.c.h.b16 %v2190
    %v2306 = vunpack.c.l.b16 %v2191
    %v2307 = vunpack.c.h.b16 %v2191
    %v2308 = vunpack.c.l.b16 %v2192
    %v2309 = vunpack.c.h.b16 %v2192
    %v2310 = vunpack.c.l.b16 %v2193
    %v2311 = vunpack.c.h.b16 %v2193
    %v2312 = vunpack.c.l.b16 %v2194
    %v2313 = vunpack.c.h.b16 %v2194
    %v2314 = vunpack.c.l.b16 %v2195
    %v2315 = vunpack.c.h.b16 %v2195
    %v2316 = vunpack.c.l.b16 %v2196
    %v2317 = vunpack.c.h.b16 %v2196
    %v2318 = vunpack.c.l.b16 %v2197
    %v2319 = vunpack.c.h.b16 %v2197
    %v2320 = vunpack.c.l.b16 %v2198
    %v2321 = vunpack.c.h.b16 %v2198
    %v2322 = vunpack.c.l.b16 %v2199
    %v2323 = vunpack.c.h.b16 %v2199
    %v2324 = vunpack.c.l.b16 %v2200
    %v2325 = vunpack.c.h.b16 %v2200
    %v2326 = vunpack.c.l.b16 %v2201
    %v2327 = vunpack.c.h.b16 %v2201
    %v2328 = vunpack.c.l.b16 %v2202
    %v2329 = vunpack.c.h.b16 %v2202
    %v2330 = vunpack.c.l.b16 %v2203
    %v2331 = vunpack.c.h.b16 %v2203
    %v2332 = vunpack.c.l.b16 %v2204
    %v2333 = vunpack.c.h.b16 %v2204
    %v2334 = vunpack.c.l.b16 %v2205
    %v2335 = vunpack.c.h.b16 %v2205
    %v2336 = vunpack.c.l.b16 %v2206
    %v2337 = vunpack.c.h.b16 %v2206
    %v2338 = vunpack.c.l.b16 %v2207
    %v2339 = vunpack.c.h.b16 %v2207
    %v2340 = vunpack.c.l.b16 %v2208
    %v2341 = vunpack.c.h.b16 %v2208
    %v2342 = vunpack.c.l.b16 %v2209
    %v2343 = vunpack.c.h.b16 %v2209
    %v2344 = vunpack.c.l.b16 %v2210
    %v2345 = vunpack.c.h.b16 %v2210
    %v2346 = vunpack.c.l.b16 %v2211
    %v2347 = vunpack.c.h.b16 %v2211
    %v2348 = vunpack.c.l.b16 %v2212
    %v2349 = vunpack.c.h.b16 %v2212
    %v2350 = vunpack.c.l.b16 %v2213
    %v2351 = vunpack.c.h.b16 %v2213
    %v2352 = vunpack.c.l.b16 %v2214
    %v2353 = vunpack.c.h.b16 %v2214
    %v2354 = vunpack.c.l.b16 %v2215
    %v2355 = vunpack.c.h.b16 %v2215
    %v2356 = vunpack.c.l.b16 %v2216
    %v2357 = vunpack.c.h.b16 %v2216
    %v2358 = vpack.c.b16 %v2298, %v2294
    %v2359 = vpack.c.b16 %v2299, %v2295
    %v2360 = vpack.c.b16 %v2300, %v2296
    %v2361 = vpack.c.b16 %v2301, %v2297
    %v2362 = vpack.c.b16 %v2306, %v2302
    %v2363 = vpack.c.b16 %v2307, %v2303
    %v2364 = vpack.c.b16 %v2308, %v2304
    %v2365 = vpack.c.b16 %v2309, %v2305
    %v2366 = vpack.c.b16 %v2314, %v2310
    %v2367 = vpack.c.b16 %v2315, %v2311
    %v2368 = vpack.c.b16 %v2316, %v2312
    %v2369 = vpack.c.b16 %v2317, %v2313
    %v2370 = vpack.c.b16 %v2322, %v2318
    %v2371 = vpack.c.b16 %v2323, %v2319
    %v2372 = vpack.c.b16 %v2324, %v2320
    %v2373 = vpack.c.b16 %v2325, %v2321
    %v2374 = vpack.c.b16 %v2330, %v2326
    %v2375 = vpack.c.b16 %v2331, %v2327
    %v2376 = vpack.c.b16 %v2332, %v2328
    %v2377 = vpack.c.b16 %v2333, %v2329
    %v2378 = vpack.c.b16 %v2338, %v2334
    %v2379 = vpack.c.b16 %v2339, %v2335
    %v2380 = vpack.c.b16 %v2340, %v2336
    %v2381 = vpack.c.b16 %v2341, %v2337
    %v2382 = vpack.c.b16 %v2346, %v2342
    %v2383 = vpack.c.b16 %v2347, %v2343
    %v2384 = vpack.c.b16 %v2348, %v2344
    %v2385 = vpack.c.b16 %v2349, %v2345
    %v2386 = vpack.c.b16 %v2354, %v2350
    %v2387 = vpack.c.b16 %v2355, %v2351
    %v2388 = vpack.c.b16 %v2356, %v2352
    %v2389 = vpack.c.b16 %v2357, %v2353
    %2422 = vmatprep.subr.bf16.mxu0 %v2359
    %2423 = vmatpush1.bf16.msra.mxu0 %v2358
    %2424 = vmatprep.subr.bf16.mxu0 %v2363
    %2425 = vmatpush1.bf16.msra.mxu0 %v2362
    %2426 = vmatprep.subr.bf16.mxu0 %v2367
    %2427 = vmatpush1.bf16.msra.mxu0 %v2366
    %2428 = vmatprep.subr.bf16.mxu0 %v2371
    %2429 = vmatpush1.bf16.msra.mxu0 %v2370
    %2430 = vmatprep.subr.bf16.mxu0 %v2375
    %2431 = vmatpush1.bf16.msra.mxu0 %v2374
    %2432 = vmatprep.subr.bf16.mxu0 %v2379
    %2433 = vmatpush1.bf16.msra.mxu0 %v2378
    %2434 = vmatprep.subr.bf16.mxu0 %v2383
    %2435 = vmatpush1.bf16.msra.mxu0 %v2382
    %2436 = vmatprep.subr.bf16.mxu0 %v2387
    %2437 = vmatpush1.bf16.msra.mxu0 %v2386
    %2438 = vmatprep.subr.bf16.mxu0 0
    %2439 = vmatpush1.bf16.msra.mxu0 0
    %2440 = vmatprep.subr.bf16.mxu0 0
    %2441 = vmatpush1.bf16.msra.mxu0 0
    %2442 = vmatprep.subr.bf16.mxu0 0
    %2443 = vmatpush1.bf16.msra.mxu0 0
    %2444 = vmatprep.subr.bf16.mxu0 0
    %2445 = vmatpush1.bf16.msra.mxu0 0
    %2446 = vmatprep.subr.bf16.mxu0 0
    %2447 = vmatpush1.bf16.msra.mxu0 0
    %2448 = vmatprep.subr.bf16.mxu0 0
    %2449 = vmatpush1.bf16.msra.mxu0 0
    %2450 = vmatprep.subr.bf16.mxu0 0
    %2451 = vmatpush1.bf16.msra.mxu0 0
    %2452 = vmatprep.subr.bf16.mxu0 0
    %2453 = vmatpush1.bf16.msra.mxu0 0
    %2454 = vmatprep.mubr.bf16.mxu0 0
    %2455 = vmatmul.mubr.bf16.gmra.mrb[0].mxu0 %v2254
    %v2456 = vpop.f32.mrb[0].mxu0
    %v2457 = vadd.f32 %v2221, %v2456
    %v2458 = vpop.f32.mrb[0].mxu0
    %v2459 = vadd.f32 %v2225, %v2458
    %v2460 = vpop.f32.mrb[0].mxu0
    %v2461 = vadd.f32 %v2221, %v2460
    %v2462 = vpop.f32.mrb[0].mxu0
    %v2463 = vadd.f32 %v2225, %v2462
    %2464 = vmatprep.mubr.bf16.mxu0 0
    %2465 = vmatmul.mubr.bf16.gmra.mrb[0].mxu0 %v2255
    %v2466 = vpop.f32.mrb[0].mxu0
    %v2467 = vadd.f32 %v2221, %v2466
    %v2468 = vpop.f32.mrb[0].mxu0
    %v2469 = vadd.f32 %v2225, %v2468
    %v2470 = vpop.f32.mrb[0].mxu0
    %v2471 = vadd.f32 %v2221, %v2470
    %v2472 = vpop.f32.mrb[0].mxu0
    %v2473 = vadd.f32 %v2225, %v2472
    %2474 = vmatprep.mubr.bf16.mxu0 0
    %2475 = vmatmul.mubr.bf16.gmra.mrb[0].mxu0 %v2256
    %v2476 = vpop.f32.mrb[0].mxu0
    %v2477 = vadd.f32 %v2221, %v2476
    %v2478 = vpop.f32.mrb[0].mxu0
    %v2479 = vadd.f32 %v2225, %v2478
    %v2480 = vpop.f32.mrb[0].mxu0
    %v2481 = vadd.f32 %v2221, %v2480
    %v2482 = vpop.f32.mrb[0].mxu0
    %v2483 = vadd.f32 %v2225, %v2482
    %2484 = vmatprep.mubr.bf16.mxu0 0
    %2485 = vmatmul.mubr.bf16.gmra.mrb[0].mxu0 %v2257
    %v2486 = vpop.f32.mrb[0].mxu0
    %v2487 = vadd.f32 %v2221, %v2486
    %v2488 = vpop.f32.mrb[0].mxu0
    %v2489 = vadd.f32 %v2225, %v2488
    %v2490 = vpop.f32.mrb[0].mxu0
    %v2491 = vadd.f32 %v2221, %v2490
    %v2492 = vpop.f32.mrb[0].mxu0
    %v2493 = vadd.f32 %v2225, %v2492
    %2494 = vdwg.mxu0
    %2495 = vmatprep.subr.bf16.mxu0 %v2361
    %2496 = vmatpush1.bf16.msra.mxu0 %v2360
    %2497 = vmatprep.subr.bf16.mxu0 %v2365
    %2498 = vmatpush1.bf16.msra.mxu0 %v2364
    %2499 = vmatprep.subr.bf16.mxu0 %v2369
    %2500 = vmatpush1.bf16.msra.mxu0 %v2368
    %2501 = vmatprep.subr.bf16.mxu0 %v2373
    %2502 = vmatpush1.bf16.msra.mxu0 %v2372
    %2503 = vmatprep.subr.bf16.mxu0 %v2377
    %2504 = vmatpush1.bf16.msra.mxu0 %v2376
    %2505 = vmatprep.subr.bf16.mxu0 %v2381
    %2506 = vmatpush1.bf16.msra.mxu0 %v2380
    %2507 = vmatprep.subr.bf16.mxu0 %v2385
    %2508 = vmatpush1.bf16.msra.mxu0 %v2384
    %2509 = vmatprep.subr.bf16.mxu0 %v2389
    %2510 = vmatpush1.bf16.msra.mxu0 %v2388
    %2511 = vmatprep.subr.bf16.mxu0 0
    %2512 = vmatpush1.bf16.msra.mxu0 0
    %2513 = vmatprep.subr.bf16.mxu0 0
    %2514 = vmatpush1.bf16.msra.mxu0 0
    %2515 = vmatprep.subr.bf16.mxu0 0
    %2516 = vmatpush1.bf16.msra.mxu0 0
    %2517 = vmatprep.subr.bf16.mxu0 0
    %2518 = vmatpush1.bf16.msra.mxu0 0
    %2519 = vmatprep.subr.bf16.mxu0 0
    %2520 = vmatpush1.bf16.msra.mxu0 0
    %2521 = vmatprep.subr.bf16.mxu0 0
    %2522 = vmatpush1.bf16.msra.mxu0 0
    %2523 = vmatprep.subr.bf16.mxu0 0
    %2524 = vmatpush1.bf16.msra.mxu0 0
    %2525 = vmatprep.subr.bf16.mxu0 0
    %2526 = vmatpush1.bf16.msra.mxu0 0
    %2527 = vmatprep.mubr.bf16.mxu0 0
    %2528 = vmatmul.mubr.bf16.gmra.mrb[0].mxu0 %v2254
    %v2529 = vpop.f32.mrb[0].mxu0
    %v2530 = vadd.f32 %v2229, %v2529
    %v2531 = vpop.f32.mrb[0].mxu0
    %v2532 = vadd.f32 %v2233, %v2531
    %v2533 = vpop.f32.mrb[0].mxu0
    %v2534 = vadd.f32 %v2229, %v2533
    %v2535 = vpop.f32.mrb[0].mxu0
    %v2536 = vadd.f32 %v2233, %v2535
    %2537 = vmatprep.mubr.bf16.mxu0 0
    %2538 = vmatmul.mubr.bf16.gmra.mrb[0].mxu0 %v2255
    %v2539 = vpop.f32.mrb[0].mxu0
    %v2540 = vadd.f32 %v2229, %v2539
    %v2541 = vpop.f32.mrb[0].mxu0
    %v2542 = vadd.f32 %v2233, %v2541
    %v2543 = vpop.f32.mrb[0].mxu0
    %v2544 = vadd.f32 %v2229, %v2543
    %v2545 = vpop.f32.mrb[0].mxu0
    %v2546 = vadd.f32 %v2233, %v2545
    %2547 = vmatprep.mubr.bf16.mxu0 0
    %2548 = vmatmul.mubr.bf16.gmra.mrb[0].mxu0 %v2256
    %v2549 = vpop.f32.mrb[0].mxu0
    %v2550 = vadd.f32 %v2229, %v2549
    %v2551 = vpop.f32.mrb[0].mxu0
    %v2552 = vadd.f32 %v2233, %v2551
    %v2553 = vpop.f32.mrb[0].mxu0
    %v2554 = vadd.f32 %v2229, %v2553
    %v2555 = vpop.f32.mrb[0].mxu0
    %v2556 = vadd.f32 %v2233, %v2555
    %2557 = vmatprep.mubr.bf16.mxu0 0
    %2558 = vmatmul.mubr.bf16.gmra.mrb[0].mxu0 %v2257
    %v2559 = vpop.f32.mrb[0].mxu0
    %v2560 = vadd.f32 %v2229, %v2559
    %v2561 = vpop.f32.mrb[0].mxu0
    %v2562 = vadd.f32 %v2233, %v2561
    %v2563 = vpop.f32.mrb[0].mxu0
    %v2564 = vadd.f32 %v2229, %v2563
    %v2565 = vpop.f32.mrb[0].mxu0
    %v2566 = vadd.f32 %v2233, %v2565
    %2567 = vdwg.mxu0
    %v2568 = vld [vmem:[#allocation9] sm:$0xff]
    %v2569 = vld [vmem:[#allocation9 + $0x8] sm:$0xff]
    %v2570 = vld [vmem:[#allocation9 + $0x10] sm:$0xff]
    %v2571 = vld [vmem:[#allocation9 + $0x18] sm:$0xff]
    %v2572 = vld [vmem:[#allocation9 + $0x20] sm:$0xff]
    %v2573 = vld [vmem:[#allocation9 + $0x28] sm:$0xff]
    %v2574 = vld [vmem:[#allocation9 + $0x30] sm:$0xff]
    %v2575 = vld [vmem:[#allocation9 + $0x38] sm:$0xff]
    %s2576 = scalar_lea.vmem [#allocation9], 64
    %v2577 = vld [vmem:[%s2576] sm:$0xff]
    %v2578 = vld [vmem:[%s2576 + $0x8] sm:$0xff]
    %v2579 = vld [vmem:[%s2576 + $0x10] sm:$0xff]
    %v2580 = vld [vmem:[%s2576 + $0x18] sm:$0xff]
    %v2581 = vld [vmem:[%s2576 + $0x20] sm:$0xff]
    %v2582 = vld [vmem:[%s2576 + $0x28] sm:$0xff]
    %v2583 = vld [vmem:[%s2576 + $0x30] sm:$0xff]
    %v2584 = vld [vmem:[%s2576 + $0x38] sm:$0xff]
    %v2593 = vunpack.c.l.b16 %v2568
    %v2594 = vunpack.c.h.b16 %v2568
    %v2595 = vunpack.c.l.b16 %v2569
    %v2596 = vunpack.c.h.b16 %v2569
    %v2597 = vunpack.c.l.b16 %v2570
    %v2598 = vunpack.c.h.b16 %v2570
    %v2599 = vunpack.c.l.b16 %v2571
    %v2600 = vunpack.c.h.b16 %v2571
    %v2601 = vunpack.c.l.b16 %v2572
    %v2602 = vunpack.c.h.b16 %v2572
    %v2603 = vunpack.c.l.b16 %v2573
    %v2604 = vunpack.c.h.b16 %v2573
    %v2605 = vunpack.c.l.b16 %v2574
    %v2606 = vunpack.c.h.b16 %v2574
    %v2607 = vunpack.c.l.b16 %v2575
    %v2608 = vunpack.c.h.b16 %v2575
    %v2609 = vpack.c.b16 %v2595, %v2593
    %v2610 = vpack.c.b16 %v2596, %v2594
    %v2611 = vpack.c.b16 %v2599, %v2597
    %v2612 = vpack.c.b16 %v2600, %v2598
    %v2613 = vpack.c.b16 %v2603, %v2601
    %v2614 = vpack.c.b16 %v2604, %v2602
    %v2615 = vpack.c.b16 %v2607, %v2605
    %v2616 = vpack.c.b16 %v2608, %v2606
    %2625 = vmatprep.subr.bf16.mxu0 %v2610
    %2626 = vmatpush1.bf16.msra.mxu0 %v2609
    %2627 = vmatprep.subr.bf16.mxu0 %v2612
    %2628 = vmatpush1.bf16.msra.mxu0 %v2611
    %2629 = vmatprep.subr.bf16.mxu0 %v2614
    %2630 = vmatpush1.bf16.msra.mxu0 %v2613
    %2631 = vmatprep.subr.bf16.mxu0 %v2616
    %2632 = vmatpush1.bf16.msra.mxu0 %v2615
    %2633 = vmatprep.subr.bf16.mxu0 0
    %2634 = vmatpush1.bf16.msra.mxu0 0
    %2635 = vmatprep.subr.bf16.mxu0 0
    %2636 = vmatpush1.bf16.msra.mxu0 0
    %2637 = vmatprep.subr.bf16.mxu0 0
    %2638 = vmatpush1.bf16.msra.mxu0 0
    %2639 = vmatprep.subr.bf16.mxu0 0
    %2640 = vmatpush1.bf16.msra.mxu0 0
    %2641 = vmatprep.subr.bf16.mxu0 0
    %2642 = vmatpush1.bf16.msra.mxu0 0
    %2643 = vmatprep.subr.bf16.mxu0 0
    %2644 = vmatpush1.bf16.msra.mxu0 0
    %2645 = vmatprep.subr.bf16.mxu0 0
    %2646 = vmatpush1.bf16.msra.mxu0 0
    %2647 = vmatprep.subr.bf16.mxu0 0
    %2648 = vmatpush1.bf16.msra.mxu0 0
    %2649 = vmatprep.subr.bf16.mxu0 0
    %2650 = vmatpush1.bf16.msra.mxu0 0
    %2651 = vmatprep.subr.bf16.mxu0 0
    %2652 = vmatpush1.bf16.msra.mxu0 0
    %2653 = vmatprep.subr.bf16.mxu0 0
    %2654 = vmatpush1.bf16.msra.mxu0 0
    %2655 = vmatprep.subr.bf16.mxu0 0
    %2656 = vmatpush1.bf16.msra.mxu0 0
    %2657 = vmatprep.mubr.bf16.mxu0 0
    %2658 = vmatmul.mubr.bf16.gmra.mrb[0].mxu0 %v845
    %v2659 = vpop.f32.mrb[0].mxu0
    %v2660 = vadd.f32 0.0, %v2659
    %v2661 = vpop.f32.mrb[0].mxu0
    %v2662 = vadd.f32 0.0, %v2661
    %v2663 = vpop.f32.mrb[0].mxu0
    %v2664 = vpop.f32.mrb[0].mxu0
    %2665 = vdwg.mxu0
    %v2666 = vadd.f32 %v2457, %v2660
    %v2667 = vadd.f32 %v2459, %v2662
    %v2676 = vunpack.c.l.b16 %v2577
    %v2677 = vunpack.c.h.b16 %v2577
    %v2678 = vunpack.c.l.b16 %v2578
    %v2679 = vunpack.c.h.b16 %v2578
    %v2680 = vunpack.c.l.b16 %v2579
    %v2681 = vunpack.c.h.b16 %v2579
    %v2682 = vunpack.c.l.b16 %v2580
    %v2683 = vunpack.c.h.b16 %v2580
    %v2684 = vunpack.c.l.b16 %v2581
    %v2685 = vunpack.c.h.b16 %v2581
    %v2686 = vunpack.c.l.b16 %v2582
    %v2687 = vunpack.c.h.b16 %v2582
    %v2688 = vunpack.c.l.b16 %v2583
    %v2689 = vunpack.c.h.b16 %v2583
    %v2690 = vunpack.c.l.b16 %v2584
    %v2691 = vunpack.c.h.b16 %v2584
    %v2692 = vpack.c.b16 %v2678, %v2676
    %v2693 = vpack.c.b16 %v2679, %v2677
    %v2694 = vpack.c.b16 %v2682, %v2680
    %v2695 = vpack.c.b16 %v2683, %v2681
    %v2696 = vpack.c.b16 %v2686, %v2684
    %v2697 = vpack.c.b16 %v2687, %v2685
    %v2698 = vpack.c.b16 %v2690, %v2688
    %v2699 = vpack.c.b16 %v2691, %v2689
    %2708 = vmatprep.subr.bf16.mxu0 %v2693
    %2709 = vmatpush1.bf16.msra.mxu0 %v2692
    %2710 = vmatprep.subr.bf16.mxu0 %v2695
    %2711 = vmatpush1.bf16.msra.mxu0 %v2694
    %2712 = vmatprep.subr.bf16.mxu0 %v2697
    %2713 = vmatpush1.bf16.msra.mxu0 %v2696
    %2714 = vmatprep.subr.bf16.mxu0 %v2699
    %2715 = vmatpush1.bf16.msra.mxu0 %v2698
    %2716 = vmatprep.subr.bf16.mxu0 0
    %2717 = vmatpush1.bf16.msra.mxu0 0
    %2718 = vmatprep.subr.bf16.mxu0 0
    %2719 = vmatpush1.bf16.msra.mxu0 0
    %2720 = vmatprep.subr.bf16.mxu0 0
    %2721 = vmatpush1.bf16.msra.mxu0 0
    %2722 = vmatprep.subr.bf16.mxu0 0
    %2723 = vmatpush1.bf16.msra.mxu0 0
    %2724 = vmatprep.subr.bf16.mxu0 0
    %2725 = vmatpush1.bf16.msra.mxu0 0
    %2726 = vmatprep.subr.bf16.mxu0 0
    %2727 = vmatpush1.bf16.msra.mxu0 0
    %2728 = vmatprep.subr.bf16.mxu0 0
    %2729 = vmatpush1.bf16.msra.mxu0 0
    %2730 = vmatprep.subr.bf16.mxu0 0
    %2731 = vmatpush1.bf16.msra.mxu0 0
    %2732 = vmatprep.subr.bf16.mxu0 0
    %2733 = vmatpush1.bf16.msra.mxu0 0
    %2734 = vmatprep.subr.bf16.mxu0 0
    %2735 = vmatpush1.bf16.msra.mxu0 0
    %2736 = vmatprep.subr.bf16.mxu0 0
    %2737 = vmatpush1.bf16.msra.mxu0 0
    %2738 = vmatprep.subr.bf16.mxu0 0
    %2739 = vmatpush1.bf16.msra.mxu0 0
    %2740 = vmatprep.mubr.bf16.mxu0 0
    %2741 = vmatmul.mubr.bf16.gmra.mrb[0].mxu0 %v845
    %v2742 = vpop.f32.mrb[0].mxu0
    %v2743 = vadd.f32 0.0, %v2742
    %v2744 = vpop.f32.mrb[0].mxu0
    %v2745 = vadd.f32 0.0, %v2744
    %v2746 = vpop.f32.mrb[0].mxu0
    %v2747 = vpop.f32.mrb[0].mxu0
    %2748 = vdwg.mxu0
    %v2749 = vadd.f32 %v2564, %v2743
    %v2750 = vadd.f32 %v2566, %v2745
    %v2751 = vxor.u32 %v2666, 2147483648
    %v2752 = vxor.u32 %v2667, 2147483648
    %v2753 = vmul.f32 %v2751, 1.442695
    %v2754 = vpow.pop %v2753
    %v2755 = vmul.f32 %v2752, 1.442695
    %v2756 = vpow.pop %v2755
    %v2757 = vadd.f32 %v2754, 1.0
    %v2758 = vadd.f32 %v2756, 1.0
    %v2759 = vrcp.pop %v2757
    %v2760 = vmul.f32 1.0, %v2759
    %v2761 = vrcp.pop %v2758
    %v2762 = vmul.f32 1.0, %v2761
    %v2763 = vxor.u32 %v2749, 2147483648
    %v2764 = vxor.u32 %v2750, 2147483648
    %v2765 = vmul.f32 %v2763, 1.442695
    %v2766 = vpow.pop %v2765
    %v2767 = vmul.f32 %v2764, 1.442695
    %v2768 = vpow.pop %v2767
    %v2769 = vadd.f32 %v2766, 1.0
    %v2770 = vadd.f32 %v2768, 1.0
    %v2771 = vrcp.pop %v2769
    %v2772 = vmul.f32 1.0, %v2771
    %v2773 = vrcp.pop %v2770
    %v2774 = vmul.f32 1.0, %v2773
    %v2775 = vtanh.pop %v2667
    %v2776 = vtanh.pop %v2750
    %v2777 = vmul.f32 %v2760, 0.0
    %2779 = vrot.lane.b32.xlu0 %v2775, 64
    %v2780 = vpop.permute.xlu0 %2779
    %v2782 = vmul.f32 %v2760, %v2780
    %2784 = vrot.lane.b32.xlu0 %v2782, 64
    %v2785 = vpop.permute.xlu0 %2784
    %v2787 = vadd.f32 %v2777, %v2785
    %v2788 = vmul.f32 %v2772, 0.0
    %2790 = vrot.lane.b32.xlu0 %v2776, 64
    %v2791 = vpop.permute.xlu0 %2790
    %v2793 = vmul.f32 %v2772, %v2791
    %2795 = vrot.lane.b32.xlu0 %v2793, 64
    %v2796 = vpop.permute.xlu0 %2795
    %v2798 = vadd.f32 %v2788, %v2796
    %v2799 = vtanh.pop %v2787
    %2801 = vrot.lane.b32.xlu0 %v2799, 64
    %v2802 = vpop.permute.xlu0 %2801
    %v2804 = vmul.f32 %v2762, %v2802
    %v2805 = vtanh.pop %v2798
    %2807 = vrot.lane.b32.xlu0 %v2805, 64
    %v2808 = vpop.permute.xlu0 %2807
    %v2810 = vmul.f32 %v2774, %v2808
    %2811 = vst.msk [vmem:[#allocation2] sm:$0xff] %vm628, %v2804
    %2813 = vrot.lane.b32.xlu0 %v2810, 64
    %v2814 = vpop.permute.xlu0 %2813
    %2816 = vst.msk [vmem:[%s1038] sm:$0xff] %vm1039, %v2814
    %v2817 = vpack.c.bf16 %v2804, %v2804
    %v2819 = vsel %vm628, %v2817, 0
    %2821 = vmatprep.subr.bf16.mxu0 %v2610
    %2822 = vmatpush1.bf16.msra.mxu0 %v2609
    %2823 = vmatprep.subr.bf16.mxu0 %v2612
    %2824 = vmatpush1.bf16.msra.mxu0 %v2611
    %2825 = vmatprep.subr.bf16.mxu0 %v2614
    %2826 = vmatpush1.bf16.msra.mxu0 %v2613
    %2827 = vmatprep.subr.bf16.mxu0 %v2616
    %2828 = vmatpush1.bf16.msra.mxu0 %v2615
    %2829 = vmatprep.subr.bf16.mxu0 0
    %2830 = vmatpush1.bf16.msra.mxu0 0
    %2831 = vmatprep.subr.bf16.mxu0 0
    %2832 = vmatpush1.bf16.msra.mxu0 0
    %2833 = vmatprep.subr.bf16.mxu0 0
    %2834 = vmatpush1.bf16.msra.mxu0 0
    %2835 = vmatprep.subr.bf16.mxu0 0
    %2836 = vmatpush1.bf16.msra.mxu0 0
    %2837 = vmatprep.subr.bf16.mxu0 0
    %2838 = vmatpush1.bf16.msra.mxu0 0
    %2839 = vmatprep.subr.bf16.mxu0 0
    %2840 = vmatpush1.bf16.msra.mxu0 0
    %2841 = vmatprep.subr.bf16.mxu0 0
    %2842 = vmatpush1.bf16.msra.mxu0 0
    %2843 = vmatprep.subr.bf16.mxu0 0
    %2844 = vmatpush1.bf16.msra.mxu0 0
    %2845 = vmatprep.subr.bf16.mxu0 0
    %2846 = vmatpush1.bf16.msra.mxu0 0
    %2847 = vmatprep.subr.bf16.mxu0 0
    %2848 = vmatpush1.bf16.msra.mxu0 0
    %2849 = vmatprep.subr.bf16.mxu0 0
    %2850 = vmatpush1.bf16.msra.mxu0 0
    %2851 = vmatprep.subr.bf16.mxu0 0
    %2852 = vmatpush1.bf16.msra.mxu0 0
    %2853 = vmatprep.mubr.bf16.mxu0 0
    %2854 = vmatmul.mubr.bf16.gmra.mrb[0].mxu0 %v2819
    %v2855 = vpop.f32.mrb[0].mxu0
    %v2856 = vadd.f32 0.0, %v2855
    %v2857 = vpop.f32.mrb[0].mxu0
    %v2858 = vadd.f32 0.0, %v2857
    %v2859 = vpop.f32.mrb[0].mxu0
    %v2860 = vpop.f32.mrb[0].mxu0
    %2861 = vdwg.mxu0
    %v2862 = vadd.f32 %v2461, %v2856
    %v2863 = vadd.f32 %v2463, %v2858
    %v2864 = vpack.c.bf16 %v2810, %v2810
    %v2866 = vsel %vm628, %v2864, 0
    %2868 = vmatprep.subr.bf16.mxu0 %v2693
    %2869 = vmatpush1.bf16.msra.mxu0 %v2692
    %2870 = vmatprep.subr.bf16.mxu0 %v2695
    %2871 = vmatpush1.bf16.msra.mxu0 %v2694
    %2872 = vmatprep.subr.bf16.mxu0 %v2697
    %2873 = vmatpush1.bf16.msra.mxu0 %v2696
    %2874 = vmatprep.subr.bf16.mxu0 %v2699
    %2875 = vmatpush1.bf16.msra.mxu0 %v2698
    %2876 = vmatprep.subr.bf16.mxu0 0
    %2877 = vmatpush1.bf16.msra.mxu0 0
    %2878 = vmatprep.subr.bf16.mxu0 0
    %2879 = vmatpush1.bf16.msra.mxu0 0
    %2880 = vmatprep.subr.bf16.mxu0 0
    %2881 = vmatpush1.bf16.msra.mxu0 0
    %2882 = vmatprep.subr.bf16.mxu0 0
    %2883 = vmatpush1.bf16.msra.mxu0 0
    %2884 = vmatprep.subr.bf16.mxu0 0
    %2885 = vmatpush1.bf16.msra.mxu0 0
    %2886 = vmatprep.subr.bf16.mxu0 0
    %2887 = vmatpush1.bf16.msra.mxu0 0
    %2888 = vmatprep.subr.bf16.mxu0 0
    %2889 = vmatpush1.bf16.msra.mxu0 0
    %2890 = vmatprep.subr.bf16.mxu0 0
    %2891 = vmatpush1.bf16.msra.mxu0 0
    %2892 = vmatprep.subr.bf16.mxu0 0
    %2893 = vmatpush1.bf16.msra.mxu0 0
    %2894 = vmatprep.subr.bf16.mxu0 0
    %2895 = vmatpush1.bf16.msra.mxu0 0
    %2896 = vmatprep.subr.bf16.mxu0 0
    %2897 = vmatpush1.bf16.msra.mxu0 0
    %2898 = vmatprep.subr.bf16.mxu0 0
    %2899 = vmatpush1.bf16.msra.mxu0 0
    %2900 = vmatprep.mubr.bf16.mxu0 0
    %2901 = vmatmul.mubr.bf16.gmra.mrb[0].mxu0 %v2866
    %v2902 = vpop.f32.mrb[0].mxu0
    %v2903 = vadd.f32 0.0, %v2902
    %v2904 = vpop.f32.mrb[0].mxu0
    %v2905 = vadd.f32 0.0, %v2904
    %v2906 = vpop.f32.mrb[0].mxu0
    %v2907 = vpop.f32.mrb[0].mxu0
    %2908 = vdwg.mxu0
    %v2909 = vadd.f32 %v2560, %v2903
    %v2910 = vadd.f32 %v2562, %v2905
    %v2911 = vxor.u32 %v2862, 2147483648
    %v2912 = vxor.u32 %v2863, 2147483648
    %v2913 = vmul.f32 %v2911, 1.442695
    %v2914 = vpow.pop %v2913
    %v2915 = vmul.f32 %v2912, 1.442695
    %v2916 = vpow.pop %v2915
    %v2917 = vadd.f32 %v2914, 1.0
    %v2918 = vadd.f32 %v2916, 1.0
    %v2919 = vrcp.pop %v2917
    %v2920 = vmul.f32 1.0, %v2919
    %v2921 = vrcp.pop %v2918
    %v2922 = vmul.f32 1.0, %v2921
    %v2923 = vxor.u32 %v2909, 2147483648
    %v2924 = vxor.u32 %v2910, 2147483648
    %v2925 = vmul.f32 %v2923, 1.442695
    %v2926 = vpow.pop %v2925
    %v2927 = vmul.f32 %v2924, 1.442695
    %v2928 = vpow.pop %v2927
    %v2929 = vadd.f32 %v2926, 1.0
    %v2930 = vadd.f32 %v2928, 1.0
    %v2931 = vrcp.pop %v2929
    %v2932 = vmul.f32 1.0, %v2931
    %v2933 = vrcp.pop %v2930
    %v2934 = vmul.f32 1.0, %v2933
    %v2935 = vtanh.pop %v2863
    %v2936 = vtanh.pop %v2910
    %v2937 = vmul.f32 %v2920, %v2787
    %2939 = vrot.lane.b32.xlu0 %v2935, 64
    %v2940 = vpop.permute.xlu0 %2939
    %v2942 = vmul.f32 %v2920, %v2940
    %2944 = vrot.lane.b32.xlu0 %v2942, 64
    %v2945 = vpop.permute.xlu0 %2944
    %v2947 = vadd.f32 %v2937, %v2945
    %v2948 = vmul.f32 %v2932, %v2798
    %2950 = vrot.lane.b32.xlu0 %v2936, 64
    %v2951 = vpop.permute.xlu0 %2950
    %v2953 = vmul.f32 %v2932, %v2951
    %2955 = vrot.lane.b32.xlu0 %v2953, 64
    %v2956 = vpop.permute.xlu0 %2955
    %v2958 = vadd.f32 %v2948, %v2956
    %v2959 = vtanh.pop %v2947
    %2961 = vrot.lane.b32.xlu0 %v2959, 64
    %v2962 = vpop.permute.xlu0 %2961
    %v2964 = vmul.f32 %v2922, %v2962
    %v2965 = vtanh.pop %v2958
    %2967 = vrot.lane.b32.xlu0 %v2965, 64
    %v2968 = vpop.permute.xlu0 %2967
    %v2970 = vmul.f32 %v2934, %v2968
    %2971 = vst.msk [vmem:[%s1195] sm:$0xff] %vm628, %v2964
    %2973 = vrot.lane.b32.xlu0 %v2970, 64
    %v2974 = vpop.permute.xlu0 %2973
    %2976 = vst.msk [vmem:[%s1201] sm:$0xff] %vm1039, %v2974
    %v2977 = vpack.c.bf16 %v2964, %v2964
    %v2979 = vsel %vm628, %v2977, 0
    %2981 = vmatprep.subr.bf16.mxu0 %v2610
    %2982 = vmatpush1.bf16.msra.mxu0 %v2609
    %2983 = vmatprep.subr.bf16.mxu0 %v2612
    %2984 = vmatpush1.bf16.msra.mxu0 %v2611
    %2985 = vmatprep.subr.bf16.mxu0 %v2614
    %2986 = vmatpush1.bf16.msra.mxu0 %v2613
    %2987 = vmatprep.subr.bf16.mxu0 %v2616
    %2988 = vmatpush1.bf16.msra.mxu0 %v2615
    %2989 = vmatprep.subr.bf16.mxu0 0
    %2990 = vmatpush1.bf16.msra.mxu0 0
    %2991 = vmatprep.subr.bf16.mxu0 0
    %2992 = vmatpush1.bf16.msra.mxu0 0
    %2993 = vmatprep.subr.bf16.mxu0 0
    %2994 = vmatpush1.bf16.msra.mxu0 0
    %2995 = vmatprep.subr.bf16.mxu0 0
    %2996 = vmatpush1.bf16.msra.mxu0 0
    %2997 = vmatprep.subr.bf16.mxu0 0
    %2998 = vmatpush1.bf16.msra.mxu0 0
    %2999 = vmatprep.subr.bf16.mxu0 0
    %3000 = vmatpush1.bf16.msra.mxu0 0
    %3001 = vmatprep.subr.bf16.mxu0 0
    %3002 = vmatpush1.bf16.msra.mxu0 0
    %3003 = vmatprep.subr.bf16.mxu0 0
    %3004 = vmatpush1.bf16.msra.mxu0 0
    %3005 = vmatprep.subr.bf16.mxu0 0
    %3006 = vmatpush1.bf16.msra.mxu0 0
    %3007 = vmatprep.subr.bf16.mxu0 0
    %3008 = vmatpush1.bf16.msra.mxu0 0
    %3009 = vmatprep.subr.bf16.mxu0 0
    %3010 = vmatpush1.bf16.msra.mxu0 0
    %3011 = vmatprep.subr.bf16.mxu0 0
    %3012 = vmatpush1.bf16.msra.mxu0 0
    %3013 = vmatprep.mubr.bf16.mxu0 0
    %3014 = vmatmul.mubr.bf16.gmra.mrb[0].mxu0 %v2979
    %v3015 = vpop.f32.mrb[0].mxu0
    %v3016 = vadd.f32 0.0, %v3015
    %v3017 = vpop.f32.mrb[0].mxu0
    %v3018 = vadd.f32 0.0, %v3017
    %v3019 = vpop.f32.mrb[0].mxu0
    %v3020 = vpop.f32.mrb[0].mxu0
    %3021 = vdwg.mxu0
    %v3022 = vadd.f32 %v2467, %v3016
    %v3023 = vadd.f32 %v2469, %v3018
    %v3024 = vpack.c.bf16 %v2970, %v2970
    %v3026 = vsel %vm628, %v3024, 0
    %3028 = vmatprep.subr.bf16.mxu0 %v2693
    %3029 = vmatpush1.bf16.msra.mxu0 %v2692
    %3030 = vmatprep.subr.bf16.mxu0 %v2695
    %3031 = vmatpush1.bf16.msra.mxu0 %v2694
    %3032 = vmatprep.subr.bf16.mxu0 %v2697
    %3033 = vmatpush1.bf16.msra.mxu0 %v2696
    %3034 = vmatprep.subr.bf16.mxu0 %v2699
    %3035 = vmatpush1.bf16.msra.mxu0 %v2698
    %3036 = vmatprep.subr.bf16.mxu0 0
    %3037 = vmatpush1.bf16.msra.mxu0 0
    %3038 = vmatprep.subr.bf16.mxu0 0
    %3039 = vmatpush1.bf16.msra.mxu0 0
    %3040 = vmatprep.subr.bf16.mxu0 0
    %3041 = vmatpush1.bf16.msra.mxu0 0
    %3042 = vmatprep.subr.bf16.mxu0 0
    %3043 = vmatpush1.bf16.msra.mxu0 0
    %3044 = vmatprep.subr.bf16.mxu0 0
    %3045 = vmatpush1.bf16.msra.mxu0 0
    %3046 = vmatprep.subr.bf16.mxu0 0
    %3047 = vmatpush1.bf16.msra.mxu0 0
    %3048 = vmatprep.subr.bf16.mxu0 0
    %3049 = vmatpush1.bf16.msra.mxu0 0
    %3050 = vmatprep.subr.bf16.mxu0 0
    %3051 = vmatpush1.bf16.msra.mxu0 0
    %3052 = vmatprep.subr.bf16.mxu0 0
    %3053 = vmatpush1.bf16.msra.mxu0 0
    %3054 = vmatprep.subr.bf16.mxu0 0
    %3055 = vmatpush1.bf16.msra.mxu0 0
    %3056 = vmatprep.subr.bf16.mxu0 0
    %3057 = vmatpush1.bf16.msra.mxu0 0
    %3058 = vmatprep.subr.bf16.mxu0 0
    %3059 = vmatpush1.bf16.msra.mxu0 0
    %3060 = vmatprep.mubr.bf16.mxu0 0
    %3061 = vmatmul.mubr.bf16.gmra.mrb[0].mxu0 %v3026
    %v3062 = vpop.f32.mrb[0].mxu0
    %v3063 = vadd.f32 0.0, %v3062
    %v3064 = vpop.f32.mrb[0].mxu0
    %v3065 = vadd.f32 0.0, %v3064
    %v3066 = vpop.f32.mrb[0].mxu0
    %v3067 = vpop.f32.mrb[0].mxu0
    %3068 = vdwg.mxu0
    %v3069 = vadd.f32 %v2554, %v3063
    %v3070 = vadd.f32 %v2556, %v3065
    %v3071 = vxor.u32 %v3022, 2147483648
    %v3072 = vxor.u32 %v3023, 2147483648
    %v3073 = vmul.f32 %v3071, 1.442695
    %v3074 = vpow.pop %v3073
    %v3075 = vmul.f32 %v3072, 1.442695
    %v3076 = vpow.pop %v3075
    %v3077 = vadd.f32 %v3074, 1.0
    %v3078 = vadd.f32 %v3076, 1.0
    %v3079 = vrcp.pop %v3077
    %v3080 = vmul.f32 1.0, %v3079
    %v3081 = vrcp.pop %v3078
    %v3082 = vmul.f32 1.0, %v3081
    %v3083 = vxor.u32 %v3069, 2147483648
    %v3084 = vxor.u32 %v3070, 2147483648
    %v3085 = vmul.f32 %v3083, 1.442695
    %v3086 = vpow.pop %v3085
    %v3087 = vmul.f32 %v3084, 1.442695
    %v3088 = vpow.pop %v3087
    %v3089 = vadd.f32 %v3086, 1.0
    %v3090 = vadd.f32 %v3088, 1.0
    %v3091 = vrcp.pop %v3089
    %v3092 = vmul.f32 1.0, %v3091
    %v3093 = vrcp.pop %v3090
    %v3094 = vmul.f32 1.0, %v3093
    %v3095 = vtanh.pop %v3023
    %v3096 = vtanh.pop %v3070
    %v3097 = vmul.f32 %v3080, %v2947
    %3099 = vrot.lane.b32.xlu0 %v3095, 64
    %v3100 = vpop.permute.xlu0 %3099
    %v3102 = vmul.f32 %v3080, %v3100
    %3104 = vrot.lane.b32.xlu0 %v3102, 64
    %v3105 = vpop.permute.xlu0 %3104
    %v3107 = vadd.f32 %v3097, %v3105
    %v3108 = vmul.f32 %v3092, %v2958
    %3110 = vrot.lane.b32.xlu0 %v3096, 64
    %v3111 = vpop.permute.xlu0 %3110
    %v3113 = vmul.f32 %v3092, %v3111
    %3115 = vrot.lane.b32.xlu0 %v3113, 64
    %v3116 = vpop.permute.xlu0 %3115
    %v3118 = vadd.f32 %v3108, %v3116
    %v3119 = vtanh.pop %v3107
    %3121 = vrot.lane.b32.xlu0 %v3119, 64
    %v3122 = vpop.permute.xlu0 %3121
    %v3124 = vmul.f32 %v3082, %v3122
    %v3125 = vtanh.pop %v3118
    %3127 = vrot.lane.b32.xlu0 %v3125, 64
    %v3128 = vpop.permute.xlu0 %3127
    %v3130 = vmul.f32 %v3094, %v3128
    %3131 = vst.msk [vmem:[%s1357] sm:$0xff] %vm628, %v3124
    %3133 = vrot.lane.b32.xlu0 %v3130, 64
    %v3134 = vpop.permute.xlu0 %3133
    %3136 = vst.msk [vmem:[%s1363] sm:$0xff] %vm1039, %v3134
    %v3137 = vpack.c.bf16 %v3124, %v3124
    %v3139 = vsel %vm628, %v3137, 0
    %3141 = vmatprep.subr.bf16.mxu0 %v2610
    %3142 = vmatpush1.bf16.msra.mxu0 %v2609
    %3143 = vmatprep.subr.bf16.mxu0 %v2612
    %3144 = vmatpush1.bf16.msra.mxu0 %v2611
    %3145 = vmatprep.subr.bf16.mxu0 %v2614
    %3146 = vmatpush1.bf16.msra.mxu0 %v2613
    %3147 = vmatprep.subr.bf16.mxu0 %v2616
    %3148 = vmatpush1.bf16.msra.mxu0 %v2615
    %3149 = vmatprep.subr.bf16.mxu0 0
    %3150 = vmatpush1.bf16.msra.mxu0 0
    %3151 = vmatprep.subr.bf16.mxu0 0
    %3152 = vmatpush1.bf16.msra.mxu0 0
    %3153 = vmatprep.subr.bf16.mxu0 0
    %3154 = vmatpush1.bf16.msra.mxu0 0
    %3155 = vmatprep.subr.bf16.mxu0 0
    %3156 = vmatpush1.bf16.msra.mxu0 0
    %3157 = vmatprep.subr.bf16.mxu0 0
    %3158 = vmatpush1.bf16.msra.mxu0 0
    %3159 = vmatprep.subr.bf16.mxu0 0
    %3160 = vmatpush1.bf16.msra.mxu0 0
    %3161 = vmatprep.subr.bf16.mxu0 0
    %3162 = vmatpush1.bf16.msra.mxu0 0
    %3163 = vmatprep.subr.bf16.mxu0 0
    %3164 = vmatpush1.bf16.msra.mxu0 0
    %3165 = vmatprep.subr.bf16.mxu0 0
    %3166 = vmatpush1.bf16.msra.mxu0 0
    %3167 = vmatprep.subr.bf16.mxu0 0
    %3168 = vmatpush1.bf16.msra.mxu0 0
    %3169 = vmatprep.subr.bf16.mxu0 0
    %3170 = vmatpush1.bf16.msra.mxu0 0
    %3171 = vmatprep.subr.bf16.mxu0 0
    %3172 = vmatpush1.bf16.msra.mxu0 0
    %3173 = vmatprep.mubr.bf16.mxu0 0
    %3174 = vmatmul.mubr.bf16.gmra.mrb[0].mxu0 %v3139
    %v3175 = vpop.f32.mrb[0].mxu0
    %v3176 = vadd.f32 0.0, %v3175
    %v3177 = vpop.f32.mrb[0].mxu0
    %v3178 = vadd.f32 0.0, %v3177
    %v3179 = vpop.f32.mrb[0].mxu0
    %v3180 = vpop.f32.mrb[0].mxu0
    %3181 = vdwg.mxu0
    %v3182 = vadd.f32 %v2471, %v3176
    %v3183 = vadd.f32 %v2473, %v3178
    %v3184 = vpack.c.bf16 %v3130, %v3130
    %v3186 = vsel %vm628, %v3184, 0
    %3188 = vmatprep.subr.bf16.mxu0 %v2693
    %3189 = vmatpush1.bf16.msra.mxu0 %v2692
    %3190 = vmatprep.subr.bf16.mxu0 %v2695
    %3191 = vmatpush1.bf16.msra.mxu0 %v2694
    %3192 = vmatprep.subr.bf16.mxu0 %v2697
    %3193 = vmatpush1.bf16.msra.mxu0 %v2696
    %3194 = vmatprep.subr.bf16.mxu0 %v2699
    %3195 = vmatpush1.bf16.msra.mxu0 %v2698
    %3196 = vmatprep.subr.bf16.mxu0 0
    %3197 = vmatpush1.bf16.msra.mxu0 0
    %3198 = vmatprep.subr.bf16.mxu0 0
    %3199 = vmatpush1.bf16.msra.mxu0 0
    %3200 = vmatprep.subr.bf16.mxu0 0
    %3201 = vmatpush1.bf16.msra.mxu0 0
    %3202 = vmatprep.subr.bf16.mxu0 0
    %3203 = vmatpush1.bf16.msra.mxu0 0
    %3204 = vmatprep.subr.bf16.mxu0 0
    %3205 = vmatpush1.bf16.msra.mxu0 0
    %3206 = vmatprep.subr.bf16.mxu0 0
    %3207 = vmatpush1.bf16.msra.mxu0 0
    %3208 = vmatprep.subr.bf16.mxu0 0
    %3209 = vmatpush1.bf16.msra.mxu0 0
    %3210 = vmatprep.subr.bf16.mxu0 0
    %3211 = vmatpush1.bf16.msra.mxu0 0
    %3212 = vmatprep.subr.bf16.mxu0 0
    %3213 = vmatpush1.bf16.msra.mxu0 0
    %3214 = vmatprep.subr.bf16.mxu0 0
    %3215 = vmatpush1.bf16.msra.mxu0 0
    %3216 = vmatprep.subr.bf16.mxu0 0
    %3217 = vmatpush1.bf16.msra.mxu0 0
    %3218 = vmatprep.subr.bf16.mxu0 0
    %3219 = vmatpush1.bf16.msra.mxu0 0
    %3220 = vmatprep.mubr.bf16.mxu0 0
    %3221 = vmatmul.mubr.bf16.gmra.mrb[0].mxu0 %v3186
    %v3222 = vpop.f32.mrb[0].mxu0
    %v3223 = vadd.f32 0.0, %v3222
    %v3224 = vpop.f32.mrb[0].mxu0
    %v3225 = vadd.f32 0.0, %v3224
    %v3226 = vpop.f32.mrb[0].mxu0
    %v3227 = vpop.f32.mrb[0].mxu0
    %3228 = vdwg.mxu0
    %v3229 = vadd.f32 %v2550, %v3223
    %v3230 = vadd.f32 %v2552, %v3225
    %v3231 = vxor.u32 %v3182, 2147483648
    %v3232 = vxor.u32 %v3183, 2147483648
    %v3233 = vmul.f32 %v3231, 1.442695
    %v3234 = vpow.pop %v3233
    %v3235 = vmul.f32 %v3232, 1.442695
    %v3236 = vpow.pop %v3235
    %v3237 = vadd.f32 %v3234, 1.0
    %v3238 = vadd.f32 %v3236, 1.0
    %v3239 = vrcp.pop %v3237
    %v3240 = vmul.f32 1.0, %v3239
    %v3241 = vrcp.pop %v3238
    %v3242 = vmul.f32 1.0, %v3241
    %v3243 = vxor.u32 %v3229, 2147483648
    %v3244 = vxor.u32 %v3230, 2147483648
    %v3245 = vmul.f32 %v3243, 1.442695
    %v3246 = vpow.pop %v3245
    %v3247 = vmul.f32 %v3244, 1.442695
    %v3248 = vpow.pop %v3247
    %v3249 = vadd.f32 %v3246, 1.0
    %v3250 = vadd.f32 %v3248, 1.0
    %v3251 = vrcp.pop %v3249
    %v3252 = vmul.f32 1.0, %v3251
    %v3253 = vrcp.pop %v3250
    %v3254 = vmul.f32 1.0, %v3253
    %v3255 = vtanh.pop %v3183
    %v3256 = vtanh.pop %v3230
    %v3257 = vmul.f32 %v3240, %v3107
    %3259 = vrot.lane.b32.xlu0 %v3255, 64
    %v3260 = vpop.permute.xlu0 %3259
    %v3262 = vmul.f32 %v3240, %v3260
    %3264 = vrot.lane.b32.xlu0 %v3262, 64
    %v3265 = vpop.permute.xlu0 %3264
    %v3267 = vadd.f32 %v3257, %v3265
    %v3268 = vmul.f32 %v3252, %v3118
    %3270 = vrot.lane.b32.xlu0 %v3256, 64
    %v3271 = vpop.permute.xlu0 %3270
    %v3273 = vmul.f32 %v3252, %v3271
    %3275 = vrot.lane.b32.xlu0 %v3273, 64
    %v3276 = vpop.permute.xlu0 %3275
    %v3278 = vadd.f32 %v3268, %v3276
    %v3279 = vtanh.pop %v3267
    %3281 = vrot.lane.b32.xlu0 %v3279, 64
    %v3282 = vpop.permute.xlu0 %3281
    %v3284 = vmul.f32 %v3242, %v3282
    %v3285 = vtanh.pop %v3278
    %3287 = vrot.lane.b32.xlu0 %v3285, 64
    %v3288 = vpop.permute.xlu0 %3287
    %v3290 = vmul.f32 %v3254, %v3288
    %3291 = vst.msk [vmem:[%s1519] sm:$0xff] %vm628, %v3284
    %3293 = vrot.lane.b32.xlu0 %v3290, 64
    %v3294 = vpop.permute.xlu0 %3293
    %3296 = vst.msk [vmem:[%s1525] sm:$0xff] %vm1039, %v3294
    %v3297 = vpack.c.bf16 %v3284, %v3284
    %v3299 = vsel %vm628, %v3297, 0
    %3301 = vmatprep.subr.bf16.mxu0 %v2610
    %3302 = vmatpush1.bf16.msra.mxu0 %v2609
    %3303 = vmatprep.subr.bf16.mxu0 %v2612
    %3304 = vmatpush1.bf16.msra.mxu0 %v2611
    %3305 = vmatprep.subr.bf16.mxu0 %v2614
    %3306 = vmatpush1.bf16.msra.mxu0 %v2613
    %3307 = vmatprep.subr.bf16.mxu0 %v2616
    %3308 = vmatpush1.bf16.msra.mxu0 %v2615
    %3309 = vmatprep.subr.bf16.mxu0 0
    %3310 = vmatpush1.bf16.msra.mxu0 0
    %3311 = vmatprep.subr.bf16.mxu0 0
    %3312 = vmatpush1.bf16.msra.mxu0 0
    %3313 = vmatprep.subr.bf16.mxu0 0
    %3314 = vmatpush1.bf16.msra.mxu0 0
    %3315 = vmatprep.subr.bf16.mxu0 0
    %3316 = vmatpush1.bf16.msra.mxu0 0
    %3317 = vmatprep.subr.bf16.mxu0 0
    %3318 = vmatpush1.bf16.msra.mxu0 0
    %3319 = vmatprep.subr.bf16.mxu0 0
    %3320 = vmatpush1.bf16.msra.mxu0 0
    %3321 = vmatprep.subr.bf16.mxu0 0
    %3322 = vmatpush1.bf16.msra.mxu0 0
    %3323 = vmatprep.subr.bf16.mxu0 0
    %3324 = vmatpush1.bf16.msra.mxu0 0
    %3325 = vmatprep.subr.bf16.mxu0 0
    %3326 = vmatpush1.bf16.msra.mxu0 0
    %3327 = vmatprep.subr.bf16.mxu0 0
    %3328 = vmatpush1.bf16.msra.mxu0 0
    %3329 = vmatprep.subr.bf16.mxu0 0
    %3330 = vmatpush1.bf16.msra.mxu0 0
    %3331 = vmatprep.subr.bf16.mxu0 0
    %3332 = vmatpush1.bf16.msra.mxu0 0
    %3333 = vmatprep.mubr.bf16.mxu0 0
    %3334 = vmatmul.mubr.bf16.gmra.mrb[0].mxu0 %v3299
    %v3335 = vpop.f32.mrb[0].mxu0
    %v3336 = vadd.f32 0.0, %v3335
    %v3337 = vpop.f32.mrb[0].mxu0
    %v3338 = vadd.f32 0.0, %v3337
    %v3339 = vpop.f32.mrb[0].mxu0
    %v3340 = vpop.f32.mrb[0].mxu0
    %3341 = vdwg.mxu0
    %v3342 = vadd.f32 %v2477, %v3336
    %v3343 = vadd.f32 %v2479, %v3338
    %v3344 = vpack.c.bf16 %v3290, %v3290
    %v3346 = vsel %vm628, %v3344, 0
    %3348 = vmatprep.subr.bf16.mxu0 %v2693
    %3349 = vmatpush1.bf16.msra.mxu0 %v2692
    %3350 = vmatprep.subr.bf16.mxu0 %v2695
    %3351 = vmatpush1.bf16.msra.mxu0 %v2694
    %3352 = vmatprep.subr.bf16.mxu0 %v2697
    %3353 = vmatpush1.bf16.msra.mxu0 %v2696
    %3354 = vmatprep.subr.bf16.mxu0 %v2699
    %3355 = vmatpush1.bf16.msra.mxu0 %v2698
    %3356 = vmatprep.subr.bf16.mxu0 0
    %3357 = vmatpush1.bf16.msra.mxu0 0
    %3358 = vmatprep.subr.bf16.mxu0 0
    %3359 = vmatpush1.bf16.msra.mxu0 0
    %3360 = vmatprep.subr.bf16.mxu0 0
    %3361 = vmatpush1.bf16.msra.mxu0 0
    %3362 = vmatprep.subr.bf16.mxu0 0
    %3363 = vmatpush1.bf16.msra.mxu0 0
    %3364 = vmatprep.subr.bf16.mxu0 0
    %3365 = vmatpush1.bf16.msra.mxu0 0
    %3366 = vmatprep.subr.bf16.mxu0 0
    %3367 = vmatpush1.bf16.msra.mxu0 0
    %3368 = vmatprep.subr.bf16.mxu0 0
    %3369 = vmatpush1.bf16.msra.mxu0 0
    %3370 = vmatprep.subr.bf16.mxu0 0
    %3371 = vmatpush1.bf16.msra.mxu0 0
    %3372 = vmatprep.subr.bf16.mxu0 0
    %3373 = vmatpush1.bf16.msra.mxu0 0
    %3374 = vmatprep.subr.bf16.mxu0 0
    %3375 = vmatpush1.bf16.msra.mxu0 0
    %3376 = vmatprep.subr.bf16.mxu0 0
    %3377 = vmatpush1.bf16.msra.mxu0 0
    %3378 = vmatprep.subr.bf16.mxu0 0
    %3379 = vmatpush1.bf16.msra.mxu0 0
    %3380 = vmatprep.mubr.bf16.mxu0 0
    %3381 = vmatmul.mubr.bf16.gmra.mrb[0].mxu0 %v3346
    %v3382 = vpop.f32.mrb[0].mxu0
    %v3383 = vadd.f32 0.0, %v3382
    %v3384 = vpop.f32.mrb[0].mxu0
    %v3385 = vadd.f32 0.0, %v3384
    %v3386 = vpop.f32.mrb[0].mxu0
    %v3387 = vpop.f32.mrb[0].mxu0
    %3388 = vdwg.mxu0
    %v3389 = vadd.f32 %v2544, %v3383
    %v3390 = vadd.f32 %v2546, %v3385
    %v3391 = vxor.u32 %v3342, 2147483648
    %v3392 = vxor.u32 %v3343, 2147483648
    %v3393 = vmul.f32 %v3391, 1.442695
    %v3394 = vpow.pop %v3393
    %v3395 = vmul.f32 %v3392, 1.442695
    %v3396 = vpow.pop %v3395
    %v3397 = vadd.f32 %v3394, 1.0
    %v3398 = vadd.f32 %v3396, 1.0
    %v3399 = vrcp.pop %v3397
    %v3400 = vmul.f32 1.0, %v3399
    %v3401 = vrcp.pop %v3398
    %v3402 = vmul.f32 1.0, %v3401
    %v3403 = vxor.u32 %v3389, 2147483648
    %v3404 = vxor.u32 %v3390, 2147483648
    %v3405 = vmul.f32 %v3403, 1.442695
    %v3406 = vpow.pop %v3405
    %v3407 = vmul.f32 %v3404, 1.442695
    %v3408 = vpow.pop %v3407
    %v3409 = vadd.f32 %v3406, 1.0
    %v3410 = vadd.f32 %v3408, 1.0
    %v3411 = vrcp.pop %v3409
    %v3412 = vmul.f32 1.0, %v3411
    %v3413 = vrcp.pop %v3410
    %v3414 = vmul.f32 1.0, %v3413
    %v3415 = vtanh.pop %v3343
    %v3416 = vtanh.pop %v3390
    %v3417 = vmul.f32 %v3400, %v3267
    %3419 = vrot.lane.b32.xlu0 %v3415, 64
    %v3420 = vpop.permute.xlu0 %3419
    %v3422 = vmul.f32 %v3400, %v3420
    %3424 = vrot.lane.b32.xlu0 %v3422, 64
    %v3425 = vpop.permute.xlu0 %3424
    %v3427 = vadd.f32 %v3417, %v3425
    %v3428 = vmul.f32 %v3412, %v3278
    %3430 = vrot.lane.b32.xlu0 %v3416, 64
    %v3431 = vpop.permute.xlu0 %3430
    %v3433 = vmul.f32 %v3412, %v3431
    %3435 = vrot.lane.b32.xlu0 %v3433, 64
    %v3436 = vpop.permute.xlu0 %3435
    %v3438 = vadd.f32 %v3428, %v3436
    %v3439 = vtanh.pop %v3427
    %3441 = vrot.lane.b32.xlu0 %v3439, 64
    %v3442 = vpop.permute.xlu0 %3441
    %v3444 = vmul.f32 %v3402, %v3442
    %v3445 = vtanh.pop %v3438
    %3447 = vrot.lane.b32.xlu0 %v3445, 64
    %v3448 = vpop.permute.xlu0 %3447
    %v3450 = vmul.f32 %v3414, %v3448
    %3451 = vst.msk [vmem:[%s1525] sm:$0xff] %vm628, %v3444
    %3453 = vrot.lane.b32.xlu0 %v3450, 64
    %v3454 = vpop.permute.xlu0 %3453
    %3456 = vst.msk [vmem:[%s1519] sm:$0xff] %vm1039, %v3454
    %v3457 = vpack.c.bf16 %v3444, %v3444
    %v3459 = vsel %vm628, %v3457, 0
    %3461 = vmatprep.subr.bf16.mxu0 %v2610
    %3462 = vmatpush1.bf16.msra.mxu0 %v2609
    %3463 = vmatprep.subr.bf16.mxu0 %v2612
    %3464 = vmatpush1.bf16.msra.mxu0 %v2611
    %3465 = vmatprep.subr.bf16.mxu0 %v2614
    %3466 = vmatpush1.bf16.msra.mxu0 %v2613
    %3467 = vmatprep.subr.bf16.mxu0 %v2616
    %3468 = vmatpush1.bf16.msra.mxu0 %v2615
    %3469 = vmatprep.subr.bf16.mxu0 0
    %3470 = vmatpush1.bf16.msra.mxu0 0
    %3471 = vmatprep.subr.bf16.mxu0 0
    %3472 = vmatpush1.bf16.msra.mxu0 0
    %3473 = vmatprep.subr.bf16.mxu0 0
    %3474 = vmatpush1.bf16.msra.mxu0 0
    %3475 = vmatprep.subr.bf16.mxu0 0
    %3476 = vmatpush1.bf16.msra.mxu0 0
    %3477 = vmatprep.subr.bf16.mxu0 0
    %3478 = vmatpush1.bf16.msra.mxu0 0
    %3479 = vmatprep.subr.bf16.mxu0 0
    %3480 = vmatpush1.bf16.msra.mxu0 0
    %3481 = vmatprep.subr.bf16.mxu0 0
    %3482 = vmatpush1.bf16.msra.mxu0 0
    %3483 = vmatprep.subr.bf16.mxu0 0
    %3484 = vmatpush1.bf16.msra.mxu0 0
    %3485 = vmatprep.subr.bf16.mxu0 0
    %3486 = vmatpush1.bf16.msra.mxu0 0
    %3487 = vmatprep.subr.bf16.mxu0 0
    %3488 = vmatpush1.bf16.msra.mxu0 0
    %3489 = vmatprep.subr.bf16.mxu0 0
    %3490 = vmatpush1.bf16.msra.mxu0 0
    %3491 = vmatprep.subr.bf16.mxu0 0
    %3492 = vmatpush1.bf16.msra.mxu0 0
    %3493 = vmatprep.mubr.bf16.mxu0 0
    %3494 = vmatmul.mubr.bf16.gmra.mrb[0].mxu0 %v3459
    %v3495 = vpop.f32.mrb[0].mxu0
    %v3496 = vadd.f32 0.0, %v3495
    %v3497 = vpop.f32.mrb[0].mxu0
    %v3498 = vadd.f32 0.0, %v3497
    %v3499 = vpop.f32.mrb[0].mxu0
    %v3500 = vpop.f32.mrb[0].mxu0
    %3501 = vdwg.mxu0
    %v3502 = vadd.f32 %v2481, %v3496
    %v3503 = vadd.f32 %v2483, %v3498
    %v3504 = vpack.c.bf16 %v3450, %v3450
    %v3506 = vsel %vm628, %v3504, 0
    %3508 = vmatprep.subr.bf16.mxu0 %v2693
    %3509 = vmatpush1.bf16.msra.mxu0 %v2692
    %3510 = vmatprep.subr.bf16.mxu0 %v2695
    %3511 = vmatpush1.bf16.msra.mxu0 %v2694
    %3512 = vmatprep.subr.bf16.mxu0 %v2697
    %3513 = vmatpush1.bf16.msra.mxu0 %v2696
    %3514 = vmatprep.subr.bf16.mxu0 %v2699
    %3515 = vmatpush1.bf16.msra.mxu0 %v2698
    %3516 = vmatprep.subr.bf16.mxu0 0
    %3517 = vmatpush1.bf16.msra.mxu0 0
    %3518 = vmatprep.subr.bf16.mxu0 0
    %3519 = vmatpush1.bf16.msra.mxu0 0
    %3520 = vmatprep.subr.bf16.mxu0 0
    %3521 = vmatpush1.bf16.msra.mxu0 0
    %3522 = vmatprep.subr.bf16.mxu0 0
    %3523 = vmatpush1.bf16.msra.mxu0 0
    %3524 = vmatprep.subr.bf16.mxu0 0
    %3525 = vmatpush1.bf16.msra.mxu0 0
    %3526 = vmatprep.subr.bf16.mxu0 0
    %3527 = vmatpush1.bf16.msra.mxu0 0
    %3528 = vmatprep.subr.bf16.mxu0 0
    %3529 = vmatpush1.bf16.msra.mxu0 0
    %3530 = vmatprep.subr.bf16.mxu0 0
    %3531 = vmatpush1.bf16.msra.mxu0 0
    %3532 = vmatprep.subr.bf16.mxu0 0
    %3533 = vmatpush1.bf16.msra.mxu0 0
    %3534 = vmatprep.subr.bf16.mxu0 0
    %3535 = vmatpush1.bf16.msra.mxu0 0
    %3536 = vmatprep.subr.bf16.mxu0 0
    %3537 = vmatpush1.bf16.msra.mxu0 0
    %3538 = vmatprep.subr.bf16.mxu0 0
    %3539 = vmatpush1.bf16.msra.mxu0 0
    %3540 = vmatprep.mubr.bf16.mxu0 0
    %3541 = vmatmul.mubr.bf16.gmra.mrb[0].mxu0 %v3506
    %v3542 = vpop.f32.mrb[0].mxu0
    %v3543 = vadd.f32 0.0, %v3542
    %v3544 = vpop.f32.mrb[0].mxu0
    %v3545 = vadd.f32 0.0, %v3544
    %v3546 = vpop.f32.mrb[0].mxu0
    %v3547 = vpop.f32.mrb[0].mxu0
    %3548 = vdwg.mxu0
    %v3549 = vadd.f32 %v2540, %v3543
    %v3550 = vadd.f32 %v2542, %v3545
    %v3551 = vxor.u32 %v3502, 2147483648
    %v3552 = vxor.u32 %v3503, 2147483648
    %v3553 = vmul.f32 %v3551, 1.442695
    %v3554 = vpow.pop %v3553
    %v3555 = vmul.f32 %v3552, 1.442695
    %v3556 = vpow.pop %v3555
    %v3557 = vadd.f32 %v3554, 1.0
    %v3558 = vadd.f32 %v3556, 1.0
    %v3559 = vrcp.pop %v3557
    %v3560 = vmul.f32 1.0, %v3559
    %v3561 = vrcp.pop %v3558
    %v3562 = vmul.f32 1.0, %v3561
    %v3563 = vxor.u32 %v3549, 2147483648
    %v3564 = vxor.u32 %v3550, 2147483648
    %v3565 = vmul.f32 %v3563, 1.442695
    %v3566 = vpow.pop %v3565
    %v3567 = vmul.f32 %v3564, 1.442695
    %v3568 = vpow.pop %v3567
    %v3569 = vadd.f32 %v3566, 1.0
    %v3570 = vadd.f32 %v3568, 1.0
    %v3571 = vrcp.pop %v3569
    %v3572 = vmul.f32 1.0, %v3571
    %v3573 = vrcp.pop %v3570
    %v3574 = vmul.f32 1.0, %v3573
    %v3575 = vtanh.pop %v3503
    %v3576 = vtanh.pop %v3550
    %v3577 = vmul.f32 %v3560, %v3427
    %3579 = vrot.lane.b32.xlu0 %v3575, 64
    %v3580 = vpop.permute.xlu0 %3579
    %v3582 = vmul.f32 %v3560, %v3580
    %3584 = vrot.lane.b32.xlu0 %v3582, 64
    %v3585 = vpop.permute.xlu0 %3584
    %v3587 = vadd.f32 %v3577, %v3585
    %v3588 = vmul.f32 %v3572, %v3438
    %3590 = vrot.lane.b32.xlu0 %v3576, 64
    %v3591 = vpop.permute.xlu0 %3590
    %v3593 = vmul.f32 %v3572, %v3591
    %3595 = vrot.lane.b32.xlu0 %v3593, 64
    %v3596 = vpop.permute.xlu0 %3595
    %v3598 = vadd.f32 %v3588, %v3596
    %v3599 = vtanh.pop %v3587
    %3601 = vrot.lane.b32.xlu0 %v3599, 64
    %v3602 = vpop.permute.xlu0 %3601
    %v3604 = vmul.f32 %v3562, %v3602
    %v3605 = vtanh.pop %v3598
    %3607 = vrot.lane.b32.xlu0 %v3605, 64
    %v3608 = vpop.permute.xlu0 %3607
    %v3610 = vmul.f32 %v3574, %v3608
    %3611 = vst.msk [vmem:[%s1363] sm:$0xff] %vm628, %v3604
    %3613 = vrot.lane.b32.xlu0 %v3610, 64
    %v3614 = vpop.permute.xlu0 %3613
    %3616 = vst.msk [vmem:[%s1357] sm:$0xff] %vm1039, %v3614
    %v3617 = vpack.c.bf16 %v3604, %v3604
    %v3619 = vsel %vm628, %v3617, 0
    %3621 = vmatprep.subr.bf16.mxu0 %v2610
    %3622 = vmatpush1.bf16.msra.mxu0 %v2609
    %3623 = vmatprep.subr.bf16.mxu0 %v2612
    %3624 = vmatpush1.bf16.msra.mxu0 %v2611
    %3625 = vmatprep.subr.bf16.mxu0 %v2614
    %3626 = vmatpush1.bf16.msra.mxu0 %v2613
    %3627 = vmatprep.subr.bf16.mxu0 %v2616
    %3628 = vmatpush1.bf16.msra.mxu0 %v2615
    %3629 = vmatprep.subr.bf16.mxu0 0
    %3630 = vmatpush1.bf16.msra.mxu0 0
    %3631 = vmatprep.subr.bf16.mxu0 0
    %3632 = vmatpush1.bf16.msra.mxu0 0
    %3633 = vmatprep.subr.bf16.mxu0 0
    %3634 = vmatpush1.bf16.msra.mxu0 0
    %3635 = vmatprep.subr.bf16.mxu0 0
    %3636 = vmatpush1.bf16.msra.mxu0 0
    %3637 = vmatprep.subr.bf16.mxu0 0
    %3638 = vmatpush1.bf16.msra.mxu0 0
    %3639 = vmatprep.subr.bf16.mxu0 0
    %3640 = vmatpush1.bf16.msra.mxu0 0
    %3641 = vmatprep.subr.bf16.mxu0 0
    %3642 = vmatpush1.bf16.msra.mxu0 0
    %3643 = vmatprep.subr.bf16.mxu0 0
    %3644 = vmatpush1.bf16.msra.mxu0 0
    %3645 = vmatprep.subr.bf16.mxu0 0
    %3646 = vmatpush1.bf16.msra.mxu0 0
    %3647 = vmatprep.subr.bf16.mxu0 0
    %3648 = vmatpush1.bf16.msra.mxu0 0
    %3649 = vmatprep.subr.bf16.mxu0 0
    %3650 = vmatpush1.bf16.msra.mxu0 0
    %3651 = vmatprep.subr.bf16.mxu0 0
    %3652 = vmatpush1.bf16.msra.mxu0 0
    %3653 = vmatprep.mubr.bf16.mxu0 0
    %3654 = vmatmul.mubr.bf16.gmra.mrb[0].mxu0 %v3619
    %v3655 = vpop.f32.mrb[0].mxu0
    %v3656 = vadd.f32 0.0, %v3655
    %v3657 = vpop.f32.mrb[0].mxu0
    %v3658 = vadd.f32 0.0, %v3657
    %v3659 = vpop.f32.mrb[0].mxu0
    %v3660 = vpop.f32.mrb[0].mxu0
    %3661 = vdwg.mxu0
    %v3662 = vadd.f32 %v2487, %v3656
    %v3663 = vadd.f32 %v2489, %v3658
    %v3664 = vpack.c.bf16 %v3610, %v3610
    %v3666 = vsel %vm628, %v3664, 0
    %3668 = vmatprep.subr.bf16.mxu0 %v2693
    %3669 = vmatpush1.bf16.msra.mxu0 %v2692
    %3670 = vmatprep.subr.bf16.mxu0 %v2695
    %3671 = vmatpush1.bf16.msra.mxu0 %v2694
    %3672 = vmatprep.subr.bf16.mxu0 %v2697
    %3673 = vmatpush1.bf16.msra.mxu0 %v2696
    %3674 = vmatprep.subr.bf16.mxu0 %v2699
    %3675 = vmatpush1.bf16.msra.mxu0 %v2698
    %3676 = vmatprep.subr.bf16.mxu0 0
    %3677 = vmatpush1.bf16.msra.mxu0 0
    %3678 = vmatprep.subr.bf16.mxu0 0
    %3679 = vmatpush1.bf16.msra.mxu0 0
    %3680 = vmatprep.subr.bf16.mxu0 0
    %3681 = vmatpush1.bf16.msra.mxu0 0
    %3682 = vmatprep.subr.bf16.mxu0 0
    %3683 = vmatpush1.bf16.msra.mxu0 0
    %3684 = vmatprep.subr.bf16.mxu0 0
    %3685 = vmatpush1.bf16.msra.mxu0 0
    %3686 = vmatprep.subr.bf16.mxu0 0
    %3687 = vmatpush1.bf16.msra.mxu0 0
    %3688 = vmatprep.subr.bf16.mxu0 0
    %3689 = vmatpush1.bf16.msra.mxu0 0
    %3690 = vmatprep.subr.bf16.mxu0 0
    %3691 = vmatpush1.bf16.msra.mxu0 0
    %3692 = vmatprep.subr.bf16.mxu0 0
    %3693 = vmatpush1.bf16.msra.mxu0 0
    %3694 = vmatprep.subr.bf16.mxu0 0
    %3695 = vmatpush1.bf16.msra.mxu0 0
    %3696 = vmatprep.subr.bf16.mxu0 0
    %3697 = vmatpush1.bf16.msra.mxu0 0
    %3698 = vmatprep.subr.bf16.mxu0 0
    %3699 = vmatpush1.bf16.msra.mxu0 0
    %3700 = vmatprep.mubr.bf16.mxu0 0
    %3701 = vmatmul.mubr.bf16.gmra.mrb[0].mxu0 %v3666
    %v3702 = vpop.f32.mrb[0].mxu0
    %v3703 = vadd.f32 0.0, %v3702
    %v3704 = vpop.f32.mrb[0].mxu0
    %v3705 = vadd.f32 0.0, %v3704
    %v3706 = vpop.f32.mrb[0].mxu0
    %v3707 = vpop.f32.mrb[0].mxu0
    %3708 = vdwg.mxu0
    %v3709 = vadd.f32 %v2534, %v3703
    %v3710 = vadd.f32 %v2536, %v3705
    %v3711 = vxor.u32 %v3662, 2147483648
    %v3712 = vxor.u32 %v3663, 2147483648
    %v3713 = vmul.f32 %v3711, 1.442695
    %v3714 = vpow.pop %v3713
    %v3715 = vmul.f32 %v3712, 1.442695
    %v3716 = vpow.pop %v3715
    %v3717 = vadd.f32 %v3714, 1.0
    %v3718 = vadd.f32 %v3716, 1.0
    %v3719 = vrcp.pop %v3717
    %v3720 = vmul.f32 1.0, %v3719
    %v3721 = vrcp.pop %v3718
    %v3722 = vmul.f32 1.0, %v3721
    %v3723 = vxor.u32 %v3709, 2147483648
    %v3724 = vxor.u32 %v3710, 2147483648
    %v3725 = vmul.f32 %v3723, 1.442695
    %v3726 = vpow.pop %v3725
    %v3727 = vmul.f32 %v3724, 1.442695
    %v3728 = vpow.pop %v3727
    %v3729 = vadd.f32 %v3726, 1.0
    %v3730 = vadd.f32 %v3728, 1.0
    %v3731 = vrcp.pop %v3729
    %v3732 = vmul.f32 1.0, %v3731
    %v3733 = vrcp.pop %v3730
    %v3734 = vmul.f32 1.0, %v3733
    %v3735 = vtanh.pop %v3663
    %v3736 = vtanh.pop %v3710
    %v3737 = vmul.f32 %v3720, %v3587
    %3739 = vrot.lane.b32.xlu0 %v3735, 64
    %v3740 = vpop.permute.xlu0 %3739
    %v3742 = vmul.f32 %v3720, %v3740
    %3744 = vrot.lane.b32.xlu0 %v3742, 64
    %v3745 = vpop.permute.xlu0 %3744
    %v3747 = vadd.f32 %v3737, %v3745
    %v3748 = vmul.f32 %v3732, %v3598
    %3750 = vrot.lane.b32.xlu0 %v3736, 64
    %v3751 = vpop.permute.xlu0 %3750
    %v3753 = vmul.f32 %v3732, %v3751
    %3755 = vrot.lane.b32.xlu0 %v3753, 64
    %v3756 = vpop.permute.xlu0 %3755
    %v3758 = vadd.f32 %v3748, %v3756
    %v3759 = vtanh.pop %v3747
    %3761 = vrot.lane.b32.xlu0 %v3759, 64
    %v3762 = vpop.permute.xlu0 %3761
    %v3764 = vmul.f32 %v3722, %v3762
    %v3765 = vtanh.pop %v3758
    %3767 = vrot.lane.b32.xlu0 %v3765, 64
    %v3768 = vpop.permute.xlu0 %3767
    %v3770 = vmul.f32 %v3734, %v3768
    %3771 = vst.msk [vmem:[%s1201] sm:$0xff] %vm628, %v3764
    %3773 = vrot.lane.b32.xlu0 %v3770, 64
    %v3774 = vpop.permute.xlu0 %3773
    %3776 = vst.msk [vmem:[%s1195] sm:$0xff] %vm1039, %v3774
    %v3777 = vpack.c.bf16 %v3764, %v3764
    %v3779 = vsel %vm628, %v3777, 0
    %3781 = vmatprep.subr.bf16.mxu0 %v2610
    %3782 = vmatpush1.bf16.msra.mxu0 %v2609
    %3783 = vmatprep.subr.bf16.mxu0 %v2612
    %3784 = vmatpush1.bf16.msra.mxu0 %v2611
    %3785 = vmatprep.subr.bf16.mxu0 %v2614
    %3786 = vmatpush1.bf16.msra.mxu0 %v2613
    %3787 = vmatprep.subr.bf16.mxu0 %v2616
    %3788 = vmatpush1.bf16.msra.mxu0 %v2615
    %3789 = vmatprep.subr.bf16.mxu0 0
    %3790 = vmatpush1.bf16.msra.mxu0 0
    %3791 = vmatprep.subr.bf16.mxu0 0
    %3792 = vmatpush1.bf16.msra.mxu0 0
    %3793 = vmatprep.subr.bf16.mxu0 0
    %3794 = vmatpush1.bf16.msra.mxu0 0
    %3795 = vmatprep.subr.bf16.mxu0 0
    %3796 = vmatpush1.bf16.msra.mxu0 0
    %3797 = vmatprep.subr.bf16.mxu0 0
    %3798 = vmatpush1.bf16.msra.mxu0 0
    %3799 = vmatprep.subr.bf16.mxu0 0
    %3800 = vmatpush1.bf16.msra.mxu0 0
    %3801 = vmatprep.subr.bf16.mxu0 0
    %3802 = vmatpush1.bf16.msra.mxu0 0
    %3803 = vmatprep.subr.bf16.mxu0 0
    %3804 = vmatpush1.bf16.msra.mxu0 0
    %3805 = vmatprep.subr.bf16.mxu0 0
    %3806 = vmatpush1.bf16.msra.mxu0 0
    %3807 = vmatprep.subr.bf16.mxu0 0
    %3808 = vmatpush1.bf16.msra.mxu0 0
    %3809 = vmatprep.subr.bf16.mxu0 0
    %3810 = vmatpush1.bf16.msra.mxu0 0
    %3811 = vmatprep.subr.bf16.mxu0 0
    %3812 = vmatpush1.bf16.msra.mxu0 0
    %3813 = vmatprep.mubr.bf16.mxu0 0
    %3814 = vmatmul.mubr.bf16.gmra.mrb[0].mxu0 %v3779
    %v3815 = vpop.f32.mrb[0].mxu0
    %v3816 = vadd.f32 0.0, %v3815
    %v3817 = vpop.f32.mrb[0].mxu0
    %v3818 = vadd.f32 0.0, %v3817
    %v3819 = vpop.f32.mrb[0].mxu0
    %v3820 = vpop.f32.mrb[0].mxu0
    %3821 = vdwg.mxu0
    %v3822 = vadd.f32 %v2491, %v3816
    %v3823 = vadd.f32 %v2493, %v3818
    %v3824 = vpack.c.bf16 %v3770, %v3770
    %v3826 = vsel %vm628, %v3824, 0
    %3828 = vmatprep.subr.bf16.mxu0 %v2693
    %3829 = vmatpush1.bf16.msra.mxu0 %v2692
    %3830 = vmatprep.subr.bf16.mxu0 %v2695
    %3831 = vmatpush1.bf16.msra.mxu0 %v2694
    %3832 = vmatprep.subr.bf16.mxu0 %v2697
    %3833 = vmatpush1.bf16.msra.mxu0 %v2696
    %3834 = vmatprep.subr.bf16.mxu0 %v2699
    %3835 = vmatpush1.bf16.msra.mxu0 %v2698
    %3836 = vmatprep.subr.bf16.mxu0 0
    %3837 = vmatpush1.bf16.msra.mxu0 0
    %3838 = vmatprep.subr.bf16.mxu0 0
    %3839 = vmatpush1.bf16.msra.mxu0 0
    %3840 = vmatprep.subr.bf16.mxu0 0
    %3841 = vmatpush1.bf16.msra.mxu0 0
    %3842 = vmatprep.subr.bf16.mxu0 0
    %3843 = vmatpush1.bf16.msra.mxu0 0
    %3844 = vmatprep.subr.bf16.mxu0 0
    %3845 = vmatpush1.bf16.msra.mxu0 0
    %3846 = vmatprep.subr.bf16.mxu0 0
    %3847 = vmatpush1.bf16.msra.mxu0 0
    %3848 = vmatprep.subr.bf16.mxu0 0
    %3849 = vmatpush1.bf16.msra.mxu0 0
    %3850 = vmatprep.subr.bf16.mxu0 0
    %3851 = vmatpush1.bf16.msra.mxu0 0
    %3852 = vmatprep.subr.bf16.mxu0 0
    %3853 = vmatpush1.bf16.msra.mxu0 0
    %3854 = vmatprep.subr.bf16.mxu0 0
    %3855 = vmatpush1.bf16.msra.mxu0 0
    %3856 = vmatprep.subr.bf16.mxu0 0
    %3857 = vmatpush1.bf16.msra.mxu0 0
    %3858 = vmatprep.subr.bf16.mxu0 0
    %3859 = vmatpush1.bf16.msra.mxu0 0
    %3860 = vmatprep.mubr.bf16.mxu0 0
    %3861 = vmatmul.mubr.bf16.gmra.mrb[0].mxu0 %v3826
    %v3862 = vpop.f32.mrb[0].mxu0
    %v3863 = vadd.f32 0.0, %v3862
    %v3864 = vpop.f32.mrb[0].mxu0
    %v3865 = vadd.f32 0.0, %v3864
    %v3866 = vpop.f32.mrb[0].mxu0
    %v3867 = vpop.f32.mrb[0].mxu0
    %3868 = vdwg.mxu0
    %v3869 = vadd.f32 %v2530, %v3863
    %v3870 = vadd.f32 %v2532, %v3865
    %v3871 = vxor.u32 %v3822, 2147483648
    %v3872 = vxor.u32 %v3823, 2147483648
    %v3873 = vmul.f32 %v3871, 1.442695
    %v3874 = vpow.pop %v3873
    %v3875 = vmul.f32 %v3872, 1.442695
    %v3876 = vpow.pop %v3875
    %v3877 = vadd.f32 %v3874, 1.0
    %v3878 = vadd.f32 %v3876, 1.0
    %v3879 = vrcp.pop %v3877
    %v3880 = vmul.f32 1.0, %v3879
    %v3881 = vrcp.pop %v3878
    %v3882 = vmul.f32 1.0, %v3881
    %v3883 = vxor.u32 %v3869, 2147483648
    %v3884 = vxor.u32 %v3870, 2147483648
    %v3885 = vmul.f32 %v3883, 1.442695
    %v3886 = vpow.pop %v3885
    %v3887 = vmul.f32 %v3884, 1.442695
    %v3888 = vpow.pop %v3887
    %v3889 = vadd.f32 %v3886, 1.0
    %v3890 = vadd.f32 %v3888, 1.0
    %v3891 = vrcp.pop %v3889
    %v3892 = vmul.f32 1.0, %v3891
    %v3893 = vrcp.pop %v3890
    %v3894 = vmul.f32 1.0, %v3893
    %v3895 = vtanh.pop %v3823
    %v3896 = vtanh.pop %v3870
    %v3897 = vmul.f32 %v3880, %v3747
    %3899 = vrot.lane.b32.xlu0 %v3895, 64
    %v3900 = vpop.permute.xlu0 %3899
    %v3902 = vmul.f32 %v3880, %v3900
    %3904 = vrot.lane.b32.xlu0 %v3902, 64
    %v3905 = vpop.permute.xlu0 %3904
    %v3907 = vadd.f32 %v3897, %v3905
    %v3908 = vmul.f32 %v3892, %v3758
    %3910 = vrot.lane.b32.xlu0 %v3896, 64
    %v3911 = vpop.permute.xlu0 %3910
    %v3913 = vmul.f32 %v3892, %v3911
    %3915 = vrot.lane.b32.xlu0 %v3913, 64
    %v3916 = vpop.permute.xlu0 %3915
    %v3918 = vadd.f32 %v3908, %v3916
    %v3919 = vtanh.pop %v3907
    %3921 = vrot.lane.b32.xlu0 %v3919, 64
    %v3922 = vpop.permute.xlu0 %3921
    %v3924 = vmul.f32 %v3882, %v3922
    %v3925 = vtanh.pop %v3918
    %3927 = vrot.lane.b32.xlu0 %v3925, 64
    %v3928 = vpop.permute.xlu0 %3927
    %v3930 = vmul.f32 %v3894, %v3928
    %3931 = vst.msk [vmem:[%s1038] sm:$0xff] %vm628, %v3924
    %3933 = vrot.lane.b32.xlu0 %v3930, 64
    %v3934 = vpop.permute.xlu0 %3933
    %3936 = vst.msk [vmem:[#allocation2] sm:$0xff] %vm1039, %v3934
    %v3937 = vld [vmem:[#allocation2] sm:$0xff]
    %v3938 = vld [vmem:[#allocation2 + $0x8] sm:$0xff]
    %v3939 = vld [vmem:[#allocation2 + $0x10] sm:$0xff]
    %v3940 = vld [vmem:[#allocation2 + $0x18] sm:$0xff]
    %v3941 = vld [vmem:[#allocation2 + $0x20] sm:$0xff]
    %v3942 = vld [vmem:[#allocation2 + $0x28] sm:$0xff]
    %v3943 = vld [vmem:[#allocation2 + $0x30] sm:$0xff]
    %v3944 = vld [vmem:[#allocation2 + $0x38] sm:$0xff]
    %v3945 = vld [vmem:[#allocation6 + $0x3] ss:$0 sm:$0xff]
    %v3946 = vld [vmem:[#allocation6 + $0x4] ss:$0 sm:$0xff]
    %v3947 = vmul.f32 %v3937, %v3945
    %v3948 = vmul.f32 %v3938, %v3945
    %v3949 = vmul.f32 %v3939, %v3945
    %v3950 = vmul.f32 %v3940, %v3945
    %v3951 = vmul.f32 %v3941, %v3945
    %v3952 = vmul.f32 %v3942, %v3945
    %v3953 = vmul.f32 %v3943, %v3945
    %v3954 = vmul.f32 %v3944, %v3945
    %3955 = vadd.xlane.f32.xlu0 %v3947
    %v3956 = vpop.xlane.xlu0 %3955
    %3957 = vadd.xlane.f32.xlu0 %v3948
    %v3958 = vpop.xlane.xlu0 %3957
    %3959 = vadd.xlane.f32.xlu0 %v3949
    %v3960 = vpop.xlane.xlu0 %3959
    %3961 = vadd.xlane.f32.xlu0 %v3950
    %v3962 = vpop.xlane.xlu0 %3961
    %3963 = vadd.xlane.f32.xlu0 %v3951
    %v3964 = vpop.xlane.xlu0 %3963
    %3965 = vadd.xlane.f32.xlu0 %v3952
    %v3966 = vpop.xlane.xlu0 %3965
    %3967 = vadd.xlane.f32.xlu0 %v3953
    %v3968 = vpop.xlane.xlu0 %3967
    %3969 = vadd.xlane.f32.xlu0 %v3954
    %v3970 = vpop.xlane.xlu0 %3969
    %v3971 = vadd.f32 %v3956, %v3946
    %v3972 = vadd.f32 %v3958, %v3946
    %v3973 = vadd.f32 %v3960, %v3946
    %v3974 = vadd.f32 %v3962, %v3946
    %v3975 = vadd.f32 %v3964, %v3946
    %v3976 = vadd.f32 %v3966, %v3946
    %v3977 = vadd.f32 %v3968, %v3946
    %v3978 = vadd.f32 %v3970, %v3946
    %v3979 = vtanh.pop %v3971
    %v3980 = vtanh.pop %v3972
    %v3981 = vtanh.pop %v3973
    %v3982 = vtanh.pop %v3974
    %v3983 = vtanh.pop %v3975
    %v3984 = vtanh.pop %v3976
    %v3985 = vtanh.pop %v3977
    %v3986 = vtanh.pop %v3978
    %vm3987 = vcmask 7168
    %v3988 = vsel %vm3987, %v3979, -inf
    %v3989 = vsel %vm3987, %v3980, -inf
    %v3990 = vsel %vm3987, %v3981, -inf
    %v3991 = vsel %vm3987, %v3982, -inf
    %v3992 = vsel %vm3987, %v3983, -inf
    %v3993 = vmax.f32 %v3988, %v3992
    %v3994 = vsel %vm3987, %v3984, -inf
    %v3995 = vmax.f32 %v3989, %v3994
    %v3996 = vsel %vm3987, %v3985, -inf
    %v3997 = vmax.f32 %v3990, %v3996
    %v3998 = vsel %vm3987, %v3986, -inf
    %v3999 = vmax.f32 %v3991, %v3998
    %v4000 = vmax.f32 %v3993, %v3995
    %v4001 = vmax.f32 %v3997, %v3999
    %v4002 = vmax.f32 %v4000, %v4001
    %v4003 = vsub.f32 %v3979, %v4002
    %v4004 = vsub.f32 %v3980, %v4002
    %v4005 = vsub.f32 %v3981, %v4002
    %v4006 = vsub.f32 %v3982, %v4002
    %v4007 = vsub.f32 %v3983, %v4002
    %v4008 = vsub.f32 %v3984, %v4002
    %v4009 = vsub.f32 %v3985, %v4002
    %v4010 = vsub.f32 %v3986, %v4002
    %v4011 = vmul.f32 %v4003, 1.442695
    %v4012 = vpow.pop %v4011
    %v4013 = vmul.f32 %v4004, 1.442695
    %v4014 = vpow.pop %v4013
    %v4015 = vmul.f32 %v4005, 1.442695
    %v4016 = vpow.pop %v4015
    %v4017 = vmul.f32 %v4006, 1.442695
    %v4018 = vpow.pop %v4017
    %v4019 = vmul.f32 %v4007, 1.442695
    %v4020 = vpow.pop %v4019
    %v4021 = vmul.f32 %v4008, 1.442695
    %v4022 = vpow.pop %v4021
    %v4023 = vmul.f32 %v4009, 1.442695
    %v4024 = vpow.pop %v4023
    %v4025 = vmul.f32 %v4010, 1.442695
    %v4026 = vpow.pop %v4025
    %v4027 = vsel %vm3987, %v4012, 0.0
    %v4028 = vsel %vm3987, %v4014, 0.0
    %v4029 = vadd.f32 %v4027, %v4028
    %v4030 = vsel %vm3987, %v4016, 0.0
    %v4031 = vadd.f32 %v4029, %v4030
    %v4032 = vsel %vm3987, %v4018, 0.0
    %v4033 = vadd.f32 %v4031, %v4032
    %v4034 = vsel %vm3987, %v4020, 0.0
    %v4035 = vadd.f32 %v4033, %v4034
    %v4036 = vsel %vm3987, %v4022, 0.0
    %v4037 = vadd.f32 %v4035, %v4036
    %v4038 = vsel %vm3987, %v4024, 0.0
    %v4039 = vadd.f32 %v4037, %v4038
    %v4040 = vsel %vm3987, %v4026, 0.0
    %v4041 = vadd.f32 %v4039, %v4040
    %v4042 = vrcp.pop %v4041
    %v4043 = vmul.f32 %v4012, %v4042
    %v4044 = vmul.f32 %v4014, %v4042
    %v4045 = vmul.f32 %v4016, %v4042
    %v4046 = vmul.f32 %v4018, %v4042
    %v4047 = vmul.f32 %v4020, %v4042
    %v4048 = vmul.f32 %v4022, %v4042
    %v4049 = vmul.f32 %v4024, %v4042
    %v4050 = vmul.f32 %v4026, %v4042
    %4052 = vset.pattern.permute.xlu0 0
    %4053 = vperm.xlu0 %4052, %v4043
    %v4054 = vpop.permute.xlu0 %4053
    %4057 = vset.pattern.permute.xlu0 0
    %4058 = vperm.xlu0 %4057, %v4044
    %v4059 = vpop.permute.xlu0 %4058
    %4062 = vset.pattern.permute.xlu0 0
    %4063 = vperm.xlu0 %4062, %v4045
    %v4064 = vpop.permute.xlu0 %4063
    %4067 = vset.pattern.permute.xlu0 0
    %4068 = vperm.xlu0 %4067, %v4046
    %v4069 = vpop.permute.xlu0 %4068
    %4072 = vset.pattern.permute.xlu0 0
    %4073 = vperm.xlu0 %4072, %v4047
    %v4074 = vpop.permute.xlu0 %4073
    %4077 = vset.pattern.permute.xlu0 0
    %4078 = vperm.xlu0 %4077, %v4048
    %v4079 = vpop.permute.xlu0 %4078
    %4082 = vset.pattern.permute.xlu0 0
    %4083 = vperm.xlu0 %4082, %v4049
    %v4084 = vpop.permute.xlu0 %4083
    %4087 = vset.pattern.permute.xlu0 0
    %4088 = vperm.xlu0 %4087, %v4050
    %v4089 = vpop.permute.xlu0 %4088
    %v4091 = vmul.f32 %v4054, %v3937
    %v4092 = vmul.f32 %v4059, %v3938
    %v4093 = vmul.f32 %v4064, %v3939
    %v4094 = vmul.f32 %v4069, %v3940
    %v4095 = vmul.f32 %v4074, %v3941
    %v4096 = vmul.f32 %v4079, %v3942
    %v4097 = vmul.f32 %v4084, %v3943
    %v4098 = vmul.f32 %v4089, %v3944
    %v4099 = vadd.f32 %v4091, %v4092
    %v4100 = vadd.f32 %v4099, %v4093
    %v4101 = vadd.f32 %v4100, %v4094
    %v4102 = vadd.f32 %v4101, %v4095
    %v4103 = vadd.f32 %v4102, %v4096
    %v4104 = vadd.f32 %v4103, %v4097
    %v4105 = vadd.f32 %v4104, %v4098
    %v4106 = vld [vmem:[#allocation6 + $0x5] ss:$0 sm:$0xff]
    %v4107 = vld [vmem:[#allocation6 + $0x6] ss:$0 sm:$0xff]
    %v4108 = vpack.c.bf16 %v4105, %v4105
    %v4109 = vld [vmem:[%s7] sm:$0xf]
    %v4110 = vld [vmem:[%s7 + $0x4] sm:$0xf]
    %v4111 = vld [vmem:[%s7 + $0x8] sm:$0xf]
    %v4112 = vld [vmem:[%s7 + $0xc] sm:$0xf]
    %v4113 = vld [vmem:[%s7 + $0x10] sm:$0xf]
    %v4114 = vld [vmem:[%s7 + $0x14] sm:$0xf]
    %v4115 = vld [vmem:[%s7 + $0x18] sm:$0xf]
    %v4116 = vld [vmem:[%s7 + $0x1c] sm:$0xf]
    %v4117 = vld [vmem:[%s7 + $0x20] sm:$0xf]
    %v4118 = vld [vmem:[%s7 + $0x24] sm:$0xf]
    %v4119 = vld [vmem:[%s7 + $0x28] sm:$0xf]
    %v4120 = vld [vmem:[%s7 + $0x2c] sm:$0xf]
    %v4121 = vld [vmem:[%s7 + $0x30] sm:$0xf]
    %v4122 = vld [vmem:[%s7 + $0x34] sm:$0xf]
    %v4123 = vld [vmem:[%s7 + $0x38] sm:$0xf]
    %v4124 = vld [vmem:[%s7 + $0x3c] sm:$0xf]
    %v4141 = vunpack.c.l.b16 %v4109
    %v4142 = vunpack.c.l.b16 %v4110
    %v4143 = vunpack.c.l.b16 %v4111
    %v4144 = vunpack.c.l.b16 %v4112
    %v4145 = vunpack.c.l.b16 %v4113
    %v4146 = vunpack.c.l.b16 %v4114
    %v4147 = vunpack.c.l.b16 %v4115
    %v4148 = vunpack.c.l.b16 %v4116
    %v4149 = vunpack.c.l.b16 %v4117
    %v4150 = vunpack.c.l.b16 %v4118
    %v4151 = vunpack.c.l.b16 %v4119
    %v4152 = vunpack.c.l.b16 %v4120
    %v4153 = vunpack.c.l.b16 %v4121
    %v4154 = vunpack.c.l.b16 %v4122
    %v4155 = vunpack.c.l.b16 %v4123
    %v4156 = vunpack.c.l.b16 %v4124
    %v4157 = vpack.c.b16 %v4142, %v4141
    %v4158 = vpack.c.b16 %v4144, %v4143
    %v4159 = vpack.c.b16 %v4146, %v4145
    %v4160 = vpack.c.b16 %v4148, %v4147
    %v4161 = vpack.c.b16 %v4150, %v4149
    %v4162 = vpack.c.b16 %v4152, %v4151
    %v4163 = vpack.c.b16 %v4154, %v4153
    %v4164 = vpack.c.b16 %v4156, %v4155
    %4173 = vmatprep.subr.bf16.mxu0 0
    %4174 = vmatpush1.bf16.msra.mxu0 %v4157
    %4175 = vmatprep.subr.bf16.mxu0 0
    %4176 = vmatpush1.bf16.msra.mxu0 %v4158
    %4177 = vmatprep.subr.bf16.mxu0 0
    %4178 = vmatpush1.bf16.msra.mxu0 %v4159
    %4179 = vmatprep.subr.bf16.mxu0 0
    %4180 = vmatpush1.bf16.msra.mxu0 %v4160
    %4181 = vmatprep.subr.bf16.mxu0 0
    %4182 = vmatpush1.bf16.msra.mxu0 %v4161
    %4183 = vmatprep.subr.bf16.mxu0 0
    %4184 = vmatpush1.bf16.msra.mxu0 %v4162
    %4185 = vmatprep.subr.bf16.mxu0 0
    %4186 = vmatpush1.bf16.msra.mxu0 %v4163
    %4187 = vmatprep.subr.bf16.mxu0 0
    %4188 = vmatpush1.bf16.msra.mxu0 %v4164
    %4189 = vmatprep.subr.bf16.mxu0 0
    %4190 = vmatpush1.bf16.msra.mxu0 0
    %4191 = vmatprep.subr.bf16.mxu0 0
    %4192 = vmatpush1.bf16.msra.mxu0 0
    %4193 = vmatprep.subr.bf16.mxu0 0
    %4194 = vmatpush1.bf16.msra.mxu0 0
    %4195 = vmatprep.subr.bf16.mxu0 0
    %4196 = vmatpush1.bf16.msra.mxu0 0
    %4197 = vmatprep.subr.bf16.mxu0 0
    %4198 = vmatpush1.bf16.msra.mxu0 0
    %4199 = vmatprep.subr.bf16.mxu0 0
    %4200 = vmatpush1.bf16.msra.mxu0 0
    %4201 = vmatprep.subr.bf16.mxu0 0
    %4202 = vmatpush1.bf16.msra.mxu0 0
    %4203 = vmatprep.subr.bf16.mxu0 0
    %4204 = vmatpush1.bf16.msra.mxu0 0
    %4205 = vmatprep.mubr.bf16.mxu0 0
    %4206 = vmatmul.mubr.bf16.gmra.mrb[0].mxu0 %v4108
    %v4207 = vpop.f32.mrb[0].mxu0
    %v4208 = vadd.f32 %v4106, %v4207
    %v4209 = vpop.f32.mrb[0].mxu0
    %v4210 = vpop.f32.mrb[0].mxu0
    %v4211 = vpop.f32.mrb[0].mxu0
    %4212 = vdwg.mxu0
    %v4213 = vmax.f32 %v4208, 0.0
    %v4214 = vpack.c.bf16 %v4213, %v4213
    %v4215 = vld [vmem:[#allocation11] sm:$0xf]
    %v4216 = vld [vmem:[#allocation11 + $0x4] sm:$0xf]
    %v4217 = vld [vmem:[#allocation11 + $0x8] sm:$0xf]
    %v4218 = vld [vmem:[#allocation11 + $0xc] sm:$0xf]
    %v4219 = vld [vmem:[#allocation11 + $0x10] sm:$0xf]
    %v4220 = vld [vmem:[#allocation11 + $0x14] sm:$0xf]
    %v4221 = vld [vmem:[#allocation11 + $0x18] sm:$0xf]
    %v4222 = vld [vmem:[#allocation11 + $0x1c] sm:$0xf]
    %v4231 = vunpack.c.l.b16 %v4215
    %v4232 = vunpack.c.l.b16 %v4216
    %v4233 = vunpack.c.l.b16 %v4217
    %v4234 = vunpack.c.l.b16 %v4218
    %v4235 = vunpack.c.l.b16 %v4219
    %v4236 = vunpack.c.l.b16 %v4220
    %v4237 = vunpack.c.l.b16 %v4221
    %v4238 = vunpack.c.l.b16 %v4222
    %v4239 = vpack.c.b16 %v4232, %v4231
    %v4240 = vpack.c.b16 %v4234, %v4233
    %v4241 = vpack.c.b16 %v4236, %v4235
    %v4242 = vpack.c.b16 %v4238, %v4237
    %v4248 = vsel %vm628, %v4214, 0
    %4250 = vmatprep.subr.bf16.mxu0 0
    %4251 = vmatpush1.bf16.msra.mxu0 %v4239
    %4252 = vmatprep.subr.bf16.mxu0 0
    %4253 = vmatpush1.bf16.msra.mxu0 %v4240
    %4254 = vmatprep.subr.bf16.mxu0 0
    %4255 = vmatpush1.bf16.msra.mxu0 %v4241
    %4256 = vmatprep.subr.bf16.mxu0 0
    %4257 = vmatpush1.bf16.msra.mxu0 %v4242
    %4258 = vmatprep.subr.bf16.mxu0 0
    %4259 = vmatpush1.bf16.msra.mxu0 0
    %4260 = vmatprep.subr.bf16.mxu0 0
    %4261 = vmatpush1.bf16.msra.mxu0 0
    %4262 = vmatprep.subr.bf16.mxu0 0
    %4263 = vmatpush1.bf16.msra.mxu0 0
    %4264 = vmatprep.subr.bf16.mxu0 0
    %4265 = vmatpush1.bf16.msra.mxu0 0
    %4266 = vmatprep.subr.bf16.mxu0 0
    %4267 = vmatpush1.bf16.msra.mxu0 0
    %4268 = vmatprep.subr.bf16.mxu0 0
    %4269 = vmatpush1.bf16.msra.mxu0 0
    %4270 = vmatprep.subr.bf16.mxu0 0
    %4271 = vmatpush1.bf16.msra.mxu0 0
    %4272 = vmatprep.subr.bf16.mxu0 0
    %4273 = vmatpush1.bf16.msra.mxu0 0
    %4274 = vmatprep.subr.bf16.mxu0 0
    %4275 = vmatpush1.bf16.msra.mxu0 0
    %4276 = vmatprep.subr.bf16.mxu0 0
    %4277 = vmatpush1.bf16.msra.mxu0 0
    %4278 = vmatprep.subr.bf16.mxu0 0
    %4279 = vmatpush1.bf16.msra.mxu0 0
    %4280 = vmatprep.subr.bf16.mxu0 0
    %4281 = vmatpush1.bf16.msra.mxu0 0
    %4282 = vmatprep.mubr.bf16.mxu0 0
    %4283 = vmatmul.mubr.bf16.gmra.mrb[0].mxu0 %v4248
    %v4284 = vpop.f32.mrb[0].mxu0
    %v4285 = vadd.f32 %v4107, %v4284
    %v4286 = vpop.f32.mrb[0].mxu0
    %v4287 = vpop.f32.mrb[0].mxu0
    %v4288 = vpop.f32.mrb[0].mxu0
    %4289 = vdwg.mxu0
    %4290 = vst [vmem:[#allocation12] sm:$0xff] %v4285
    // Predicated region
    $region58: #{forward.1} parent=1 // pred_check
      _
    $region59: #{forward.1} parent=1 // pred_check_branch
      %4292 = sbr.rel (0) target = $region61
    $region60: #{forward.1} parent=1 // pred_region
      %s4294 = ssub.s32 128, 128
      %4295 = vsyncadd [#allocation5], %s4294
      %s4297 = sshll.u32 [#allocation12], 4
      %s4298 = int_to_ptr.vmem [resolvable:$true] %s4297
      %4300 = dma.vmem_to_hbm [thread:$0]  %s4298, 128, %s9, [#allocation5]
    $region61: #{forward.1} parent=1 // pred_fallthru
      _
    // Predicated region
    $region62: #{forward.1} parent=1 // pred_check
      _
    $region63: #{forward.1} parent=1 // pred_check_branch
      %4302 = sbr.rel (0) target = $region65
    $region64: #{forward.1} parent=1 // pred_region
      %4303 = dma.done [#allocation5], 128
    $region65: #{forward.1} parent=1 // pred_fallthru
      _
    %4304 = vsyncpa [#allocation4], 1
    %4305 = vsyncpa [#allocation7], 1
    %4306 = vsyncpa [#allocation10], 1
    %4307 = vsyncpa [#allocation5], 1

</llo_original>
